<compile_context>
chip_gen: v6e
topology: v6e:2x2x1
jax: 0.10.0
libtpu: 0.0.40
codegen_flags: <defaults>
</compile_context>

<pallas_src>
import jax
import jax.numpy as jnp
from jax.experimental import pallas as pl
from jax.experimental.pallas import tpu as pltpu


def relu_conv1x1_kernel(w_ref, x_ref, o_ref):
    # w_ref: (C_out_blk, C_in) bf16, x_ref: (C_in, HW) f32, o_ref: (C_out_blk, HW) f32
    x = jnp.maximum(x_ref[...], 0.0)          # ReLU in f32 (native VPU path on all gens)
    x = x.astype(jnp.bfloat16)                # single in-kernel down-cast (free: VPU has slack)
    o_ref[...] = jnp.dot(w_ref[...], x, preferred_element_type=jnp.float32)


def _num_tensorcores_per_chip():
    """Best-effort TC-per-chip query; defaults to 1 (safe on v5e/v6e)."""
    try:
        info = pltpu.get_tpu_info()
        for attr in ("num_cores", "tensorcore_count", "num_tensorcores", "core_count"):
            n = getattr(info, attr, None)
            if isinstance(n, int) and n > 0:
                return n
    except Exception:
        pass
    try:
        kind = jax.devices()[0].device_kind.lower()
        if "7" in kind:            # e.g. "TPU7x" -> 2 TCs per chip
            return 2
    except Exception:
        pass
    return 1


def prepare_weight(weight_oihw, compute_dtype=jnp.bfloat16):
    """One-time static-parameter prep: OIHW (C_out, C_in, 1, 1) f32 -> (C_out, C_in) bf16."""
    C_out, C_in = weight_oihw.shape[:2]
    return weight_oihw.reshape(C_out, C_in).astype(compute_dtype)


def relu_conv1x1(x_nchw, w2d):
    """x_nchw: (1, C_in, H, W) f32, w2d: (C_out, C_in) bf16 -> (1, C_out, H, W) f32."""
    N, C_in, H, W = x_nchw.shape
    C_out = w2d.shape[0]
    assert N == 1, "channel-major (C, H*W) view without transpose requires N == 1"
    assert w2d.shape[1] == C_in
    HW = H * W

    # Pure reshape — x stays f32 in HBM; the ReLU + bf16 cast happen inside the kernel.
    x2d = x_nchw.reshape(C_in, HW)                                   # (K, M) = (1872, 196) f32

    # Split C_out across TensorCores only where there is more than one TC (v7x megacore).
    n_blk = 2 if (_num_tensorcores_per_chip() >= 2 and C_out % 16 == 0) else 1
    blk = C_out // n_blk

    # Honest byte count: f32 x read + bf16 w read + f32 out write.
    cost = pl.CostEstimate(
        flops=2 * HW * C_in * C_out,
        transcendentals=0,
        bytes_accessed=(x2d.size * x2d.dtype.itemsize
                        + w2d.size * w2d.dtype.itemsize
                        + C_out * HW * 4),
    )

    y2d = pl.pallas_call(
        relu_conv1x1_kernel,
        out_shape=jax.ShapeDtypeStruct((C_out, HW), jnp.float32),
        grid=(n_blk,),
        in_specs=[
            pl.BlockSpec((blk, C_in), lambda i: (i, 0)),   # weight (half per TC on v7x)
            pl.BlockSpec((C_in, HW), lambda i: (0, 0)),    # full f32 activations, not re-fetched
        ],
        out_specs=pl.BlockSpec((blk, HW), lambda i: (i, 0)),
        compiler_params=pltpu.CompilerParams(
            dimension_semantics=("parallel",)),
        cost_estimate=cost,
    )(w2d, x2d)

    # (C_out, H*W) -> (1, C_out, H, W): pure reshape, no transpose.
    return y2d.reshape(N, C_out, H, W)


if __name__ == "__main__":
    key = jax.random.PRNGKey(0)
    kx, kw = jax.random.split(key)

    # Shapes implied by the module: x [1, 1872, 14, 14], conv 1872 -> 192, 1x1, no bias.
    x = jax.random.normal(kx, (1, 1872, 14, 14), dtype=jnp.float32)
    weight = (jax.random.normal(kw, (192, 1872, 1, 1), dtype=jnp.float32)
              * (1.0 / jnp.sqrt(1872.0)))  # deterministic, roughly conv-init scaled

    # Static-parameter prep done ONCE, outside the per-call path.
    w2d = prepare_weight(weight)

    y = relu_conv1x1(x, w2d)
    jax.block_until_ready(y)

    # Reference with the same bf16 rounding of relu(x) and w (f32 accumulate).
    x_b = jnp.maximum(x, 0.0).astype(jnp.bfloat16).astype(jnp.float32)
    w_b = weight.reshape(192, 1872).astype(jnp.bfloat16).astype(jnp.float32)
    ref = jnp.einsum("nchw,oc->nohw", x_b, w_b)

    assert y.shape == (1, 192, 14, 14)
    assert jnp.allclose(y, ref, atol=1e-2, rtol=1e-2)

    print("KERNEL_OK")
</pallas_src>

<mosaic_0001>
module attributes {stable_mosaic.version = 11 : i64} {
  func.func @relu_conv1x1_kernel(%arg0: i32, %arg1: memref<192x1872xbf16, #tpu.memory_space<vmem>>, %arg2: memref<1872x196xf32, #tpu.memory_space<vmem>>, %arg3: memref<192x196xf32, #tpu.memory_space<vmem>>) attributes {dimension_semantics = [#tpu.dimension_semantics<parallel>], iteration_bounds = array<i64: 1>, scalar_prefetch = 0 : i64, scratch_operands = 0 : i64, tpu.core_type = #tpu.core_type<tc>, window_params = [{transform_indices = @transform_0, window_bounds = array<i64: 192, 1872>}, {pipeline_mode = #tpu.pipeline_mode<synchronous>, transform_indices = @transform_1, window_bounds = array<i64: 1872, 196>}, {transform_indices = @transform_2, window_bounds = array<i64: 192, 196>}]} {
    %c0 = arith.constant 0 : index
    %c0_0 = arith.constant 0 : index
    %0 = vector.load %arg2[%c0, %c0_0] : memref<1872x196xf32, #tpu.memory_space<vmem>>, vector<1872x196xf32>
    %cst = arith.constant 0.000000e+00 : f32
    %1 = vector.broadcast %cst : f32 to vector<1872x196xf32>
    %2 = arith.maximumf %0, %1 : vector<1872x196xf32>
    %3 = arith.truncf %2 : vector<1872x196xf32> to vector<1872x196xbf16>
    %c0_1 = arith.constant 0 : index
    %c0_2 = arith.constant 0 : index
    %4 = vector.load %arg1[%c0_1, %c0_2] : memref<192x1872xbf16, #tpu.memory_space<vmem>>, vector<192x1872xbf16>
    %cst_3 = arith.constant dense<0.000000e+00> : vector<192x196xf32>
    %5 = tpu.matmul %4, %3, %cst_3 {dimension_numbers = #tpu.dot_dimension_numbers<[1], [0], [0], [1], [0, 0, 1, 1], [], []>} : vector<192x1872xbf16>, vector<1872x196xbf16>, vector<192x196xf32> -> vector<192x196xf32>
    %c0_4 = arith.constant 0 : index
    %c0_5 = arith.constant 0 : index
    %6 = vector.load %arg3[%c0_4, %c0_5] : memref<192x196xf32, #tpu.memory_space<vmem>>, vector<192x196xf32>
    tpu.vector_store %arg3[%c0_4, %c0_5], %5 {strides = array<i32>} : memref<192x196xf32, #tpu.memory_space<vmem>>, vector<192x196xf32>,
    return
  }
  func.func @transform_0(%arg0: i32) -> (i32, i32) {
    %c0_i32 = arith.constant 0 : i32
    %c0_i32_0 = arith.constant 0 : i32
    return %arg0, %c0_i32 : i32, i32
  }
  func.func @transform_1(%arg0: i32) -> (i32, i32) {
    %c0_i32 = arith.constant 0 : i32
    %c0_i32_0 = arith.constant 0 : i32
    %c0_i32_1 = arith.constant 0 : i32
    return %c0_i32, %c0_i32_0 : i32, i32
  }
  func.func @transform_2(%arg0: i32) -> (i32, i32) {
    %c0_i32 = arith.constant 0 : i32
    %c0_i32_0 = arith.constant 0 : i32
    return %arg0, %c0_i32 : i32, i32
  }
}

</mosaic_0001>

<llo_original>
// kernel: tpu_custom_call.1
$region0: #{tpu_custom_call.1}
  #allocation0 [shape = 'u32[]', space=smem, size = 0x4, offset = 0x4, fixed_abs, tag = 'smem constant byte address 0x4 - core index']
  #allocation1 [shape = 'u32[144,128]{1,0:T(1,128)}', space=vmem, size = 0x12000, scoped, tag = 'internal scratch']
  %s0 = inlined_call_operand.vmem [shape: bf16[192,1872], index: 0, kind: input, shape index: {}]
  %s1 = inlined_call_operand.vmem [shape: f32[1872,196], index: 1, kind: input, shape index: {}]
  %s2 = inlined_call_operand.hbm [shape: f32[192,196], index: 2, kind: output, shape index: {}]
  %s3 = sld [smem:[#allocation0]]
  $region18: #{tpu_custom_call.1} parent=0
    _
  %s5 = ssub.s32 1, %s3
  %s6 = scalar_select 0, %s5, %s3
  $region1: #{tpu_custom_call.1} parent=0
    #allocation2 [shape = 'u8[196608]{0}', space=vmem, size = 0x30000, scoped, tag = 'output window, operand 0, single buffered']
    #allocation3 [shape = 's32[1]{0}', space=sflag, size = 0x4, scoped, tag = 'scoped memory for tpu_custom_call.1']
    %7 = vsyncpa [#allocation3], 0
    // Predicated region
    $region2: #{tpu_custom_call.1} parent=1 // pred_check
      _
    $region3: #{tpu_custom_call.1} parent=1 // pred_check_branch
      %9 = sbr.rel (0) target = $region5
    $region4: #{tpu_custom_call.1} parent=1 // pred_region
      _
    $region5: #{tpu_custom_call.1} parent=1 // pred_fallthru
      _
    // Predicated region
    $region6: #{tpu_custom_call.1} parent=1 // pred_check
      _
    $region7: #{tpu_custom_call.1} parent=1 // pred_check_branch
      %11 = sbr.rel (0) target = $region9
    $region8: #{tpu_custom_call.1} parent=1 // pred_region
      _
    $region9: #{tpu_custom_call.1} parent=1 // pred_fallthru
      _
    %v13 = vld [vmem:[%s1] sm:$0xff]
    %v14 = vld [vmem:[%s1 + $0x8] sm:$0xff]
    %v15 = vld [vmem:[%s1 + $0x10] sm:$0xff]
    %v16 = vld [vmem:[%s1 + $0x18] sm:$0xff]
    %v17 = vld [vmem:[%s1 + $0x20] sm:$0xff]
    %v18 = vld [vmem:[%s1 + $0x28] sm:$0xff]
    %v19 = vld [vmem:[%s1 + $0x30] sm:$0xff]
    %v20 = vld [vmem:[%s1 + $0x38] sm:$0xff]
    %v21 = vld [vmem:[%s1 + $0x40] sm:$0xff]
    %v22 = vld [vmem:[%s1 + $0x48] sm:$0xff]
    %v23 = vld [vmem:[%s1 + $0x50] sm:$0xff]
    %v24 = vld [vmem:[%s1 + $0x58] sm:$0xff]
    %v25 = vld [vmem:[%s1 + $0x60] sm:$0xff]
    %v26 = vld [vmem:[%s1 + $0x68] sm:$0xff]
    %v27 = vld [vmem:[%s1 + $0x70] sm:$0xff]
    %v28 = vld [vmem:[%s1 + $0x78] sm:$0xff]
    %v29 = vld [vmem:[%s1 + $0x80] sm:$0xff]
    %v30 = vld [vmem:[%s1 + $0x88] sm:$0xff]
    %v31 = vld [vmem:[%s1 + $0x90] sm:$0xff]
    %v32 = vld [vmem:[%s1 + $0x98] sm:$0xff]
    %v33 = vld [vmem:[%s1 + $0xa0] sm:$0xff]
    %v34 = vld [vmem:[%s1 + $0xa8] sm:$0xff]
    %v35 = vld [vmem:[%s1 + $0xb0] sm:$0xff]
    %v36 = vld [vmem:[%s1 + $0xb8] sm:$0xff]
    %v37 = vld [vmem:[%s1 + $0xc0] sm:$0xff]
    %v38 = vld [vmem:[%s1 + $0xc8] sm:$0xff]
    %v39 = vld [vmem:[%s1 + $0xd0] sm:$0xff]
    %v40 = vld [vmem:[%s1 + $0xd8] sm:$0xff]
    %v41 = vld [vmem:[%s1 + $0xe0] sm:$0xff]
    %v42 = vld [vmem:[%s1 + $0xe8] sm:$0xff]
    %v43 = vld [vmem:[%s1 + $0xf0] sm:$0xff]
    %v44 = vld [vmem:[%s1 + $0xf8] sm:$0xff]
    %v45 = vld [vmem:[%s1 + $0x100] sm:$0xff]
    %v46 = vld [vmem:[%s1 + $0x108] sm:$0xff]
    %v47 = vld [vmem:[%s1 + $0x110] sm:$0xff]
    %v48 = vld [vmem:[%s1 + $0x118] sm:$0xff]
    %v49 = vld [vmem:[%s1 + $0x120] sm:$0xff]
    %v50 = vld [vmem:[%s1 + $0x128] sm:$0xff]
    %v51 = vld [vmem:[%s1 + $0x130] sm:$0xff]
    %v52 = vld [vmem:[%s1 + $0x138] sm:$0xff]
    %v53 = vld [vmem:[%s1 + $0x140] sm:$0xff]
    %v54 = vld [vmem:[%s1 + $0x148] sm:$0xff]
    %v55 = vld [vmem:[%s1 + $0x150] sm:$0xff]
    %v56 = vld [vmem:[%s1 + $0x158] sm:$0xff]
    %v57 = vld [vmem:[%s1 + $0x160] sm:$0xff]
    %v58 = vld [vmem:[%s1 + $0x168] sm:$0xff]
    %v59 = vld [vmem:[%s1 + $0x170] sm:$0xff]
    %v60 = vld [vmem:[%s1 + $0x178] sm:$0xff]
    %v61 = vld [vmem:[%s1 + $0x180] sm:$0xff]
    %v62 = vld [vmem:[%s1 + $0x188] sm:$0xff]
    %v63 = vld [vmem:[%s1 + $0x190] sm:$0xff]
    %v64 = vld [vmem:[%s1 + $0x198] sm:$0xff]
    %v65 = vld [vmem:[%s1 + $0x1a0] sm:$0xff]
    %v66 = vld [vmem:[%s1 + $0x1a8] sm:$0xff]
    %v67 = vld [vmem:[%s1 + $0x1b0] sm:$0xff]
    %v68 = vld [vmem:[%s1 + $0x1b8] sm:$0xff]
    %v69 = vld [vmem:[%s1 + $0x1c0] sm:$0xff]
    %v70 = vld [vmem:[%s1 + $0x1c8] sm:$0xff]
    %v71 = vld [vmem:[%s1 + $0x1d0] sm:$0xff]
    %v72 = vld [vmem:[%s1 + $0x1d8] sm:$0xff]
    %v73 = vld [vmem:[%s1 + $0x1e0] sm:$0xff]
    %v74 = vld [vmem:[%s1 + $0x1e8] sm:$0xff]
    %v75 = vld [vmem:[%s1 + $0x1f0] sm:$0xff]
    %v76 = vld [vmem:[%s1 + $0x1f8] sm:$0xff]
    %v77 = vld [vmem:[%s1 + $0x200] sm:$0xff]
    %v78 = vld [vmem:[%s1 + $0x208] sm:$0xff]
    %v79 = vld [vmem:[%s1 + $0x210] sm:$0xff]
    %v80 = vld [vmem:[%s1 + $0x218] sm:$0xff]
    %v81 = vld [vmem:[%s1 + $0x220] sm:$0xff]
    %v82 = vld [vmem:[%s1 + $0x228] sm:$0xff]
    %v83 = vld [vmem:[%s1 + $0x230] sm:$0xff]
    %v84 = vld [vmem:[%s1 + $0x238] sm:$0xff]
    %v85 = vld [vmem:[%s1 + $0x240] sm:$0xff]
    %v86 = vld [vmem:[%s1 + $0x248] sm:$0xff]
    %v87 = vld [vmem:[%s1 + $0x250] sm:$0xff]
    %v88 = vld [vmem:[%s1 + $0x258] sm:$0xff]
    %v89 = vld [vmem:[%s1 + $0x260] sm:$0xff]
    %v90 = vld [vmem:[%s1 + $0x268] sm:$0xff]
    %v91 = vld [vmem:[%s1 + $0x270] sm:$0xff]
    %v92 = vld [vmem:[%s1 + $0x278] sm:$0xff]
    %v93 = vld [vmem:[%s1 + $0x280] sm:$0xff]
    %v94 = vld [vmem:[%s1 + $0x288] sm:$0xff]
    %v95 = vld [vmem:[%s1 + $0x290] sm:$0xff]
    %v96 = vld [vmem:[%s1 + $0x298] sm:$0xff]
    %v97 = vld [vmem:[%s1 + $0x2a0] sm:$0xff]
    %v98 = vld [vmem:[%s1 + $0x2a8] sm:$0xff]
    %v99 = vld [vmem:[%s1 + $0x2b0] sm:$0xff]
    %v100 = vld [vmem:[%s1 + $0x2b8] sm:$0xff]
    %v101 = vld [vmem:[%s1 + $0x2c0] sm:$0xff]
    %v102 = vld [vmem:[%s1 + $0x2c8] sm:$0xff]
    %v103 = vld [vmem:[%s1 + $0x2d0] sm:$0xff]
    %v104 = vld [vmem:[%s1 + $0x2d8] sm:$0xff]
    %v105 = vld [vmem:[%s1 + $0x2e0] sm:$0xff]
    %v106 = vld [vmem:[%s1 + $0x2e8] sm:$0xff]
    %v107 = vld [vmem:[%s1 + $0x2f0] sm:$0xff]
    %v108 = vld [vmem:[%s1 + $0x2f8] sm:$0xff]
    %v109 = vld [vmem:[%s1 + $0x300] sm:$0xff]
    %v110 = vld [vmem:[%s1 + $0x308] sm:$0xff]
    %v111 = vld [vmem:[%s1 + $0x310] sm:$0xff]
    %v112 = vld [vmem:[%s1 + $0x318] sm:$0xff]
    %v113 = vld [vmem:[%s1 + $0x320] sm:$0xff]
    %v114 = vld [vmem:[%s1 + $0x328] sm:$0xff]
    %v115 = vld [vmem:[%s1 + $0x330] sm:$0xff]
    %v116 = vld [vmem:[%s1 + $0x338] sm:$0xff]
    %v117 = vld [vmem:[%s1 + $0x340] sm:$0xff]
    %v118 = vld [vmem:[%s1 + $0x348] sm:$0xff]
    %v119 = vld [vmem:[%s1 + $0x350] sm:$0xff]
    %v120 = vld [vmem:[%s1 + $0x358] sm:$0xff]
    %v121 = vld [vmem:[%s1 + $0x360] sm:$0xff]
    %v122 = vld [vmem:[%s1 + $0x368] sm:$0xff]
    %v123 = vld [vmem:[%s1 + $0x370] sm:$0xff]
    %v124 = vld [vmem:[%s1 + $0x378] sm:$0xff]
    %v125 = vld [vmem:[%s1 + $0x380] sm:$0xff]
    %v126 = vld [vmem:[%s1 + $0x388] sm:$0xff]
    %v127 = vld [vmem:[%s1 + $0x390] sm:$0xff]
    %v128 = vld [vmem:[%s1 + $0x398] sm:$0xff]
    %v129 = vld [vmem:[%s1 + $0x3a0] sm:$0xff]
    %v130 = vld [vmem:[%s1 + $0x3a8] sm:$0xff]
    %v131 = vld [vmem:[%s1 + $0x3b0] sm:$0xff]
    %v132 = vld [vmem:[%s1 + $0x3b8] sm:$0xff]
    %v133 = vld [vmem:[%s1 + $0x3c0] sm:$0xff]
    %v134 = vld [vmem:[%s1 + $0x3c8] sm:$0xff]
    %v135 = vld [vmem:[%s1 + $0x3d0] sm:$0xff]
    %v136 = vld [vmem:[%s1 + $0x3d8] sm:$0xff]
    %v137 = vld [vmem:[%s1 + $0x3e0] sm:$0xff]
    %v138 = vld [vmem:[%s1 + $0x3e8] sm:$0xff]
    %v139 = vld [vmem:[%s1 + $0x3f0] sm:$0xff]
    %v140 = vld [vmem:[%s1 + $0x3f8] sm:$0xff]
    %v141 = vld [vmem:[%s1 + $0x400] sm:$0xff]
    %v142 = vld [vmem:[%s1 + $0x408] sm:$0xff]
    %v143 = vld [vmem:[%s1 + $0x410] sm:$0xff]
    %v144 = vld [vmem:[%s1 + $0x418] sm:$0xff]
    %v145 = vld [vmem:[%s1 + $0x420] sm:$0xff]
    %v146 = vld [vmem:[%s1 + $0x428] sm:$0xff]
    %v147 = vld [vmem:[%s1 + $0x430] sm:$0xff]
    %v148 = vld [vmem:[%s1 + $0x438] sm:$0xff]
    %v149 = vld [vmem:[%s1 + $0x440] sm:$0xff]
    %v150 = vld [vmem:[%s1 + $0x448] sm:$0xff]
    %v151 = vld [vmem:[%s1 + $0x450] sm:$0xff]
    %v152 = vld [vmem:[%s1 + $0x458] sm:$0xff]
    %v153 = vld [vmem:[%s1 + $0x460] sm:$0xff]
    %v154 = vld [vmem:[%s1 + $0x468] sm:$0xff]
    %v155 = vld [vmem:[%s1 + $0x470] sm:$0xff]
    %v156 = vld [vmem:[%s1 + $0x478] sm:$0xff]
    %v157 = vld [vmem:[%s1 + $0x480] sm:$0xff]
    %v158 = vld [vmem:[%s1 + $0x488] sm:$0xff]
    %v159 = vld [vmem:[%s1 + $0x490] sm:$0xff]
    %v160 = vld [vmem:[%s1 + $0x498] sm:$0xff]
    %v161 = vld [vmem:[%s1 + $0x4a0] sm:$0xff]
    %v162 = vld [vmem:[%s1 + $0x4a8] sm:$0xff]
    %v163 = vld [vmem:[%s1 + $0x4b0] sm:$0xff]
    %v164 = vld [vmem:[%s1 + $0x4b8] sm:$0xff]
    %v165 = vld [vmem:[%s1 + $0x4c0] sm:$0xff]
    %v166 = vld [vmem:[%s1 + $0x4c8] sm:$0xff]
    %v167 = vld [vmem:[%s1 + $0x4d0] sm:$0xff]
    %v168 = vld [vmem:[%s1 + $0x4d8] sm:$0xff]
    %v169 = vld [vmem:[%s1 + $0x4e0] sm:$0xff]
    %v170 = vld [vmem:[%s1 + $0x4e8] sm:$0xff]
    %v171 = vld [vmem:[%s1 + $0x4f0] sm:$0xff]
    %v172 = vld [vmem:[%s1 + $0x4f8] sm:$0xff]
    %v173 = vld [vmem:[%s1 + $0x500] sm:$0xff]
    %v174 = vld [vmem:[%s1 + $0x508] sm:$0xff]
    %v175 = vld [vmem:[%s1 + $0x510] sm:$0xff]
    %v176 = vld [vmem:[%s1 + $0x518] sm:$0xff]
    %v177 = vld [vmem:[%s1 + $0x520] sm:$0xff]
    %v178 = vld [vmem:[%s1 + $0x528] sm:$0xff]
    %v179 = vld [vmem:[%s1 + $0x530] sm:$0xff]
    %v180 = vld [vmem:[%s1 + $0x538] sm:$0xff]
    %v181 = vld [vmem:[%s1 + $0x540] sm:$0xff]
    %v182 = vld [vmem:[%s1 + $0x548] sm:$0xff]
    %v183 = vld [vmem:[%s1 + $0x550] sm:$0xff]
    %v184 = vld [vmem:[%s1 + $0x558] sm:$0xff]
    %v185 = vld [vmem:[%s1 + $0x560] sm:$0xff]
    %v186 = vld [vmem:[%s1 + $0x568] sm:$0xff]
    %v187 = vld [vmem:[%s1 + $0x570] sm:$0xff]
    %v188 = vld [vmem:[%s1 + $0x578] sm:$0xff]
    %v189 = vld [vmem:[%s1 + $0x580] sm:$0xff]
    %v190 = vld [vmem:[%s1 + $0x588] sm:$0xff]
    %v191 = vld [vmem:[%s1 + $0x590] sm:$0xff]
    %v192 = vld [vmem:[%s1 + $0x598] sm:$0xff]
    %v193 = vld [vmem:[%s1 + $0x5a0] sm:$0xff]
    %v194 = vld [vmem:[%s1 + $0x5a8] sm:$0xff]
    %v195 = vld [vmem:[%s1 + $0x5b0] sm:$0xff]
    %v196 = vld [vmem:[%s1 + $0x5b8] sm:$0xff]
    %v197 = vld [vmem:[%s1 + $0x5c0] sm:$0xff]
    %v198 = vld [vmem:[%s1 + $0x5c8] sm:$0xff]
    %v199 = vld [vmem:[%s1 + $0x5d0] sm:$0xff]
    %v200 = vld [vmem:[%s1 + $0x5d8] sm:$0xff]
    %v201 = vld [vmem:[%s1 + $0x5e0] sm:$0xff]
    %v202 = vld [vmem:[%s1 + $0x5e8] sm:$0xff]
    %v203 = vld [vmem:[%s1 + $0x5f0] sm:$0xff]
    %v204 = vld [vmem:[%s1 + $0x5f8] sm:$0xff]
    %v205 = vld [vmem:[%s1 + $0x600] sm:$0xff]
    %v206 = vld [vmem:[%s1 + $0x608] sm:$0xff]
    %v207 = vld [vmem:[%s1 + $0x610] sm:$0xff]
    %v208 = vld [vmem:[%s1 + $0x618] sm:$0xff]
    %v209 = vld [vmem:[%s1 + $0x620] sm:$0xff]
    %v210 = vld [vmem:[%s1 + $0x628] sm:$0xff]
    %v211 = vld [vmem:[%s1 + $0x630] sm:$0xff]
    %v212 = vld [vmem:[%s1 + $0x638] sm:$0xff]
    %v213 = vld [vmem:[%s1 + $0x640] sm:$0xff]
    %v214 = vld [vmem:[%s1 + $0x648] sm:$0xff]
    %v215 = vld [vmem:[%s1 + $0x650] sm:$0xff]
    %v216 = vld [vmem:[%s1 + $0x658] sm:$0xff]
    %v217 = vld [vmem:[%s1 + $0x660] sm:$0xff]
    %v218 = vld [vmem:[%s1 + $0x668] sm:$0xff]
    %v219 = vld [vmem:[%s1 + $0x670] sm:$0xff]
    %v220 = vld [vmem:[%s1 + $0x678] sm:$0xff]
    %v221 = vld [vmem:[%s1 + $0x680] sm:$0xff]
    %v222 = vld [vmem:[%s1 + $0x688] sm:$0xff]
    %v223 = vld [vmem:[%s1 + $0x690] sm:$0xff]
    %v224 = vld [vmem:[%s1 + $0x698] sm:$0xff]
    %v225 = vld [vmem:[%s1 + $0x6a0] sm:$0xff]
    %v226 = vld [vmem:[%s1 + $0x6a8] sm:$0xff]
    %v227 = vld [vmem:[%s1 + $0x6b0] sm:$0xff]
    %v228 = vld [vmem:[%s1 + $0x6b8] sm:$0xff]
    %v229 = vld [vmem:[%s1 + $0x6c0] sm:$0xff]
    %v230 = vld [vmem:[%s1 + $0x6c8] sm:$0xff]
    %v231 = vld [vmem:[%s1 + $0x6d0] sm:$0xff]
    %v232 = vld [vmem:[%s1 + $0x6d8] sm:$0xff]
    %v233 = vld [vmem:[%s1 + $0x6e0] sm:$0xff]
    %v234 = vld [vmem:[%s1 + $0x6e8] sm:$0xff]
    %v235 = vld [vmem:[%s1 + $0x6f0] sm:$0xff]
    %v236 = vld [vmem:[%s1 + $0x6f8] sm:$0xff]
    %v237 = vld [vmem:[%s1 + $0x700] sm:$0xff]
    %v238 = vld [vmem:[%s1 + $0x708] sm:$0xff]
    %v239 = vld [vmem:[%s1 + $0x710] sm:$0xff]
    %v240 = vld [vmem:[%s1 + $0x718] sm:$0xff]
    %v241 = vld [vmem:[%s1 + $0x720] sm:$0xff]
    %v242 = vld [vmem:[%s1 + $0x728] sm:$0xff]
    %v243 = vld [vmem:[%s1 + $0x730] sm:$0xff]
    %v244 = vld [vmem:[%s1 + $0x738] sm:$0xff]
    %v245 = vld [vmem:[%s1 + $0x740] sm:$0xff]
    %v246 = vld [vmem:[%s1 + $0x748] sm:$0xff]
    %v247 = vld [vmem:[%s1 + $0x750] sm:$0xff]
    %v248 = vld [vmem:[%s1 + $0x758] sm:$0xff]
    %v249 = vld [vmem:[%s1 + $0x760] sm:$0xff]
    %v250 = vld [vmem:[%s1 + $0x768] sm:$0xff]
    %v251 = vld [vmem:[%s1 + $0x770] sm:$0xff]
    %v252 = vld [vmem:[%s1 + $0x778] sm:$0xff]
    %v253 = vld [vmem:[%s1 + $0x780] sm:$0xff]
    %v254 = vld [vmem:[%s1 + $0x788] sm:$0xff]
    %v255 = vld [vmem:[%s1 + $0x790] sm:$0xff]
    %v256 = vld [vmem:[%s1 + $0x798] sm:$0xff]
    %v257 = vld [vmem:[%s1 + $0x7a0] sm:$0xff]
    %v258 = vld [vmem:[%s1 + $0x7a8] sm:$0xff]
    %v259 = vld [vmem:[%s1 + $0x7b0] sm:$0xff]
    %v260 = vld [vmem:[%s1 + $0x7b8] sm:$0xff]
    %v261 = vld [vmem:[%s1 + $0x7c0] sm:$0xff]
    %v262 = vld [vmem:[%s1 + $0x7c8] sm:$0xff]
    %v263 = vld [vmem:[%s1 + $0x7d0] sm:$0xff]
    %v264 = vld [vmem:[%s1 + $0x7d8] sm:$0xff]
    %v265 = vld [vmem:[%s1 + $0x7e0] sm:$0xff]
    %v266 = vld [vmem:[%s1 + $0x7e8] sm:$0xff]
    %v267 = vld [vmem:[%s1 + $0x7f0] sm:$0xff]
    %v268 = vld [vmem:[%s1 + $0x7f8] sm:$0xff]
    %v269 = vld [vmem:[%s1 + $0x800] sm:$0xff]
    %v270 = vld [vmem:[%s1 + $0x808] sm:$0xff]
    %v271 = vld [vmem:[%s1 + $0x810] sm:$0xff]
    %v272 = vld [vmem:[%s1 + $0x818] sm:$0xff]
    %v273 = vld [vmem:[%s1 + $0x820] sm:$0xff]
    %v274 = vld [vmem:[%s1 + $0x828] sm:$0xff]
    %v275 = vld [vmem:[%s1 + $0x830] sm:$0xff]
    %v276 = vld [vmem:[%s1 + $0x838] sm:$0xff]
    %v277 = vld [vmem:[%s1 + $0x840] sm:$0xff]
    %v278 = vld [vmem:[%s1 + $0x848] sm:$0xff]
    %v279 = vld [vmem:[%s1 + $0x850] sm:$0xff]
    %v280 = vld [vmem:[%s1 + $0x858] sm:$0xff]
    %v281 = vld [vmem:[%s1 + $0x860] sm:$0xff]
    %v282 = vld [vmem:[%s1 + $0x868] sm:$0xff]
    %v283 = vld [vmem:[%s1 + $0x870] sm:$0xff]
    %v284 = vld [vmem:[%s1 + $0x878] sm:$0xff]
    %v285 = vld [vmem:[%s1 + $0x880] sm:$0xff]
    %v286 = vld [vmem:[%s1 + $0x888] sm:$0xff]
    %v287 = vld [vmem:[%s1 + $0x890] sm:$0xff]
    %v288 = vld [vmem:[%s1 + $0x898] sm:$0xff]
    %v289 = vld [vmem:[%s1 + $0x8a0] sm:$0xff]
    %v290 = vld [vmem:[%s1 + $0x8a8] sm:$0xff]
    %v291 = vld [vmem:[%s1 + $0x8b0] sm:$0xff]
    %v292 = vld [vmem:[%s1 + $0x8b8] sm:$0xff]
    %v293 = vld [vmem:[%s1 + $0x8c0] sm:$0xff]
    %v294 = vld [vmem:[%s1 + $0x8c8] sm:$0xff]
    %v295 = vld [vmem:[%s1 + $0x8d0] sm:$0xff]
    %v296 = vld [vmem:[%s1 + $0x8d8] sm:$0xff]
    %v297 = vld [vmem:[%s1 + $0x8e0] sm:$0xff]
    %v298 = vld [vmem:[%s1 + $0x8e8] sm:$0xff]
    %v299 = vld [vmem:[%s1 + $0x8f0] sm:$0xff]
    %v300 = vld [vmem:[%s1 + $0x8f8] sm:$0xff]
    %v301 = vld [vmem:[%s1 + $0x900] sm:$0xff]
    %v302 = vld [vmem:[%s1 + $0x908] sm:$0xff]
    %v303 = vld [vmem:[%s1 + $0x910] sm:$0xff]
    %v304 = vld [vmem:[%s1 + $0x918] sm:$0xff]
    %v305 = vld [vmem:[%s1 + $0x920] sm:$0xff]
    %v306 = vld [vmem:[%s1 + $0x928] sm:$0xff]
    %v307 = vld [vmem:[%s1 + $0x930] sm:$0xff]
    %v308 = vld [vmem:[%s1 + $0x938] sm:$0xff]
    %v309 = vld [vmem:[%s1 + $0x940] sm:$0xff]
    %v310 = vld [vmem:[%s1 + $0x948] sm:$0xff]
    %v311 = vld [vmem:[%s1 + $0x950] sm:$0xff]
    %v312 = vld [vmem:[%s1 + $0x958] sm:$0xff]
    %v313 = vld [vmem:[%s1 + $0x960] sm:$0xff]
    %v314 = vld [vmem:[%s1 + $0x968] sm:$0xff]
    %v315 = vld [vmem:[%s1 + $0x970] sm:$0xff]
    %v316 = vld [vmem:[%s1 + $0x978] sm:$0xff]
    %v317 = vld [vmem:[%s1 + $0x980] sm:$0xff]
    %v318 = vld [vmem:[%s1 + $0x988] sm:$0xff]
    %v319 = vld [vmem:[%s1 + $0x990] sm:$0xff]
    %v320 = vld [vmem:[%s1 + $0x998] sm:$0xff]
    %v321 = vld [vmem:[%s1 + $0x9a0] sm:$0xff]
    %v322 = vld [vmem:[%s1 + $0x9a8] sm:$0xff]
    %v323 = vld [vmem:[%s1 + $0x9b0] sm:$0xff]
    %v324 = vld [vmem:[%s1 + $0x9b8] sm:$0xff]
    %v325 = vld [vmem:[%s1 + $0x9c0] sm:$0xff]
    %v326 = vld [vmem:[%s1 + $0x9c8] sm:$0xff]
    %v327 = vld [vmem:[%s1 + $0x9d0] sm:$0xff]
    %v328 = vld [vmem:[%s1 + $0x9d8] sm:$0xff]
    %v329 = vld [vmem:[%s1 + $0x9e0] sm:$0xff]
    %v330 = vld [vmem:[%s1 + $0x9e8] sm:$0xff]
    %v331 = vld [vmem:[%s1 + $0x9f0] sm:$0xff]
    %v332 = vld [vmem:[%s1 + $0x9f8] sm:$0xff]
    %v333 = vld [vmem:[%s1 + $0xa00] sm:$0xff]
    %v334 = vld [vmem:[%s1 + $0xa08] sm:$0xff]
    %v335 = vld [vmem:[%s1 + $0xa10] sm:$0xff]
    %v336 = vld [vmem:[%s1 + $0xa18] sm:$0xff]
    %v337 = vld [vmem:[%s1 + $0xa20] sm:$0xff]
    %v338 = vld [vmem:[%s1 + $0xa28] sm:$0xff]
    %v339 = vld [vmem:[%s1 + $0xa30] sm:$0xff]
    %v340 = vld [vmem:[%s1 + $0xa38] sm:$0xff]
    %v341 = vld [vmem:[%s1 + $0xa40] sm:$0xff]
    %v342 = vld [vmem:[%s1 + $0xa48] sm:$0xff]
    %v343 = vld [vmem:[%s1 + $0xa50] sm:$0xff]
    %v344 = vld [vmem:[%s1 + $0xa58] sm:$0xff]
    %v345 = vld [vmem:[%s1 + $0xa60] sm:$0xff]
    %v346 = vld [vmem:[%s1 + $0xa68] sm:$0xff]
    %v347 = vld [vmem:[%s1 + $0xa70] sm:$0xff]
    %v348 = vld [vmem:[%s1 + $0xa78] sm:$0xff]
    %v349 = vld [vmem:[%s1 + $0xa80] sm:$0xff]
    %v350 = vld [vmem:[%s1 + $0xa88] sm:$0xff]
    %v351 = vld [vmem:[%s1 + $0xa90] sm:$0xff]
    %v352 = vld [vmem:[%s1 + $0xa98] sm:$0xff]
    %v353 = vld [vmem:[%s1 + $0xaa0] sm:$0xff]
    %v354 = vld [vmem:[%s1 + $0xaa8] sm:$0xff]
    %v355 = vld [vmem:[%s1 + $0xab0] sm:$0xff]
    %v356 = vld [vmem:[%s1 + $0xab8] sm:$0xff]
    %v357 = vld [vmem:[%s1 + $0xac0] sm:$0xff]
    %v358 = vld [vmem:[%s1 + $0xac8] sm:$0xff]
    %v359 = vld [vmem:[%s1 + $0xad0] sm:$0xff]
    %v360 = vld [vmem:[%s1 + $0xad8] sm:$0xff]
    %v361 = vld [vmem:[%s1 + $0xae0] sm:$0xff]
    %v362 = vld [vmem:[%s1 + $0xae8] sm:$0xff]
    %v363 = vld [vmem:[%s1 + $0xaf0] sm:$0xff]
    %v364 = vld [vmem:[%s1 + $0xaf8] sm:$0xff]
    %v365 = vld [vmem:[%s1 + $0xb00] sm:$0xff]
    %v366 = vld [vmem:[%s1 + $0xb08] sm:$0xff]
    %v367 = vld [vmem:[%s1 + $0xb10] sm:$0xff]
    %v368 = vld [vmem:[%s1 + $0xb18] sm:$0xff]
    %v369 = vld [vmem:[%s1 + $0xb20] sm:$0xff]
    %v370 = vld [vmem:[%s1 + $0xb28] sm:$0xff]
    %v371 = vld [vmem:[%s1 + $0xb30] sm:$0xff]
    %v372 = vld [vmem:[%s1 + $0xb38] sm:$0xff]
    %v373 = vld [vmem:[%s1 + $0xb40] sm:$0xff]
    %v374 = vld [vmem:[%s1 + $0xb48] sm:$0xff]
    %v375 = vld [vmem:[%s1 + $0xb50] sm:$0xff]
    %v376 = vld [vmem:[%s1 + $0xb58] sm:$0xff]
    %v377 = vld [vmem:[%s1 + $0xb60] sm:$0xff]
    %v378 = vld [vmem:[%s1 + $0xb68] sm:$0xff]
    %v379 = vld [vmem:[%s1 + $0xb70] sm:$0xff]
    %v380 = vld [vmem:[%s1 + $0xb78] sm:$0xff]
    %v381 = vld [vmem:[%s1 + $0xb80] sm:$0xff]
    %v382 = vld [vmem:[%s1 + $0xb88] sm:$0xff]
    %v383 = vld [vmem:[%s1 + $0xb90] sm:$0xff]
    %v384 = vld [vmem:[%s1 + $0xb98] sm:$0xff]
    %v385 = vld [vmem:[%s1 + $0xba0] sm:$0xff]
    %v386 = vld [vmem:[%s1 + $0xba8] sm:$0xff]
    %v387 = vld [vmem:[%s1 + $0xbb0] sm:$0xff]
    %v388 = vld [vmem:[%s1 + $0xbb8] sm:$0xff]
    %v389 = vld [vmem:[%s1 + $0xbc0] sm:$0xff]
    %v390 = vld [vmem:[%s1 + $0xbc8] sm:$0xff]
    %v391 = vld [vmem:[%s1 + $0xbd0] sm:$0xff]
    %v392 = vld [vmem:[%s1 + $0xbd8] sm:$0xff]
    %v393 = vld [vmem:[%s1 + $0xbe0] sm:$0xff]
    %v394 = vld [vmem:[%s1 + $0xbe8] sm:$0xff]
    %v395 = vld [vmem:[%s1 + $0xbf0] sm:$0xff]
    %v396 = vld [vmem:[%s1 + $0xbf8] sm:$0xff]
    %v397 = vld [vmem:[%s1 + $0xc00] sm:$0xff]
    %v398 = vld [vmem:[%s1 + $0xc08] sm:$0xff]
    %v399 = vld [vmem:[%s1 + $0xc10] sm:$0xff]
    %v400 = vld [vmem:[%s1 + $0xc18] sm:$0xff]
    %v401 = vld [vmem:[%s1 + $0xc20] sm:$0xff]
    %v402 = vld [vmem:[%s1 + $0xc28] sm:$0xff]
    %v403 = vld [vmem:[%s1 + $0xc30] sm:$0xff]
    %v404 = vld [vmem:[%s1 + $0xc38] sm:$0xff]
    %v405 = vld [vmem:[%s1 + $0xc40] sm:$0xff]
    %v406 = vld [vmem:[%s1 + $0xc48] sm:$0xff]
    %v407 = vld [vmem:[%s1 + $0xc50] sm:$0xff]
    %v408 = vld [vmem:[%s1 + $0xc58] sm:$0xff]
    %v409 = vld [vmem:[%s1 + $0xc60] sm:$0xff]
    %v410 = vld [vmem:[%s1 + $0xc68] sm:$0xff]
    %v411 = vld [vmem:[%s1 + $0xc70] sm:$0xff]
    %v412 = vld [vmem:[%s1 + $0xc78] sm:$0xff]
    %v413 = vld [vmem:[%s1 + $0xc80] sm:$0xff]
    %v414 = vld [vmem:[%s1 + $0xc88] sm:$0xff]
    %v415 = vld [vmem:[%s1 + $0xc90] sm:$0xff]
    %v416 = vld [vmem:[%s1 + $0xc98] sm:$0xff]
    %v417 = vld [vmem:[%s1 + $0xca0] sm:$0xff]
    %v418 = vld [vmem:[%s1 + $0xca8] sm:$0xff]
    %v419 = vld [vmem:[%s1 + $0xcb0] sm:$0xff]
    %v420 = vld [vmem:[%s1 + $0xcb8] sm:$0xff]
    %v421 = vld [vmem:[%s1 + $0xcc0] sm:$0xff]
    %v422 = vld [vmem:[%s1 + $0xcc8] sm:$0xff]
    %v423 = vld [vmem:[%s1 + $0xcd0] sm:$0xff]
    %v424 = vld [vmem:[%s1 + $0xcd8] sm:$0xff]
    %v425 = vld [vmem:[%s1 + $0xce0] sm:$0xff]
    %v426 = vld [vmem:[%s1 + $0xce8] sm:$0xff]
    %v427 = vld [vmem:[%s1 + $0xcf0] sm:$0xff]
    %v428 = vld [vmem:[%s1 + $0xcf8] sm:$0xff]
    %v429 = vld [vmem:[%s1 + $0xd00] sm:$0xff]
    %v430 = vld [vmem:[%s1 + $0xd08] sm:$0xff]
    %v431 = vld [vmem:[%s1 + $0xd10] sm:$0xff]
    %v432 = vld [vmem:[%s1 + $0xd18] sm:$0xff]
    %v433 = vld [vmem:[%s1 + $0xd20] sm:$0xff]
    %v434 = vld [vmem:[%s1 + $0xd28] sm:$0xff]
    %v435 = vld [vmem:[%s1 + $0xd30] sm:$0xff]
    %v436 = vld [vmem:[%s1 + $0xd38] sm:$0xff]
    %v437 = vld [vmem:[%s1 + $0xd40] sm:$0xff]
    %v438 = vld [vmem:[%s1 + $0xd48] sm:$0xff]
    %v439 = vld [vmem:[%s1 + $0xd50] sm:$0xff]
    %v440 = vld [vmem:[%s1 + $0xd58] sm:$0xff]
    %v441 = vld [vmem:[%s1 + $0xd60] sm:$0xff]
    %v442 = vld [vmem:[%s1 + $0xd68] sm:$0xff]
    %v443 = vld [vmem:[%s1 + $0xd70] sm:$0xff]
    %v444 = vld [vmem:[%s1 + $0xd78] sm:$0xff]
    %v445 = vld [vmem:[%s1 + $0xd80] sm:$0xff]
    %v446 = vld [vmem:[%s1 + $0xd88] sm:$0xff]
    %v447 = vld [vmem:[%s1 + $0xd90] sm:$0xff]
    %v448 = vld [vmem:[%s1 + $0xd98] sm:$0xff]
    %v449 = vld [vmem:[%s1 + $0xda0] sm:$0xff]
    %v450 = vld [vmem:[%s1 + $0xda8] sm:$0xff]
    %v451 = vld [vmem:[%s1 + $0xdb0] sm:$0xff]
    %v452 = vld [vmem:[%s1 + $0xdb8] sm:$0xff]
    %v453 = vld [vmem:[%s1 + $0xdc0] sm:$0xff]
    %v454 = vld [vmem:[%s1 + $0xdc8] sm:$0xff]
    %v455 = vld [vmem:[%s1 + $0xdd0] sm:$0xff]
    %v456 = vld [vmem:[%s1 + $0xdd8] sm:$0xff]
    %v457 = vld [vmem:[%s1 + $0xde0] sm:$0xff]
    %v458 = vld [vmem:[%s1 + $0xde8] sm:$0xff]
    %v459 = vld [vmem:[%s1 + $0xdf0] sm:$0xff]
    %v460 = vld [vmem:[%s1 + $0xdf8] sm:$0xff]
    %v461 = vld [vmem:[%s1 + $0xe00] sm:$0xff]
    %v462 = vld [vmem:[%s1 + $0xe08] sm:$0xff]
    %v463 = vld [vmem:[%s1 + $0xe10] sm:$0xff]
    %v464 = vld [vmem:[%s1 + $0xe18] sm:$0xff]
    %v465 = vld [vmem:[%s1 + $0xe20] sm:$0xff]
    %v466 = vld [vmem:[%s1 + $0xe28] sm:$0xff]
    %v467 = vld [vmem:[%s1 + $0xe30] sm:$0xff]
    %v468 = vld [vmem:[%s1 + $0xe38] sm:$0xff]
    %v469 = vld [vmem:[%s1 + $0xe40] sm:$0xff]
    %v470 = vld [vmem:[%s1 + $0xe48] sm:$0xff]
    %v471 = vld [vmem:[%s1 + $0xe50] sm:$0xff]
    %v472 = vld [vmem:[%s1 + $0xe58] sm:$0xff]
    %v473 = vld [vmem:[%s1 + $0xe60] sm:$0xff]
    %v474 = vld [vmem:[%s1 + $0xe68] sm:$0xff]
    %v475 = vld [vmem:[%s1 + $0xe70] sm:$0xff]
    %v476 = vld [vmem:[%s1 + $0xe78] sm:$0xff]
    %v477 = vld [vmem:[%s1 + $0xe80] sm:$0xff]
    %v478 = vld [vmem:[%s1 + $0xe88] sm:$0xff]
    %v479 = vld [vmem:[%s1 + $0xe90] sm:$0xff]
    %v480 = vld [vmem:[%s1 + $0xe98] sm:$0xff]
    %v481 = vmax.f32 %v13, 0.0
    %v482 = vmax.f32 %v14, 0.0
    %v483 = vmax.f32 %v15, 0.0
    %v484 = vmax.f32 %v16, 0.0
    %v485 = vmax.f32 %v17, 0.0
    %v486 = vmax.f32 %v18, 0.0
    %v487 = vmax.f32 %v19, 0.0
    %v488 = vmax.f32 %v20, 0.0
    %v489 = vmax.f32 %v21, 0.0
    %v490 = vmax.f32 %v22, 0.0
    %v491 = vmax.f32 %v23, 0.0
    %v492 = vmax.f32 %v24, 0.0
    %v493 = vmax.f32 %v25, 0.0
    %v494 = vmax.f32 %v26, 0.0
    %v495 = vmax.f32 %v27, 0.0
    %v496 = vmax.f32 %v28, 0.0
    %v497 = vmax.f32 %v29, 0.0
    %v498 = vmax.f32 %v30, 0.0
    %v499 = vmax.f32 %v31, 0.0
    %v500 = vmax.f32 %v32, 0.0
    %v501 = vmax.f32 %v33, 0.0
    %v502 = vmax.f32 %v34, 0.0
    %v503 = vmax.f32 %v35, 0.0
    %v504 = vmax.f32 %v36, 0.0
    %v505 = vmax.f32 %v37, 0.0
    %v506 = vmax.f32 %v38, 0.0
    %v507 = vmax.f32 %v39, 0.0
    %v508 = vmax.f32 %v40, 0.0
    %v509 = vmax.f32 %v41, 0.0
    %v510 = vmax.f32 %v42, 0.0
    %v511 = vmax.f32 %v43, 0.0
    %v512 = vmax.f32 %v44, 0.0
    %v513 = vmax.f32 %v45, 0.0
    %v514 = vmax.f32 %v46, 0.0
    %v515 = vmax.f32 %v47, 0.0
    %v516 = vmax.f32 %v48, 0.0
    %v517 = vmax.f32 %v49, 0.0
    %v518 = vmax.f32 %v50, 0.0
    %v519 = vmax.f32 %v51, 0.0
    %v520 = vmax.f32 %v52, 0.0
    %v521 = vmax.f32 %v53, 0.0
    %v522 = vmax.f32 %v54, 0.0
    %v523 = vmax.f32 %v55, 0.0
    %v524 = vmax.f32 %v56, 0.0
    %v525 = vmax.f32 %v57, 0.0
    %v526 = vmax.f32 %v58, 0.0
    %v527 = vmax.f32 %v59, 0.0
    %v528 = vmax.f32 %v60, 0.0
    %v529 = vmax.f32 %v61, 0.0
    %v530 = vmax.f32 %v62, 0.0
    %v531 = vmax.f32 %v63, 0.0
    %v532 = vmax.f32 %v64, 0.0
    %v533 = vmax.f32 %v65, 0.0
    %v534 = vmax.f32 %v66, 0.0
    %v535 = vmax.f32 %v67, 0.0
    %v536 = vmax.f32 %v68, 0.0
    %v537 = vmax.f32 %v69, 0.0
    %v538 = vmax.f32 %v70, 0.0
    %v539 = vmax.f32 %v71, 0.0
    %v540 = vmax.f32 %v72, 0.0
    %v541 = vmax.f32 %v73, 0.0
    %v542 = vmax.f32 %v74, 0.0
    %v543 = vmax.f32 %v75, 0.0
    %v544 = vmax.f32 %v76, 0.0
    %v545 = vmax.f32 %v77, 0.0
    %v546 = vmax.f32 %v78, 0.0
    %v547 = vmax.f32 %v79, 0.0
    %v548 = vmax.f32 %v80, 0.0
    %v549 = vmax.f32 %v81, 0.0
    %v550 = vmax.f32 %v82, 0.0
    %v551 = vmax.f32 %v83, 0.0
    %v552 = vmax.f32 %v84, 0.0
    %v553 = vmax.f32 %v85, 0.0
    %v554 = vmax.f32 %v86, 0.0
    %v555 = vmax.f32 %v87, 0.0
    %v556 = vmax.f32 %v88, 0.0
    %v557 = vmax.f32 %v89, 0.0
    %v558 = vmax.f32 %v90, 0.0
    %v559 = vmax.f32 %v91, 0.0
    %v560 = vmax.f32 %v92, 0.0
    %v561 = vmax.f32 %v93, 0.0
    %v562 = vmax.f32 %v94, 0.0
    %v563 = vmax.f32 %v95, 0.0
    %v564 = vmax.f32 %v96, 0.0
    %v565 = vmax.f32 %v97, 0.0
    %v566 = vmax.f32 %v98, 0.0
    %v567 = vmax.f32 %v99, 0.0
    %v568 = vmax.f32 %v100, 0.0
    %v569 = vmax.f32 %v101, 0.0
    %v570 = vmax.f32 %v102, 0.0
    %v571 = vmax.f32 %v103, 0.0
    %v572 = vmax.f32 %v104, 0.0
    %v573 = vmax.f32 %v105, 0.0
    %v574 = vmax.f32 %v106, 0.0
    %v575 = vmax.f32 %v107, 0.0
    %v576 = vmax.f32 %v108, 0.0
    %v577 = vmax.f32 %v109, 0.0
    %v578 = vmax.f32 %v110, 0.0
    %v579 = vmax.f32 %v111, 0.0
    %v580 = vmax.f32 %v112, 0.0
    %v581 = vmax.f32 %v113, 0.0
    %v582 = vmax.f32 %v114, 0.0
    %v583 = vmax.f32 %v115, 0.0
    %v584 = vmax.f32 %v116, 0.0
    %v585 = vmax.f32 %v117, 0.0
    %v586 = vmax.f32 %v118, 0.0
    %v587 = vmax.f32 %v119, 0.0
    %v588 = vmax.f32 %v120, 0.0
    %v589 = vmax.f32 %v121, 0.0
    %v590 = vmax.f32 %v122, 0.0
    %v591 = vmax.f32 %v123, 0.0
    %v592 = vmax.f32 %v124, 0.0
    %v593 = vmax.f32 %v125, 0.0
    %v594 = vmax.f32 %v126, 0.0
    %v595 = vmax.f32 %v127, 0.0
    %v596 = vmax.f32 %v128, 0.0
    %v597 = vmax.f32 %v129, 0.0
    %v598 = vmax.f32 %v130, 0.0
    %v599 = vmax.f32 %v131, 0.0
    %v600 = vmax.f32 %v132, 0.0
    %v601 = vmax.f32 %v133, 0.0
    %v602 = vmax.f32 %v134, 0.0
    %v603 = vmax.f32 %v135, 0.0
    %v604 = vmax.f32 %v136, 0.0
    %v605 = vmax.f32 %v137, 0.0
    %v606 = vmax.f32 %v138, 0.0
    %v607 = vmax.f32 %v139, 0.0
    %v608 = vmax.f32 %v140, 0.0
    %v609 = vmax.f32 %v141, 0.0
    %v610 = vmax.f32 %v142, 0.0
    %v611 = vmax.f32 %v143, 0.0
    %v612 = vmax.f32 %v144, 0.0
    %v613 = vmax.f32 %v145, 0.0
    %v614 = vmax.f32 %v146, 0.0
    %v615 = vmax.f32 %v147, 0.0
    %v616 = vmax.f32 %v148, 0.0
    %v617 = vmax.f32 %v149, 0.0
    %v618 = vmax.f32 %v150, 0.0
    %v619 = vmax.f32 %v151, 0.0
    %v620 = vmax.f32 %v152, 0.0
    %v621 = vmax.f32 %v153, 0.0
    %v622 = vmax.f32 %v154, 0.0
    %v623 = vmax.f32 %v155, 0.0
    %v624 = vmax.f32 %v156, 0.0
    %v625 = vmax.f32 %v157, 0.0
    %v626 = vmax.f32 %v158, 0.0
    %v627 = vmax.f32 %v159, 0.0
    %v628 = vmax.f32 %v160, 0.0
    %v629 = vmax.f32 %v161, 0.0
    %v630 = vmax.f32 %v162, 0.0
    %v631 = vmax.f32 %v163, 0.0
    %v632 = vmax.f32 %v164, 0.0
    %v633 = vmax.f32 %v165, 0.0
    %v634 = vmax.f32 %v166, 0.0
    %v635 = vmax.f32 %v167, 0.0
    %v636 = vmax.f32 %v168, 0.0
    %v637 = vmax.f32 %v169, 0.0
    %v638 = vmax.f32 %v170, 0.0
    %v639 = vmax.f32 %v171, 0.0
    %v640 = vmax.f32 %v172, 0.0
    %v641 = vmax.f32 %v173, 0.0
    %v642 = vmax.f32 %v174, 0.0
    %v643 = vmax.f32 %v175, 0.0
    %v644 = vmax.f32 %v176, 0.0
    %v645 = vmax.f32 %v177, 0.0
    %v646 = vmax.f32 %v178, 0.0
    %v647 = vmax.f32 %v179, 0.0
    %v648 = vmax.f32 %v180, 0.0
    %v649 = vmax.f32 %v181, 0.0
    %v650 = vmax.f32 %v182, 0.0
    %v651 = vmax.f32 %v183, 0.0
    %v652 = vmax.f32 %v184, 0.0
    %v653 = vmax.f32 %v185, 0.0
    %v654 = vmax.f32 %v186, 0.0
    %v655 = vmax.f32 %v187, 0.0
    %v656 = vmax.f32 %v188, 0.0
    %v657 = vmax.f32 %v189, 0.0
    %v658 = vmax.f32 %v190, 0.0
    %v659 = vmax.f32 %v191, 0.0
    %v660 = vmax.f32 %v192, 0.0
    %v661 = vmax.f32 %v193, 0.0
    %v662 = vmax.f32 %v194, 0.0
    %v663 = vmax.f32 %v195, 0.0
    %v664 = vmax.f32 %v196, 0.0
    %v665 = vmax.f32 %v197, 0.0
    %v666 = vmax.f32 %v198, 0.0
    %v667 = vmax.f32 %v199, 0.0
    %v668 = vmax.f32 %v200, 0.0
    %v669 = vmax.f32 %v201, 0.0
    %v670 = vmax.f32 %v202, 0.0
    %v671 = vmax.f32 %v203, 0.0
    %v672 = vmax.f32 %v204, 0.0
    %v673 = vmax.f32 %v205, 0.0
    %v674 = vmax.f32 %v206, 0.0
    %v675 = vmax.f32 %v207, 0.0
    %v676 = vmax.f32 %v208, 0.0
    %v677 = vmax.f32 %v209, 0.0
    %v678 = vmax.f32 %v210, 0.0
    %v679 = vmax.f32 %v211, 0.0
    %v680 = vmax.f32 %v212, 0.0
    %v681 = vmax.f32 %v213, 0.0
    %v682 = vmax.f32 %v214, 0.0
    %v683 = vmax.f32 %v215, 0.0
    %v684 = vmax.f32 %v216, 0.0
    %v685 = vmax.f32 %v217, 0.0
    %v686 = vmax.f32 %v218, 0.0
    %v687 = vmax.f32 %v219, 0.0
    %v688 = vmax.f32 %v220, 0.0
    %v689 = vmax.f32 %v221, 0.0
    %v690 = vmax.f32 %v222, 0.0
    %v691 = vmax.f32 %v223, 0.0
    %v692 = vmax.f32 %v224, 0.0
    %v693 = vmax.f32 %v225, 0.0
    %v694 = vmax.f32 %v226, 0.0
    %v695 = vmax.f32 %v227, 0.0
    %v696 = vmax.f32 %v228, 0.0
    %v697 = vmax.f32 %v229, 0.0
    %v698 = vmax.f32 %v230, 0.0
    %v699 = vmax.f32 %v231, 0.0
    %v700 = vmax.f32 %v232, 0.0
    %v701 = vmax.f32 %v233, 0.0
    %v702 = vmax.f32 %v234, 0.0
    %v703 = vmax.f32 %v235, 0.0
    %v704 = vmax.f32 %v236, 0.0
    %v705 = vmax.f32 %v237, 0.0
    %v706 = vmax.f32 %v238, 0.0
    %v707 = vmax.f32 %v239, 0.0
    %v708 = vmax.f32 %v240, 0.0
    %v709 = vmax.f32 %v241, 0.0
    %v710 = vmax.f32 %v242, 0.0
    %v711 = vmax.f32 %v243, 0.0
    %v712 = vmax.f32 %v244, 0.0
    %v713 = vmax.f32 %v245, 0.0
    %v714 = vmax.f32 %v246, 0.0
    %v715 = vmax.f32 %v247, 0.0
    %v716 = vmax.f32 %v248, 0.0
    %v717 = vmax.f32 %v249, 0.0
    %v718 = vmax.f32 %v250, 0.0
    %v719 = vmax.f32 %v251, 0.0
    %v720 = vmax.f32 %v252, 0.0
    %v721 = vmax.f32 %v253, 0.0
    %v722 = vmax.f32 %v254, 0.0
    %v723 = vmax.f32 %v255, 0.0
    %v724 = vmax.f32 %v256, 0.0
    %v725 = vmax.f32 %v257, 0.0
    %v726 = vmax.f32 %v258, 0.0
    %v727 = vmax.f32 %v259, 0.0
    %v728 = vmax.f32 %v260, 0.0
    %v729 = vmax.f32 %v261, 0.0
    %v730 = vmax.f32 %v262, 0.0
    %v731 = vmax.f32 %v263, 0.0
    %v732 = vmax.f32 %v264, 0.0
    %v733 = vmax.f32 %v265, 0.0
    %v734 = vmax.f32 %v266, 0.0
    %v735 = vmax.f32 %v267, 0.0
    %v736 = vmax.f32 %v268, 0.0
    %v737 = vmax.f32 %v269, 0.0
    %v738 = vmax.f32 %v270, 0.0
    %v739 = vmax.f32 %v271, 0.0
    %v740 = vmax.f32 %v272, 0.0
    %v741 = vmax.f32 %v273, 0.0
    %v742 = vmax.f32 %v274, 0.0
    %v743 = vmax.f32 %v275, 0.0
    %v744 = vmax.f32 %v276, 0.0
    %v745 = vmax.f32 %v277, 0.0
    %v746 = vmax.f32 %v278, 0.0
    %v747 = vmax.f32 %v279, 0.0
    %v748 = vmax.f32 %v280, 0.0
    %v749 = vmax.f32 %v281, 0.0
    %v750 = vmax.f32 %v282, 0.0
    %v751 = vmax.f32 %v283, 0.0
    %v752 = vmax.f32 %v284, 0.0
    %v753 = vmax.f32 %v285, 0.0
    %v754 = vmax.f32 %v286, 0.0
    %v755 = vmax.f32 %v287, 0.0
    %v756 = vmax.f32 %v288, 0.0
    %v757 = vmax.f32 %v289, 0.0
    %v758 = vmax.f32 %v290, 0.0
    %v759 = vmax.f32 %v291, 0.0
    %v760 = vmax.f32 %v292, 0.0
    %v761 = vmax.f32 %v293, 0.0
    %v762 = vmax.f32 %v294, 0.0
    %v763 = vmax.f32 %v295, 0.0
    %v764 = vmax.f32 %v296, 0.0
    %v765 = vmax.f32 %v297, 0.0
    %v766 = vmax.f32 %v298, 0.0
    %v767 = vmax.f32 %v299, 0.0
    %v768 = vmax.f32 %v300, 0.0
    %v769 = vmax.f32 %v301, 0.0
    %v770 = vmax.f32 %v302, 0.0
    %v771 = vmax.f32 %v303, 0.0
    %v772 = vmax.f32 %v304, 0.0
    %v773 = vmax.f32 %v305, 0.0
    %v774 = vmax.f32 %v306, 0.0
    %v775 = vmax.f32 %v307, 0.0
    %v776 = vmax.f32 %v308, 0.0
    %v777 = vmax.f32 %v309, 0.0
    %v778 = vmax.f32 %v310, 0.0
    %v779 = vmax.f32 %v311, 0.0
    %v780 = vmax.f32 %v312, 0.0
    %v781 = vmax.f32 %v313, 0.0
    %v782 = vmax.f32 %v314, 0.0
    %v783 = vmax.f32 %v315, 0.0
    %v784 = vmax.f32 %v316, 0.0
    %v785 = vmax.f32 %v317, 0.0
    %v786 = vmax.f32 %v318, 0.0
    %v787 = vmax.f32 %v319, 0.0
    %v788 = vmax.f32 %v320, 0.0
    %v789 = vmax.f32 %v321, 0.0
    %v790 = vmax.f32 %v322, 0.0
    %v791 = vmax.f32 %v323, 0.0
    %v792 = vmax.f32 %v324, 0.0
    %v793 = vmax.f32 %v325, 0.0
    %v794 = vmax.f32 %v326, 0.0
    %v795 = vmax.f32 %v327, 0.0
    %v796 = vmax.f32 %v328, 0.0
    %v797 = vmax.f32 %v329, 0.0
    %v798 = vmax.f32 %v330, 0.0
    %v799 = vmax.f32 %v331, 0.0
    %v800 = vmax.f32 %v332, 0.0
    %v801 = vmax.f32 %v333, 0.0
    %v802 = vmax.f32 %v334, 0.0
    %v803 = vmax.f32 %v335, 0.0
    %v804 = vmax.f32 %v336, 0.0
    %v805 = vmax.f32 %v337, 0.0
    %v806 = vmax.f32 %v338, 0.0
    %v807 = vmax.f32 %v339, 0.0
    %v808 = vmax.f32 %v340, 0.0
    %v809 = vmax.f32 %v341, 0.0
    %v810 = vmax.f32 %v342, 0.0
    %v811 = vmax.f32 %v343, 0.0
    %v812 = vmax.f32 %v344, 0.0
    %v813 = vmax.f32 %v345, 0.0
    %v814 = vmax.f32 %v346, 0.0
    %v815 = vmax.f32 %v347, 0.0
    %v816 = vmax.f32 %v348, 0.0
    %v817 = vmax.f32 %v349, 0.0
    %v818 = vmax.f32 %v350, 0.0
    %v819 = vmax.f32 %v351, 0.0
    %v820 = vmax.f32 %v352, 0.0
    %v821 = vmax.f32 %v353, 0.0
    %v822 = vmax.f32 %v354, 0.0
    %v823 = vmax.f32 %v355, 0.0
    %v824 = vmax.f32 %v356, 0.0
    %v825 = vmax.f32 %v357, 0.0
    %v826 = vmax.f32 %v358, 0.0
    %v827 = vmax.f32 %v359, 0.0
    %v828 = vmax.f32 %v360, 0.0
    %v829 = vmax.f32 %v361, 0.0
    %v830 = vmax.f32 %v362, 0.0
    %v831 = vmax.f32 %v363, 0.0
    %v832 = vmax.f32 %v364, 0.0
    %v833 = vmax.f32 %v365, 0.0
    %v834 = vmax.f32 %v366, 0.0
    %v835 = vmax.f32 %v367, 0.0
    %v836 = vmax.f32 %v368, 0.0
    %v837 = vmax.f32 %v369, 0.0
    %v838 = vmax.f32 %v370, 0.0
    %v839 = vmax.f32 %v371, 0.0
    %v840 = vmax.f32 %v372, 0.0
    %v841 = vmax.f32 %v373, 0.0
    %v842 = vmax.f32 %v374, 0.0
    %v843 = vmax.f32 %v375, 0.0
    %v844 = vmax.f32 %v376, 0.0
    %v845 = vmax.f32 %v377, 0.0
    %v846 = vmax.f32 %v378, 0.0
    %v847 = vmax.f32 %v379, 0.0
    %v848 = vmax.f32 %v380, 0.0
    %v849 = vmax.f32 %v381, 0.0
    %v850 = vmax.f32 %v382, 0.0
    %v851 = vmax.f32 %v383, 0.0
    %v852 = vmax.f32 %v384, 0.0
    %v853 = vmax.f32 %v385, 0.0
    %v854 = vmax.f32 %v386, 0.0
    %v855 = vmax.f32 %v387, 0.0
    %v856 = vmax.f32 %v388, 0.0
    %v857 = vmax.f32 %v389, 0.0
    %v858 = vmax.f32 %v390, 0.0
    %v859 = vmax.f32 %v391, 0.0
    %v860 = vmax.f32 %v392, 0.0
    %v861 = vmax.f32 %v393, 0.0
    %v862 = vmax.f32 %v394, 0.0
    %v863 = vmax.f32 %v395, 0.0
    %v864 = vmax.f32 %v396, 0.0
    %v865 = vmax.f32 %v397, 0.0
    %v866 = vmax.f32 %v398, 0.0
    %v867 = vmax.f32 %v399, 0.0
    %v868 = vmax.f32 %v400, 0.0
    %v869 = vmax.f32 %v401, 0.0
    %v870 = vmax.f32 %v402, 0.0
    %v871 = vmax.f32 %v403, 0.0
    %v872 = vmax.f32 %v404, 0.0
    %v873 = vmax.f32 %v405, 0.0
    %v874 = vmax.f32 %v406, 0.0
    %v875 = vmax.f32 %v407, 0.0
    %v876 = vmax.f32 %v408, 0.0
    %v877 = vmax.f32 %v409, 0.0
    %v878 = vmax.f32 %v410, 0.0
    %v879 = vmax.f32 %v411, 0.0
    %v880 = vmax.f32 %v412, 0.0
    %v881 = vmax.f32 %v413, 0.0
    %v882 = vmax.f32 %v414, 0.0
    %v883 = vmax.f32 %v415, 0.0
    %v884 = vmax.f32 %v416, 0.0
    %v885 = vmax.f32 %v417, 0.0
    %v886 = vmax.f32 %v418, 0.0
    %v887 = vmax.f32 %v419, 0.0
    %v888 = vmax.f32 %v420, 0.0
    %v889 = vmax.f32 %v421, 0.0
    %v890 = vmax.f32 %v422, 0.0
    %v891 = vmax.f32 %v423, 0.0
    %v892 = vmax.f32 %v424, 0.0
    %v893 = vmax.f32 %v425, 0.0
    %v894 = vmax.f32 %v426, 0.0
    %v895 = vmax.f32 %v427, 0.0
    %v896 = vmax.f32 %v428, 0.0
    %v897 = vmax.f32 %v429, 0.0
    %v898 = vmax.f32 %v430, 0.0
    %v899 = vmax.f32 %v431, 0.0
    %v900 = vmax.f32 %v432, 0.0
    %v901 = vmax.f32 %v433, 0.0
    %v902 = vmax.f32 %v434, 0.0
    %v903 = vmax.f32 %v435, 0.0
    %v904 = vmax.f32 %v436, 0.0
    %v905 = vmax.f32 %v437, 0.0
    %v906 = vmax.f32 %v438, 0.0
    %v907 = vmax.f32 %v439, 0.0
    %v908 = vmax.f32 %v440, 0.0
    %v909 = vmax.f32 %v441, 0.0
    %v910 = vmax.f32 %v442, 0.0
    %v911 = vmax.f32 %v443, 0.0
    %v912 = vmax.f32 %v444, 0.0
    %v913 = vmax.f32 %v445, 0.0
    %v914 = vmax.f32 %v446, 0.0
    %v915 = vmax.f32 %v447, 0.0
    %v916 = vmax.f32 %v448, 0.0
    %v917 = vmax.f32 %v449, 0.0
    %v918 = vmax.f32 %v450, 0.0
    %v919 = vmax.f32 %v451, 0.0
    %v920 = vmax.f32 %v452, 0.0
    %v921 = vmax.f32 %v453, 0.0
    %v922 = vmax.f32 %v454, 0.0
    %v923 = vmax.f32 %v455, 0.0
    %v924 = vmax.f32 %v456, 0.0
    %v925 = vmax.f32 %v457, 0.0
    %v926 = vmax.f32 %v458, 0.0
    %v927 = vmax.f32 %v459, 0.0
    %v928 = vmax.f32 %v460, 0.0
    %v929 = vmax.f32 %v461, 0.0
    %v930 = vmax.f32 %v462, 0.0
    %v931 = vmax.f32 %v463, 0.0
    %v932 = vmax.f32 %v464, 0.0
    %v933 = vmax.f32 %v465, 0.0
    %v934 = vmax.f32 %v466, 0.0
    %v935 = vmax.f32 %v467, 0.0
    %v936 = vmax.f32 %v468, 0.0
    %v937 = vmax.f32 %v469, 0.0
    %v938 = vmax.f32 %v470, 0.0
    %v939 = vmax.f32 %v471, 0.0
    %v940 = vmax.f32 %v472, 0.0
    %v941 = vmax.f32 %v473, 0.0
    %v942 = vmax.f32 %v474, 0.0
    %v943 = vmax.f32 %v475, 0.0
    %v944 = vmax.f32 %v476, 0.0
    %v945 = vmax.f32 %v477, 0.0
    %v946 = vmax.f32 %v478, 0.0
    %v947 = vmax.f32 %v479, 0.0
    %v948 = vmax.f32 %v480, 0.0
    %v949 = vpack.c.bf16 %v483, %v481
    %v950 = vpack.c.bf16 %v484, %v482
    %v951 = vpack.c.bf16 %v487, %v485
    %v952 = vpack.c.bf16 %v488, %v486
    %v953 = vpack.c.bf16 %v491, %v489
    %v954 = vpack.c.bf16 %v492, %v490
    %v955 = vpack.c.bf16 %v495, %v493
    %v956 = vpack.c.bf16 %v496, %v494
    %v957 = vpack.c.bf16 %v499, %v497
    %v958 = vpack.c.bf16 %v500, %v498
    %v959 = vpack.c.bf16 %v503, %v501
    %v960 = vpack.c.bf16 %v504, %v502
    %v961 = vpack.c.bf16 %v507, %v505
    %v962 = vpack.c.bf16 %v508, %v506
    %v963 = vpack.c.bf16 %v511, %v509
    %v964 = vpack.c.bf16 %v512, %v510
    %v965 = vpack.c.bf16 %v515, %v513
    %v966 = vpack.c.bf16 %v516, %v514
    %v967 = vpack.c.bf16 %v519, %v517
    %v968 = vpack.c.bf16 %v520, %v518
    %v969 = vpack.c.bf16 %v523, %v521
    %v970 = vpack.c.bf16 %v524, %v522
    %v971 = vpack.c.bf16 %v527, %v525
    %v972 = vpack.c.bf16 %v528, %v526
    %v973 = vpack.c.bf16 %v531, %v529
    %v974 = vpack.c.bf16 %v532, %v530
    %v975 = vpack.c.bf16 %v535, %v533
    %v976 = vpack.c.bf16 %v536, %v534
    %v977 = vpack.c.bf16 %v539, %v537
    %v978 = vpack.c.bf16 %v540, %v538
    %v979 = vpack.c.bf16 %v543, %v541
    %v980 = vpack.c.bf16 %v544, %v542
    %v981 = vpack.c.bf16 %v547, %v545
    %v982 = vpack.c.bf16 %v548, %v546
    %v983 = vpack.c.bf16 %v551, %v549
    %v984 = vpack.c.bf16 %v552, %v550
    %v985 = vpack.c.bf16 %v555, %v553
    %v986 = vpack.c.bf16 %v556, %v554
    %v987 = vpack.c.bf16 %v559, %v557
    %v988 = vpack.c.bf16 %v560, %v558
    %v989 = vpack.c.bf16 %v563, %v561
    %v990 = vpack.c.bf16 %v564, %v562
    %v991 = vpack.c.bf16 %v567, %v565
    %v992 = vpack.c.bf16 %v568, %v566
    %v993 = vpack.c.bf16 %v571, %v569
    %v994 = vpack.c.bf16 %v572, %v570
    %v995 = vpack.c.bf16 %v575, %v573
    %v996 = vpack.c.bf16 %v576, %v574
    %v997 = vpack.c.bf16 %v579, %v577
    %v998 = vpack.c.bf16 %v580, %v578
    %v999 = vpack.c.bf16 %v583, %v581
    %v1000 = vpack.c.bf16 %v584, %v582
    %v1001 = vpack.c.bf16 %v587, %v585
    %v1002 = vpack.c.bf16 %v588, %v586
    %v1003 = vpack.c.bf16 %v591, %v589
    %v1004 = vpack.c.bf16 %v592, %v590
    %v1005 = vpack.c.bf16 %v595, %v593
    %v1006 = vpack.c.bf16 %v596, %v594
    %v1007 = vpack.c.bf16 %v599, %v597
    %v1008 = vpack.c.bf16 %v600, %v598
    %v1009 = vpack.c.bf16 %v603, %v601
    %v1010 = vpack.c.bf16 %v604, %v602
    %v1011 = vpack.c.bf16 %v607, %v605
    %v1012 = vpack.c.bf16 %v608, %v606
    %v1013 = vpack.c.bf16 %v611, %v609
    %v1014 = vpack.c.bf16 %v612, %v610
    %v1015 = vpack.c.bf16 %v615, %v613
    %v1016 = vpack.c.bf16 %v616, %v614
    %v1017 = vpack.c.bf16 %v619, %v617
    %v1018 = vpack.c.bf16 %v620, %v618
    %v1019 = vpack.c.bf16 %v623, %v621
    %v1020 = vpack.c.bf16 %v624, %v622
    %v1021 = vpack.c.bf16 %v627, %v625
    %v1022 = vpack.c.bf16 %v628, %v626
    %v1023 = vpack.c.bf16 %v631, %v629
    %v1024 = vpack.c.bf16 %v632, %v630
    %v1025 = vpack.c.bf16 %v635, %v633
    %v1026 = vpack.c.bf16 %v636, %v634
    %v1027 = vpack.c.bf16 %v639, %v637
    %v1028 = vpack.c.bf16 %v640, %v638
    %v1029 = vpack.c.bf16 %v643, %v641
    %v1030 = vpack.c.bf16 %v644, %v642
    %v1031 = vpack.c.bf16 %v647, %v645
    %v1032 = vpack.c.bf16 %v648, %v646
    %v1033 = vpack.c.bf16 %v651, %v649
    %v1034 = vpack.c.bf16 %v652, %v650
    %v1035 = vpack.c.bf16 %v655, %v653
    %v1036 = vpack.c.bf16 %v656, %v654
    %v1037 = vpack.c.bf16 %v659, %v657
    %v1038 = vpack.c.bf16 %v660, %v658
    %v1039 = vpack.c.bf16 %v663, %v661
    %v1040 = vpack.c.bf16 %v664, %v662
    %v1041 = vpack.c.bf16 %v667, %v665
    %v1042 = vpack.c.bf16 %v668, %v666
    %v1043 = vpack.c.bf16 %v671, %v669
    %v1044 = vpack.c.bf16 %v672, %v670
    %v1045 = vpack.c.bf16 %v675, %v673
    %v1046 = vpack.c.bf16 %v676, %v674
    %v1047 = vpack.c.bf16 %v679, %v677
    %v1048 = vpack.c.bf16 %v680, %v678
    %v1049 = vpack.c.bf16 %v683, %v681
    %v1050 = vpack.c.bf16 %v684, %v682
    %v1051 = vpack.c.bf16 %v687, %v685
    %v1052 = vpack.c.bf16 %v688, %v686
    %v1053 = vpack.c.bf16 %v691, %v689
    %v1054 = vpack.c.bf16 %v692, %v690
    %v1055 = vpack.c.bf16 %v695, %v693
    %v1056 = vpack.c.bf16 %v696, %v694
    %v1057 = vpack.c.bf16 %v699, %v697
    %v1058 = vpack.c.bf16 %v700, %v698
    %v1059 = vpack.c.bf16 %v703, %v701
    %v1060 = vpack.c.bf16 %v704, %v702
    %v1061 = vpack.c.bf16 %v707, %v705
    %v1062 = vpack.c.bf16 %v708, %v706
    %v1063 = vpack.c.bf16 %v711, %v709
    %v1064 = vpack.c.bf16 %v712, %v710
    %v1065 = vpack.c.bf16 %v715, %v713
    %v1066 = vpack.c.bf16 %v716, %v714
    %v1067 = vpack.c.bf16 %v719, %v717
    %v1068 = vpack.c.bf16 %v720, %v718
    %v1069 = vpack.c.bf16 %v723, %v721
    %v1070 = vpack.c.bf16 %v724, %v722
    %v1071 = vpack.c.bf16 %v727, %v725
    %v1072 = vpack.c.bf16 %v728, %v726
    %v1073 = vpack.c.bf16 %v731, %v729
    %v1074 = vpack.c.bf16 %v732, %v730
    %v1075 = vpack.c.bf16 %v735, %v733
    %v1076 = vpack.c.bf16 %v736, %v734
    %v1077 = vpack.c.bf16 %v739, %v737
    %v1078 = vpack.c.bf16 %v740, %v738
    %v1079 = vpack.c.bf16 %v743, %v741
    %v1080 = vpack.c.bf16 %v744, %v742
    %v1081 = vpack.c.bf16 %v747, %v745
    %v1082 = vpack.c.bf16 %v748, %v746
    %v1083 = vpack.c.bf16 %v751, %v749
    %v1084 = vpack.c.bf16 %v752, %v750
    %v1085 = vpack.c.bf16 %v755, %v753
    %v1086 = vpack.c.bf16 %v756, %v754
    %v1087 = vpack.c.bf16 %v759, %v757
    %v1088 = vpack.c.bf16 %v760, %v758
    %v1089 = vpack.c.bf16 %v763, %v761
    %v1090 = vpack.c.bf16 %v764, %v762
    %v1091 = vpack.c.bf16 %v767, %v765
    %v1092 = vpack.c.bf16 %v768, %v766
    %v1093 = vpack.c.bf16 %v771, %v769
    %v1094 = vpack.c.bf16 %v772, %v770
    %v1095 = vpack.c.bf16 %v775, %v773
    %v1096 = vpack.c.bf16 %v776, %v774
    %v1097 = vpack.c.bf16 %v779, %v777
    %v1098 = vpack.c.bf16 %v780, %v778
    %v1099 = vpack.c.bf16 %v783, %v781
    %v1100 = vpack.c.bf16 %v784, %v782
    %v1101 = vpack.c.bf16 %v787, %v785
    %v1102 = vpack.c.bf16 %v788, %v786
    %v1103 = vpack.c.bf16 %v791, %v789
    %v1104 = vpack.c.bf16 %v792, %v790
    %v1105 = vpack.c.bf16 %v795, %v793
    %v1106 = vpack.c.bf16 %v796, %v794
    %v1107 = vpack.c.bf16 %v799, %v797
    %v1108 = vpack.c.bf16 %v800, %v798
    %v1109 = vpack.c.bf16 %v803, %v801
    %v1110 = vpack.c.bf16 %v804, %v802
    %v1111 = vpack.c.bf16 %v807, %v805
    %v1112 = vpack.c.bf16 %v808, %v806
    %v1113 = vpack.c.bf16 %v811, %v809
    %v1114 = vpack.c.bf16 %v812, %v810
    %v1115 = vpack.c.bf16 %v815, %v813
    %v1116 = vpack.c.bf16 %v816, %v814
    %v1117 = vpack.c.bf16 %v819, %v817
    %v1118 = vpack.c.bf16 %v820, %v818
    %v1119 = vpack.c.bf16 %v823, %v821
    %v1120 = vpack.c.bf16 %v824, %v822
    %v1121 = vpack.c.bf16 %v827, %v825
    %v1122 = vpack.c.bf16 %v828, %v826
    %v1123 = vpack.c.bf16 %v831, %v829
    %v1124 = vpack.c.bf16 %v832, %v830
    %v1125 = vpack.c.bf16 %v835, %v833
    %v1126 = vpack.c.bf16 %v836, %v834
    %v1127 = vpack.c.bf16 %v839, %v837
    %v1128 = vpack.c.bf16 %v840, %v838
    %v1129 = vpack.c.bf16 %v843, %v841
    %v1130 = vpack.c.bf16 %v844, %v842
    %v1131 = vpack.c.bf16 %v847, %v845
    %v1132 = vpack.c.bf16 %v848, %v846
    %v1133 = vpack.c.bf16 %v851, %v849
    %v1134 = vpack.c.bf16 %v852, %v850
    %v1135 = vpack.c.bf16 %v855, %v853
    %v1136 = vpack.c.bf16 %v856, %v854
    %v1137 = vpack.c.bf16 %v859, %v857
    %v1138 = vpack.c.bf16 %v860, %v858
    %v1139 = vpack.c.bf16 %v863, %v861
    %v1140 = vpack.c.bf16 %v864, %v862
    %v1141 = vpack.c.bf16 %v867, %v865
    %v1142 = vpack.c.bf16 %v868, %v866
    %v1143 = vpack.c.bf16 %v871, %v869
    %v1144 = vpack.c.bf16 %v872, %v870
    %v1145 = vpack.c.bf16 %v875, %v873
    %v1146 = vpack.c.bf16 %v876, %v874
    %v1147 = vpack.c.bf16 %v879, %v877
    %v1148 = vpack.c.bf16 %v880, %v878
    %v1149 = vpack.c.bf16 %v883, %v881
    %v1150 = vpack.c.bf16 %v884, %v882
    %v1151 = vpack.c.bf16 %v887, %v885
    %v1152 = vpack.c.bf16 %v888, %v886
    %v1153 = vpack.c.bf16 %v891, %v889
    %v1154 = vpack.c.bf16 %v892, %v890
    %v1155 = vpack.c.bf16 %v895, %v893
    %v1156 = vpack.c.bf16 %v896, %v894
    %v1157 = vpack.c.bf16 %v899, %v897
    %v1158 = vpack.c.bf16 %v900, %v898
    %v1159 = vpack.c.bf16 %v903, %v901
    %v1160 = vpack.c.bf16 %v904, %v902
    %v1161 = vpack.c.bf16 %v907, %v905
    %v1162 = vpack.c.bf16 %v908, %v906
    %v1163 = vpack.c.bf16 %v911, %v909
    %v1164 = vpack.c.bf16 %v912, %v910
    %v1165 = vpack.c.bf16 %v915, %v913
    %v1166 = vpack.c.bf16 %v916, %v914
    %v1167 = vpack.c.bf16 %v919, %v917
    %v1168 = vpack.c.bf16 %v920, %v918
    %v1169 = vpack.c.bf16 %v923, %v921
    %v1170 = vpack.c.bf16 %v924, %v922
    %v1171 = vpack.c.bf16 %v927, %v925
    %v1172 = vpack.c.bf16 %v928, %v926
    %v1173 = vpack.c.bf16 %v931, %v929
    %v1174 = vpack.c.bf16 %v932, %v930
    %v1175 = vpack.c.bf16 %v935, %v933
    %v1176 = vpack.c.bf16 %v936, %v934
    %v1177 = vpack.c.bf16 %v939, %v937
    %v1178 = vpack.c.bf16 %v940, %v938
    %v1179 = vpack.c.bf16 %v943, %v941
    %v1180 = vpack.c.bf16 %v944, %v942
    %v1181 = vpack.c.bf16 %v947, %v945
    %v1182 = vpack.c.bf16 %v948, %v946
    %v1183 = vld [vmem:[%s0] sm:$0xff]
    %v1184 = vld [vmem:[%s0 + $0x8] sm:$0xff]
    %v1185 = vld [vmem:[%s0 + $0x10] sm:$0xff]
    %v1186 = vld [vmem:[%s0 + $0x18] sm:$0xff]
    %v1187 = vld [vmem:[%s0 + $0x20] sm:$0xff]
    %v1188 = vld [vmem:[%s0 + $0x28] sm:$0xff]
    %v1189 = vld [vmem:[%s0 + $0x30] sm:$0xff]
    %v1190 = vld [vmem:[%s0 + $0x38] sm:$0xf]
    %v1191 = vld [vmem:[%s0 + $0x3c] sm:$0xff]
    %v1192 = vld [vmem:[%s0 + $0x44] sm:$0xff]
    %v1193 = vld [vmem:[%s0 + $0x4c] sm:$0xff]
    %v1194 = vld [vmem:[%s0 + $0x54] sm:$0xff]
    %v1195 = vld [vmem:[%s0 + $0x5c] sm:$0xff]
    %v1196 = vld [vmem:[%s0 + $0x64] sm:$0xff]
    %v1197 = vld [vmem:[%s0 + $0x6c] sm:$0xff]
    %v1198 = vld [vmem:[%s0 + $0x74] sm:$0xf]
    %v1199 = vld [vmem:[%s0 + $0x78] sm:$0xff]
    %v1200 = vld [vmem:[%s0 + $0x80] sm:$0xff]
    %v1201 = vld [vmem:[%s0 + $0x88] sm:$0xff]
    %v1202 = vld [vmem:[%s0 + $0x90] sm:$0xff]
    %v1203 = vld [vmem:[%s0 + $0x98] sm:$0xff]
    %v1204 = vld [vmem:[%s0 + $0xa0] sm:$0xff]
    %v1205 = vld [vmem:[%s0 + $0xa8] sm:$0xff]
    %v1206 = vld [vmem:[%s0 + $0xb0] sm:$0xf]
    %v1207 = vld [vmem:[%s0 + $0xb4] sm:$0xff]
    %v1208 = vld [vmem:[%s0 + $0xbc] sm:$0xff]
    %v1209 = vld [vmem:[%s0 + $0xc4] sm:$0xff]
    %v1210 = vld [vmem:[%s0 + $0xcc] sm:$0xff]
    %v1211 = vld [vmem:[%s0 + $0xd4] sm:$0xff]
    %v1212 = vld [vmem:[%s0 + $0xdc] sm:$0xff]
    %v1213 = vld [vmem:[%s0 + $0xe4] sm:$0xff]
    %v1214 = vld [vmem:[%s0 + $0xec] sm:$0xf]
    %v1215 = vld [vmem:[%s0 + $0xf0] sm:$0xff]
    %v1216 = vld [vmem:[%s0 + $0xf8] sm:$0xff]
    %v1217 = vld [vmem:[%s0 + $0x100] sm:$0xff]
    %v1218 = vld [vmem:[%s0 + $0x108] sm:$0xff]
    %v1219 = vld [vmem:[%s0 + $0x110] sm:$0xff]
    %v1220 = vld [vmem:[%s0 + $0x118] sm:$0xff]
    %v1221 = vld [vmem:[%s0 + $0x120] sm:$0xff]
    %v1222 = vld [vmem:[%s0 + $0x128] sm:$0xf]
    %v1223 = vld [vmem:[%s0 + $0x12c] sm:$0xff]
    %v1224 = vld [vmem:[%s0 + $0x134] sm:$0xff]
    %v1225 = vld [vmem:[%s0 + $0x13c] sm:$0xff]
    %v1226 = vld [vmem:[%s0 + $0x144] sm:$0xff]
    %v1227 = vld [vmem:[%s0 + $0x14c] sm:$0xff]
    %v1228 = vld [vmem:[%s0 + $0x154] sm:$0xff]
    %v1229 = vld [vmem:[%s0 + $0x15c] sm:$0xff]
    %v1230 = vld [vmem:[%s0 + $0x164] sm:$0xf]
    %v1231 = vld [vmem:[%s0 + $0x168] sm:$0xff]
    %v1232 = vld [vmem:[%s0 + $0x170] sm:$0xff]
    %v1233 = vld [vmem:[%s0 + $0x178] sm:$0xff]
    %v1234 = vld [vmem:[%s0 + $0x180] sm:$0xff]
    %v1235 = vld [vmem:[%s0 + $0x188] sm:$0xff]
    %v1236 = vld [vmem:[%s0 + $0x190] sm:$0xff]
    %v1237 = vld [vmem:[%s0 + $0x198] sm:$0xff]
    %v1238 = vld [vmem:[%s0 + $0x1a0] sm:$0xf]
    %v1239 = vld [vmem:[%s0 + $0x1a4] sm:$0xff]
    %v1240 = vld [vmem:[%s0 + $0x1ac] sm:$0xff]
    %v1241 = vld [vmem:[%s0 + $0x1b4] sm:$0xff]
    %v1242 = vld [vmem:[%s0 + $0x1bc] sm:$0xff]
    %v1243 = vld [vmem:[%s0 + $0x1c4] sm:$0xff]
    %v1244 = vld [vmem:[%s0 + $0x1cc] sm:$0xff]
    %v1245 = vld [vmem:[%s0 + $0x1d4] sm:$0xff]
    %v1246 = vld [vmem:[%s0 + $0x1dc] sm:$0xf]
    %v1247 = vld [vmem:[%s0 + $0x1e0] sm:$0xff]
    %v1248 = vld [vmem:[%s0 + $0x1e8] sm:$0xff]
    %v1249 = vld [vmem:[%s0 + $0x1f0] sm:$0xff]
    %v1250 = vld [vmem:[%s0 + $0x1f8] sm:$0xff]
    %v1251 = vld [vmem:[%s0 + $0x200] sm:$0xff]
    %v1252 = vld [vmem:[%s0 + $0x208] sm:$0xff]
    %v1253 = vld [vmem:[%s0 + $0x210] sm:$0xff]
    %v1254 = vld [vmem:[%s0 + $0x218] sm:$0xf]
    %v1255 = vld [vmem:[%s0 + $0x21c] sm:$0xff]
    %v1256 = vld [vmem:[%s0 + $0x224] sm:$0xff]
    %v1257 = vld [vmem:[%s0 + $0x22c] sm:$0xff]
    %v1258 = vld [vmem:[%s0 + $0x234] sm:$0xff]
    %v1259 = vld [vmem:[%s0 + $0x23c] sm:$0xff]
    %v1260 = vld [vmem:[%s0 + $0x244] sm:$0xff]
    %v1261 = vld [vmem:[%s0 + $0x24c] sm:$0xff]
    %v1262 = vld [vmem:[%s0 + $0x254] sm:$0xf]
    %v1263 = vld [vmem:[%s0 + $0x258] sm:$0xff]
    %v1264 = vld [vmem:[%s0 + $0x260] sm:$0xff]
    %v1265 = vld [vmem:[%s0 + $0x268] sm:$0xff]
    %v1266 = vld [vmem:[%s0 + $0x270] sm:$0xff]
    %v1267 = vld [vmem:[%s0 + $0x278] sm:$0xff]
    %v1268 = vld [vmem:[%s0 + $0x280] sm:$0xff]
    %v1269 = vld [vmem:[%s0 + $0x288] sm:$0xff]
    %v1270 = vld [vmem:[%s0 + $0x290] sm:$0xf]
    %v1271 = vld [vmem:[%s0 + $0x294] sm:$0xff]
    %v1272 = vld [vmem:[%s0 + $0x29c] sm:$0xff]
    %v1273 = vld [vmem:[%s0 + $0x2a4] sm:$0xff]
    %v1274 = vld [vmem:[%s0 + $0x2ac] sm:$0xff]
    %v1275 = vld [vmem:[%s0 + $0x2b4] sm:$0xff]
    %v1276 = vld [vmem:[%s0 + $0x2bc] sm:$0xff]
    %v1277 = vld [vmem:[%s0 + $0x2c4] sm:$0xff]
    %v1278 = vld [vmem:[%s0 + $0x2cc] sm:$0xf]
    %v1279 = vld [vmem:[%s0 + $0x2d0] sm:$0xff]
    %v1280 = vld [vmem:[%s0 + $0x2d8] sm:$0xff]
    %v1281 = vld [vmem:[%s0 + $0x2e0] sm:$0xff]
    %v1282 = vld [vmem:[%s0 + $0x2e8] sm:$0xff]
    %v1283 = vld [vmem:[%s0 + $0x2f0] sm:$0xff]
    %v1284 = vld [vmem:[%s0 + $0x2f8] sm:$0xff]
    %v1285 = vld [vmem:[%s0 + $0x300] sm:$0xff]
    %v1286 = vld [vmem:[%s0 + $0x308] sm:$0xf]
    %v1287 = vld [vmem:[%s0 + $0x30c] sm:$0xff]
    %v1288 = vld [vmem:[%s0 + $0x314] sm:$0xff]
    %v1289 = vld [vmem:[%s0 + $0x31c] sm:$0xff]
    %v1290 = vld [vmem:[%s0 + $0x324] sm:$0xff]
    %v1291 = vld [vmem:[%s0 + $0x32c] sm:$0xff]
    %v1292 = vld [vmem:[%s0 + $0x334] sm:$0xff]
    %v1293 = vld [vmem:[%s0 + $0x33c] sm:$0xff]
    %v1294 = vld [vmem:[%s0 + $0x344] sm:$0xf]
    %v1295 = vld [vmem:[%s0 + $0x348] sm:$0xff]
    %v1296 = vld [vmem:[%s0 + $0x350] sm:$0xff]
    %v1297 = vld [vmem:[%s0 + $0x358] sm:$0xff]
    %v1298 = vld [vmem:[%s0 + $0x360] sm:$0xff]
    %v1299 = vld [vmem:[%s0 + $0x368] sm:$0xff]
    %v1300 = vld [vmem:[%s0 + $0x370] sm:$0xff]
    %v1301 = vld [vmem:[%s0 + $0x378] sm:$0xff]
    %v1302 = vld [vmem:[%s0 + $0x380] sm:$0xf]
    %v1303 = vld [vmem:[%s0 + $0x384] sm:$0xff]
    %v1304 = vld [vmem:[%s0 + $0x38c] sm:$0xff]
    %v1305 = vld [vmem:[%s0 + $0x394] sm:$0xff]
    %v1306 = vld [vmem:[%s0 + $0x39c] sm:$0xff]
    %v1307 = vld [vmem:[%s0 + $0x3a4] sm:$0xff]
    %v1308 = vld [vmem:[%s0 + $0x3ac] sm:$0xff]
    %v1309 = vld [vmem:[%s0 + $0x3b4] sm:$0xff]
    %v1310 = vld [vmem:[%s0 + $0x3bc] sm:$0xf]
    %v1311 = vld [vmem:[%s0 + $0x3c0] sm:$0xff]
    %v1312 = vld [vmem:[%s0 + $0x3c8] sm:$0xff]
    %v1313 = vld [vmem:[%s0 + $0x3d0] sm:$0xff]
    %v1314 = vld [vmem:[%s0 + $0x3d8] sm:$0xff]
    %v1315 = vld [vmem:[%s0 + $0x3e0] sm:$0xff]
    %v1316 = vld [vmem:[%s0 + $0x3e8] sm:$0xff]
    %v1317 = vld [vmem:[%s0 + $0x3f0] sm:$0xff]
    %v1318 = vld [vmem:[%s0 + $0x3f8] sm:$0xf]
    %v1319 = vld [vmem:[%s0 + $0x3fc] sm:$0xff]
    %v1320 = vld [vmem:[%s0 + $0x404] sm:$0xff]
    %v1321 = vld [vmem:[%s0 + $0x40c] sm:$0xff]
    %v1322 = vld [vmem:[%s0 + $0x414] sm:$0xff]
    %v1323 = vld [vmem:[%s0 + $0x41c] sm:$0xff]
    %v1324 = vld [vmem:[%s0 + $0x424] sm:$0xff]
    %v1325 = vld [vmem:[%s0 + $0x42c] sm:$0xff]
    %v1326 = vld [vmem:[%s0 + $0x434] sm:$0xf]
    %v1327 = vld [vmem:[%s0 + $0x438] sm:$0xff]
    %v1328 = vld [vmem:[%s0 + $0x440] sm:$0xff]
    %v1329 = vld [vmem:[%s0 + $0x448] sm:$0xff]
    %v1330 = vld [vmem:[%s0 + $0x450] sm:$0xff]
    %v1331 = vld [vmem:[%s0 + $0x458] sm:$0xff]
    %v1332 = vld [vmem:[%s0 + $0x460] sm:$0xff]
    %v1333 = vld [vmem:[%s0 + $0x468] sm:$0xff]
    %v1334 = vld [vmem:[%s0 + $0x470] sm:$0xf]
    %v1335 = vld [vmem:[%s0 + $0x474] sm:$0xff]
    %v1336 = vld [vmem:[%s0 + $0x47c] sm:$0xff]
    %v1337 = vld [vmem:[%s0 + $0x484] sm:$0xff]
    %v1338 = vld [vmem:[%s0 + $0x48c] sm:$0xff]
    %v1339 = vld [vmem:[%s0 + $0x494] sm:$0xff]
    %v1340 = vld [vmem:[%s0 + $0x49c] sm:$0xff]
    %v1341 = vld [vmem:[%s0 + $0x4a4] sm:$0xff]
    %v1342 = vld [vmem:[%s0 + $0x4ac] sm:$0xf]
    %v1343 = vld [vmem:[%s0 + $0x4b0] sm:$0xff]
    %v1344 = vld [vmem:[%s0 + $0x4b8] sm:$0xff]
    %v1345 = vld [vmem:[%s0 + $0x4c0] sm:$0xff]
    %v1346 = vld [vmem:[%s0 + $0x4c8] sm:$0xff]
    %v1347 = vld [vmem:[%s0 + $0x4d0] sm:$0xff]
    %v1348 = vld [vmem:[%s0 + $0x4d8] sm:$0xff]
    %v1349 = vld [vmem:[%s0 + $0x4e0] sm:$0xff]
    %v1350 = vld [vmem:[%s0 + $0x4e8] sm:$0xf]
    %v1351 = vld [vmem:[%s0 + $0x4ec] sm:$0xff]
    %v1352 = vld [vmem:[%s0 + $0x4f4] sm:$0xff]
    %v1353 = vld [vmem:[%s0 + $0x4fc] sm:$0xff]
    %v1354 = vld [vmem:[%s0 + $0x504] sm:$0xff]
    %v1355 = vld [vmem:[%s0 + $0x50c] sm:$0xff]
    %v1356 = vld [vmem:[%s0 + $0x514] sm:$0xff]
    %v1357 = vld [vmem:[%s0 + $0x51c] sm:$0xff]
    %v1358 = vld [vmem:[%s0 + $0x524] sm:$0xf]
    %v1359 = vld [vmem:[%s0 + $0x528] sm:$0xff]
    %v1360 = vld [vmem:[%s0 + $0x530] sm:$0xff]
    %v1361 = vld [vmem:[%s0 + $0x538] sm:$0xff]
    %v1362 = vld [vmem:[%s0 + $0x540] sm:$0xff]
    %v1363 = vld [vmem:[%s0 + $0x548] sm:$0xff]
    %v1364 = vld [vmem:[%s0 + $0x550] sm:$0xff]
    %v1365 = vld [vmem:[%s0 + $0x558] sm:$0xff]
    %v1366 = vld [vmem:[%s0 + $0x560] sm:$0xf]
    %v1367 = vld [vmem:[%s0 + $0x564] sm:$0xff]
    %v1368 = vld [vmem:[%s0 + $0x56c] sm:$0xff]
    %v1369 = vld [vmem:[%s0 + $0x574] sm:$0xff]
    %v1370 = vld [vmem:[%s0 + $0x57c] sm:$0xff]
    %v1371 = vld [vmem:[%s0 + $0x584] sm:$0xff]
    %v1372 = vld [vmem:[%s0 + $0x58c] sm:$0xff]
    %v1373 = vld [vmem:[%s0 + $0x594] sm:$0xff]
    %v1374 = vld [vmem:[%s0 + $0x59c] sm:$0xf]
    %v1567 = vunpack.c.l.b16 %v1183
    %v1568 = vunpack.c.h.b16 %v1183
    %v1569 = vunpack.c.l.b16 %v1184
    %v1570 = vunpack.c.h.b16 %v1184
    %v1571 = vunpack.c.l.b16 %v1185
    %v1572 = vunpack.c.h.b16 %v1185
    %v1573 = vunpack.c.l.b16 %v1186
    %v1574 = vunpack.c.h.b16 %v1186
    %v1575 = vunpack.c.l.b16 %v1187
    %v1576 = vunpack.c.h.b16 %v1187
    %v1577 = vunpack.c.l.b16 %v1188
    %v1578 = vunpack.c.h.b16 %v1188
    %v1579 = vunpack.c.l.b16 %v1189
    %v1580 = vunpack.c.h.b16 %v1189
    %v1581 = vunpack.c.l.b16 %v1190
    %v1582 = vunpack.c.l.b16 %v1191
    %v1583 = vunpack.c.h.b16 %v1191
    %v1584 = vunpack.c.l.b16 %v1192
    %v1585 = vunpack.c.h.b16 %v1192
    %v1586 = vunpack.c.l.b16 %v1193
    %v1587 = vunpack.c.h.b16 %v1193
    %v1588 = vunpack.c.l.b16 %v1194
    %v1589 = vunpack.c.h.b16 %v1194
    %v1590 = vunpack.c.l.b16 %v1195
    %v1591 = vunpack.c.h.b16 %v1195
    %v1592 = vunpack.c.l.b16 %v1196
    %v1593 = vunpack.c.h.b16 %v1196
    %v1594 = vunpack.c.l.b16 %v1197
    %v1595 = vunpack.c.h.b16 %v1197
    %v1596 = vunpack.c.l.b16 %v1198
    %v1597 = vunpack.c.l.b16 %v1199
    %v1598 = vunpack.c.h.b16 %v1199
    %v1599 = vunpack.c.l.b16 %v1200
    %v1600 = vunpack.c.h.b16 %v1200
    %v1601 = vunpack.c.l.b16 %v1201
    %v1602 = vunpack.c.h.b16 %v1201
    %v1603 = vunpack.c.l.b16 %v1202
    %v1604 = vunpack.c.h.b16 %v1202
    %v1605 = vunpack.c.l.b16 %v1203
    %v1606 = vunpack.c.h.b16 %v1203
    %v1607 = vunpack.c.l.b16 %v1204
    %v1608 = vunpack.c.h.b16 %v1204
    %v1609 = vunpack.c.l.b16 %v1205
    %v1610 = vunpack.c.h.b16 %v1205
    %v1611 = vunpack.c.l.b16 %v1206
    %v1612 = vunpack.c.l.b16 %v1207
    %v1613 = vunpack.c.h.b16 %v1207
    %v1614 = vunpack.c.l.b16 %v1208
    %v1615 = vunpack.c.h.b16 %v1208
    %v1616 = vunpack.c.l.b16 %v1209
    %v1617 = vunpack.c.h.b16 %v1209
    %v1618 = vunpack.c.l.b16 %v1210
    %v1619 = vunpack.c.h.b16 %v1210
    %v1620 = vunpack.c.l.b16 %v1211
    %v1621 = vunpack.c.h.b16 %v1211
    %v1622 = vunpack.c.l.b16 %v1212
    %v1623 = vunpack.c.h.b16 %v1212
    %v1624 = vunpack.c.l.b16 %v1213
    %v1625 = vunpack.c.h.b16 %v1213
    %v1626 = vunpack.c.l.b16 %v1214
    %v1627 = vunpack.c.l.b16 %v1215
    %v1628 = vunpack.c.h.b16 %v1215
    %v1629 = vunpack.c.l.b16 %v1216
    %v1630 = vunpack.c.h.b16 %v1216
    %v1631 = vunpack.c.l.b16 %v1217
    %v1632 = vunpack.c.h.b16 %v1217
    %v1633 = vunpack.c.l.b16 %v1218
    %v1634 = vunpack.c.h.b16 %v1218
    %v1635 = vunpack.c.l.b16 %v1219
    %v1636 = vunpack.c.h.b16 %v1219
    %v1637 = vunpack.c.l.b16 %v1220
    %v1638 = vunpack.c.h.b16 %v1220
    %v1639 = vunpack.c.l.b16 %v1221
    %v1640 = vunpack.c.h.b16 %v1221
    %v1641 = vunpack.c.l.b16 %v1222
    %v1642 = vunpack.c.l.b16 %v1223
    %v1643 = vunpack.c.h.b16 %v1223
    %v1644 = vunpack.c.l.b16 %v1224
    %v1645 = vunpack.c.h.b16 %v1224
    %v1646 = vunpack.c.l.b16 %v1225
    %v1647 = vunpack.c.h.b16 %v1225
    %v1648 = vunpack.c.l.b16 %v1226
    %v1649 = vunpack.c.h.b16 %v1226
    %v1650 = vunpack.c.l.b16 %v1227
    %v1651 = vunpack.c.h.b16 %v1227
    %v1652 = vunpack.c.l.b16 %v1228
    %v1653 = vunpack.c.h.b16 %v1228
    %v1654 = vunpack.c.l.b16 %v1229
    %v1655 = vunpack.c.h.b16 %v1229
    %v1656 = vunpack.c.l.b16 %v1230
    %v1657 = vunpack.c.l.b16 %v1231
    %v1658 = vunpack.c.h.b16 %v1231
    %v1659 = vunpack.c.l.b16 %v1232
    %v1660 = vunpack.c.h.b16 %v1232
    %v1661 = vunpack.c.l.b16 %v1233
    %v1662 = vunpack.c.h.b16 %v1233
    %v1663 = vunpack.c.l.b16 %v1234
    %v1664 = vunpack.c.h.b16 %v1234
    %v1665 = vunpack.c.l.b16 %v1235
    %v1666 = vunpack.c.h.b16 %v1235
    %v1667 = vunpack.c.l.b16 %v1236
    %v1668 = vunpack.c.h.b16 %v1236
    %v1669 = vunpack.c.l.b16 %v1237
    %v1670 = vunpack.c.h.b16 %v1237
    %v1671 = vunpack.c.l.b16 %v1238
    %v1672 = vunpack.c.l.b16 %v1239
    %v1673 = vunpack.c.h.b16 %v1239
    %v1674 = vunpack.c.l.b16 %v1240
    %v1675 = vunpack.c.h.b16 %v1240
    %v1676 = vunpack.c.l.b16 %v1241
    %v1677 = vunpack.c.h.b16 %v1241
    %v1678 = vunpack.c.l.b16 %v1242
    %v1679 = vunpack.c.h.b16 %v1242
    %v1680 = vunpack.c.l.b16 %v1243
    %v1681 = vunpack.c.h.b16 %v1243
    %v1682 = vunpack.c.l.b16 %v1244
    %v1683 = vunpack.c.h.b16 %v1244
    %v1684 = vunpack.c.l.b16 %v1245
    %v1685 = vunpack.c.h.b16 %v1245
    %v1686 = vunpack.c.l.b16 %v1246
    %v1687 = vunpack.c.l.b16 %v1247
    %v1688 = vunpack.c.h.b16 %v1247
    %v1689 = vunpack.c.l.b16 %v1248
    %v1690 = vunpack.c.h.b16 %v1248
    %v1691 = vunpack.c.l.b16 %v1249
    %v1692 = vunpack.c.h.b16 %v1249
    %v1693 = vunpack.c.l.b16 %v1250
    %v1694 = vunpack.c.h.b16 %v1250
    %v1695 = vunpack.c.l.b16 %v1251
    %v1696 = vunpack.c.h.b16 %v1251
    %v1697 = vunpack.c.l.b16 %v1252
    %v1698 = vunpack.c.h.b16 %v1252
    %v1699 = vunpack.c.l.b16 %v1253
    %v1700 = vunpack.c.h.b16 %v1253
    %v1701 = vunpack.c.l.b16 %v1254
    %v1702 = vunpack.c.l.b16 %v1255
    %v1703 = vunpack.c.h.b16 %v1255
    %v1704 = vunpack.c.l.b16 %v1256
    %v1705 = vunpack.c.h.b16 %v1256
    %v1706 = vunpack.c.l.b16 %v1257
    %v1707 = vunpack.c.h.b16 %v1257
    %v1708 = vunpack.c.l.b16 %v1258
    %v1709 = vunpack.c.h.b16 %v1258
    %v1710 = vunpack.c.l.b16 %v1259
    %v1711 = vunpack.c.h.b16 %v1259
    %v1712 = vunpack.c.l.b16 %v1260
    %v1713 = vunpack.c.h.b16 %v1260
    %v1714 = vunpack.c.l.b16 %v1261
    %v1715 = vunpack.c.h.b16 %v1261
    %v1716 = vunpack.c.l.b16 %v1262
    %v1717 = vunpack.c.l.b16 %v1263
    %v1718 = vunpack.c.h.b16 %v1263
    %v1719 = vunpack.c.l.b16 %v1264
    %v1720 = vunpack.c.h.b16 %v1264
    %v1721 = vunpack.c.l.b16 %v1265
    %v1722 = vunpack.c.h.b16 %v1265
    %v1723 = vunpack.c.l.b16 %v1266
    %v1724 = vunpack.c.h.b16 %v1266
    %v1725 = vunpack.c.l.b16 %v1267
    %v1726 = vunpack.c.h.b16 %v1267
    %v1727 = vunpack.c.l.b16 %v1268
    %v1728 = vunpack.c.h.b16 %v1268
    %v1729 = vunpack.c.l.b16 %v1269
    %v1730 = vunpack.c.h.b16 %v1269
    %v1731 = vunpack.c.l.b16 %v1270
    %v1732 = vunpack.c.l.b16 %v1271
    %v1733 = vunpack.c.h.b16 %v1271
    %v1734 = vunpack.c.l.b16 %v1272
    %v1735 = vunpack.c.h.b16 %v1272
    %v1736 = vunpack.c.l.b16 %v1273
    %v1737 = vunpack.c.h.b16 %v1273
    %v1738 = vunpack.c.l.b16 %v1274
    %v1739 = vunpack.c.h.b16 %v1274
    %v1740 = vunpack.c.l.b16 %v1275
    %v1741 = vunpack.c.h.b16 %v1275
    %v1742 = vunpack.c.l.b16 %v1276
    %v1743 = vunpack.c.h.b16 %v1276
    %v1744 = vunpack.c.l.b16 %v1277
    %v1745 = vunpack.c.h.b16 %v1277
    %v1746 = vunpack.c.l.b16 %v1278
    %v1747 = vunpack.c.l.b16 %v1279
    %v1748 = vunpack.c.h.b16 %v1279
    %v1749 = vunpack.c.l.b16 %v1280
    %v1750 = vunpack.c.h.b16 %v1280
    %v1751 = vunpack.c.l.b16 %v1281
    %v1752 = vunpack.c.h.b16 %v1281
    %v1753 = vunpack.c.l.b16 %v1282
    %v1754 = vunpack.c.h.b16 %v1282
    %v1755 = vunpack.c.l.b16 %v1283
    %v1756 = vunpack.c.h.b16 %v1283
    %v1757 = vunpack.c.l.b16 %v1284
    %v1758 = vunpack.c.h.b16 %v1284
    %v1759 = vunpack.c.l.b16 %v1285
    %v1760 = vunpack.c.h.b16 %v1285
    %v1761 = vunpack.c.l.b16 %v1286
    %v1762 = vunpack.c.l.b16 %v1287
    %v1763 = vunpack.c.h.b16 %v1287
    %v1764 = vunpack.c.l.b16 %v1288
    %v1765 = vunpack.c.h.b16 %v1288
    %v1766 = vunpack.c.l.b16 %v1289
    %v1767 = vunpack.c.h.b16 %v1289
    %v1768 = vunpack.c.l.b16 %v1290
    %v1769 = vunpack.c.h.b16 %v1290
    %v1770 = vunpack.c.l.b16 %v1291
    %v1771 = vunpack.c.h.b16 %v1291
    %v1772 = vunpack.c.l.b16 %v1292
    %v1773 = vunpack.c.h.b16 %v1292
    %v1774 = vunpack.c.l.b16 %v1293
    %v1775 = vunpack.c.h.b16 %v1293
    %v1776 = vunpack.c.l.b16 %v1294
    %v1777 = vunpack.c.l.b16 %v1295
    %v1778 = vunpack.c.h.b16 %v1295
    %v1779 = vunpack.c.l.b16 %v1296
    %v1780 = vunpack.c.h.b16 %v1296
    %v1781 = vunpack.c.l.b16 %v1297
    %v1782 = vunpack.c.h.b16 %v1297
    %v1783 = vunpack.c.l.b16 %v1298
    %v1784 = vunpack.c.h.b16 %v1298
    %v1785 = vunpack.c.l.b16 %v1299
    %v1786 = vunpack.c.h.b16 %v1299
    %v1787 = vunpack.c.l.b16 %v1300
    %v1788 = vunpack.c.h.b16 %v1300
    %v1789 = vunpack.c.l.b16 %v1301
    %v1790 = vunpack.c.h.b16 %v1301
    %v1791 = vunpack.c.l.b16 %v1302
    %v1792 = vunpack.c.l.b16 %v1303
    %v1793 = vunpack.c.h.b16 %v1303
    %v1794 = vunpack.c.l.b16 %v1304
    %v1795 = vunpack.c.h.b16 %v1304
    %v1796 = vunpack.c.l.b16 %v1305
    %v1797 = vunpack.c.h.b16 %v1305
    %v1798 = vunpack.c.l.b16 %v1306
    %v1799 = vunpack.c.h.b16 %v1306
    %v1800 = vunpack.c.l.b16 %v1307
    %v1801 = vunpack.c.h.b16 %v1307
    %v1802 = vunpack.c.l.b16 %v1308
    %v1803 = vunpack.c.h.b16 %v1308
    %v1804 = vunpack.c.l.b16 %v1309
    %v1805 = vunpack.c.h.b16 %v1309
    %v1806 = vunpack.c.l.b16 %v1310
    %v1807 = vunpack.c.l.b16 %v1311
    %v1808 = vunpack.c.h.b16 %v1311
    %v1809 = vunpack.c.l.b16 %v1312
    %v1810 = vunpack.c.h.b16 %v1312
    %v1811 = vunpack.c.l.b16 %v1313
    %v1812 = vunpack.c.h.b16 %v1313
    %v1813 = vunpack.c.l.b16 %v1314
    %v1814 = vunpack.c.h.b16 %v1314
    %v1815 = vunpack.c.l.b16 %v1315
    %v1816 = vunpack.c.h.b16 %v1315
    %v1817 = vunpack.c.l.b16 %v1316
    %v1818 = vunpack.c.h.b16 %v1316
    %v1819 = vunpack.c.l.b16 %v1317
    %v1820 = vunpack.c.h.b16 %v1317
    %v1821 = vunpack.c.l.b16 %v1318
    %v1822 = vunpack.c.l.b16 %v1319
    %v1823 = vunpack.c.h.b16 %v1319
    %v1824 = vunpack.c.l.b16 %v1320
    %v1825 = vunpack.c.h.b16 %v1320
    %v1826 = vunpack.c.l.b16 %v1321
    %v1827 = vunpack.c.h.b16 %v1321
    %v1828 = vunpack.c.l.b16 %v1322
    %v1829 = vunpack.c.h.b16 %v1322
    %v1830 = vunpack.c.l.b16 %v1323
    %v1831 = vunpack.c.h.b16 %v1323
    %v1832 = vunpack.c.l.b16 %v1324
    %v1833 = vunpack.c.h.b16 %v1324
    %v1834 = vunpack.c.l.b16 %v1325
    %v1835 = vunpack.c.h.b16 %v1325
    %v1836 = vunpack.c.l.b16 %v1326
    %v1837 = vunpack.c.l.b16 %v1327
    %v1838 = vunpack.c.h.b16 %v1327
    %v1839 = vunpack.c.l.b16 %v1328
    %v1840 = vunpack.c.h.b16 %v1328
    %v1841 = vunpack.c.l.b16 %v1329
    %v1842 = vunpack.c.h.b16 %v1329
    %v1843 = vunpack.c.l.b16 %v1330
    %v1844 = vunpack.c.h.b16 %v1330
    %v1845 = vunpack.c.l.b16 %v1331
    %v1846 = vunpack.c.h.b16 %v1331
    %v1847 = vunpack.c.l.b16 %v1332
    %v1848 = vunpack.c.h.b16 %v1332
    %v1849 = vunpack.c.l.b16 %v1333
    %v1850 = vunpack.c.h.b16 %v1333
    %v1851 = vunpack.c.l.b16 %v1334
    %v1852 = vunpack.c.l.b16 %v1335
    %v1853 = vunpack.c.h.b16 %v1335
    %v1854 = vunpack.c.l.b16 %v1336
    %v1855 = vunpack.c.h.b16 %v1336
    %v1856 = vunpack.c.l.b16 %v1337
    %v1857 = vunpack.c.h.b16 %v1337
    %v1858 = vunpack.c.l.b16 %v1338
    %v1859 = vunpack.c.h.b16 %v1338
    %v1860 = vunpack.c.l.b16 %v1339
    %v1861 = vunpack.c.h.b16 %v1339
    %v1862 = vunpack.c.l.b16 %v1340
    %v1863 = vunpack.c.h.b16 %v1340
    %v1864 = vunpack.c.l.b16 %v1341
    %v1865 = vunpack.c.h.b16 %v1341
    %v1866 = vunpack.c.l.b16 %v1342
    %v1867 = vunpack.c.l.b16 %v1343
    %v1868 = vunpack.c.h.b16 %v1343
    %v1869 = vunpack.c.l.b16 %v1344
    %v1870 = vunpack.c.h.b16 %v1344
    %v1871 = vunpack.c.l.b16 %v1345
    %v1872 = vunpack.c.h.b16 %v1345
    %v1873 = vunpack.c.l.b16 %v1346
    %v1874 = vunpack.c.h.b16 %v1346
    %v1875 = vunpack.c.l.b16 %v1347
    %v1876 = vunpack.c.h.b16 %v1347
    %v1877 = vunpack.c.l.b16 %v1348
    %v1878 = vunpack.c.h.b16 %v1348
    %v1879 = vunpack.c.l.b16 %v1349
    %v1880 = vunpack.c.h.b16 %v1349
    %v1881 = vunpack.c.l.b16 %v1350
    %v1882 = vunpack.c.l.b16 %v1351
    %v1883 = vunpack.c.h.b16 %v1351
    %v1884 = vunpack.c.l.b16 %v1352
    %v1885 = vunpack.c.h.b16 %v1352
    %v1886 = vunpack.c.l.b16 %v1353
    %v1887 = vunpack.c.h.b16 %v1353
    %v1888 = vunpack.c.l.b16 %v1354
    %v1889 = vunpack.c.h.b16 %v1354
    %v1890 = vunpack.c.l.b16 %v1355
    %v1891 = vunpack.c.h.b16 %v1355
    %v1892 = vunpack.c.l.b16 %v1356
    %v1893 = vunpack.c.h.b16 %v1356
    %v1894 = vunpack.c.l.b16 %v1357
    %v1895 = vunpack.c.h.b16 %v1357
    %v1896 = vunpack.c.l.b16 %v1358
    %v1897 = vunpack.c.l.b16 %v1359
    %v1898 = vunpack.c.h.b16 %v1359
    %v1899 = vunpack.c.l.b16 %v1360
    %v1900 = vunpack.c.h.b16 %v1360
    %v1901 = vunpack.c.l.b16 %v1361
    %v1902 = vunpack.c.h.b16 %v1361
    %v1903 = vunpack.c.l.b16 %v1362
    %v1904 = vunpack.c.h.b16 %v1362
    %v1905 = vunpack.c.l.b16 %v1363
    %v1906 = vunpack.c.h.b16 %v1363
    %v1907 = vunpack.c.l.b16 %v1364
    %v1908 = vunpack.c.h.b16 %v1364
    %v1909 = vunpack.c.l.b16 %v1365
    %v1910 = vunpack.c.h.b16 %v1365
    %v1911 = vunpack.c.l.b16 %v1366
    %v1912 = vunpack.c.l.b16 %v1367
    %v1913 = vunpack.c.h.b16 %v1367
    %v1914 = vunpack.c.l.b16 %v1368
    %v1915 = vunpack.c.h.b16 %v1368
    %v1916 = vunpack.c.l.b16 %v1369
    %v1917 = vunpack.c.h.b16 %v1369
    %v1918 = vunpack.c.l.b16 %v1370
    %v1919 = vunpack.c.h.b16 %v1370
    %v1920 = vunpack.c.l.b16 %v1371
    %v1921 = vunpack.c.h.b16 %v1371
    %v1922 = vunpack.c.l.b16 %v1372
    %v1923 = vunpack.c.h.b16 %v1372
    %v1924 = vunpack.c.l.b16 %v1373
    %v1925 = vunpack.c.h.b16 %v1373
    %v1926 = vunpack.c.l.b16 %v1374
    %v1927 = vpack.c.b16 %v1582, %v1567
    %v1928 = vpack.c.b16 %v1583, %v1568
    %v1929 = vpack.c.b16 %v1584, %v1569
    %v1930 = vpack.c.b16 %v1585, %v1570
    %v1931 = vpack.c.b16 %v1586, %v1571
    %v1932 = vpack.c.b16 %v1587, %v1572
    %v1933 = vpack.c.b16 %v1588, %v1573
    %v1934 = vpack.c.b16 %v1589, %v1574
    %v1935 = vpack.c.b16 %v1590, %v1575
    %v1936 = vpack.c.b16 %v1591, %v1576
    %v1937 = vpack.c.b16 %v1592, %v1577
    %v1938 = vpack.c.b16 %v1593, %v1578
    %v1939 = vpack.c.b16 %v1594, %v1579
    %v1940 = vpack.c.b16 %v1595, %v1580
    %v1941 = vpack.c.b16 %v1596, %v1581
    %v1942 = vpack.c.b16 %v1612, %v1597
    %v1943 = vpack.c.b16 %v1613, %v1598
    %v1944 = vpack.c.b16 %v1614, %v1599
    %v1945 = vpack.c.b16 %v1615, %v1600
    %v1946 = vpack.c.b16 %v1616, %v1601
    %v1947 = vpack.c.b16 %v1617, %v1602
    %v1948 = vpack.c.b16 %v1618, %v1603
    %v1949 = vpack.c.b16 %v1619, %v1604
    %v1950 = vpack.c.b16 %v1620, %v1605
    %v1951 = vpack.c.b16 %v1621, %v1606
    %v1952 = vpack.c.b16 %v1622, %v1607
    %v1953 = vpack.c.b16 %v1623, %v1608
    %v1954 = vpack.c.b16 %v1624, %v1609
    %v1955 = vpack.c.b16 %v1625, %v1610
    %v1956 = vpack.c.b16 %v1626, %v1611
    %v1957 = vpack.c.b16 %v1642, %v1627
    %v1958 = vpack.c.b16 %v1643, %v1628
    %v1959 = vpack.c.b16 %v1644, %v1629
    %v1960 = vpack.c.b16 %v1645, %v1630
    %v1961 = vpack.c.b16 %v1646, %v1631
    %v1962 = vpack.c.b16 %v1647, %v1632
    %v1963 = vpack.c.b16 %v1648, %v1633
    %v1964 = vpack.c.b16 %v1649, %v1634
    %v1965 = vpack.c.b16 %v1650, %v1635
    %v1966 = vpack.c.b16 %v1651, %v1636
    %v1967 = vpack.c.b16 %v1652, %v1637
    %v1968 = vpack.c.b16 %v1653, %v1638
    %v1969 = vpack.c.b16 %v1654, %v1639
    %v1970 = vpack.c.b16 %v1655, %v1640
    %v1971 = vpack.c.b16 %v1656, %v1641
    %v1972 = vpack.c.b16 %v1672, %v1657
    %v1973 = vpack.c.b16 %v1673, %v1658
    %v1974 = vpack.c.b16 %v1674, %v1659
    %v1975 = vpack.c.b16 %v1675, %v1660
    %v1976 = vpack.c.b16 %v1676, %v1661
    %v1977 = vpack.c.b16 %v1677, %v1662
    %v1978 = vpack.c.b16 %v1678, %v1663
    %v1979 = vpack.c.b16 %v1679, %v1664
    %v1980 = vpack.c.b16 %v1680, %v1665
    %v1981 = vpack.c.b16 %v1681, %v1666
    %v1982 = vpack.c.b16 %v1682, %v1667
    %v1983 = vpack.c.b16 %v1683, %v1668
    %v1984 = vpack.c.b16 %v1684, %v1669
    %v1985 = vpack.c.b16 %v1685, %v1670
    %v1986 = vpack.c.b16 %v1686, %v1671
    %v1987 = vpack.c.b16 %v1702, %v1687
    %v1988 = vpack.c.b16 %v1703, %v1688
    %v1989 = vpack.c.b16 %v1704, %v1689
    %v1990 = vpack.c.b16 %v1705, %v1690
    %v1991 = vpack.c.b16 %v1706, %v1691
    %v1992 = vpack.c.b16 %v1707, %v1692
    %v1993 = vpack.c.b16 %v1708, %v1693
    %v1994 = vpack.c.b16 %v1709, %v1694
    %v1995 = vpack.c.b16 %v1710, %v1695
    %v1996 = vpack.c.b16 %v1711, %v1696
    %v1997 = vpack.c.b16 %v1712, %v1697
    %v1998 = vpack.c.b16 %v1713, %v1698
    %v1999 = vpack.c.b16 %v1714, %v1699
    %v2000 = vpack.c.b16 %v1715, %v1700
    %v2001 = vpack.c.b16 %v1716, %v1701
    %v2002 = vpack.c.b16 %v1732, %v1717
    %v2003 = vpack.c.b16 %v1733, %v1718
    %v2004 = vpack.c.b16 %v1734, %v1719
    %v2005 = vpack.c.b16 %v1735, %v1720
    %v2006 = vpack.c.b16 %v1736, %v1721
    %v2007 = vpack.c.b16 %v1737, %v1722
    %v2008 = vpack.c.b16 %v1738, %v1723
    %v2009 = vpack.c.b16 %v1739, %v1724
    %v2010 = vpack.c.b16 %v1740, %v1725
    %v2011 = vpack.c.b16 %v1741, %v1726
    %v2012 = vpack.c.b16 %v1742, %v1727
    %v2013 = vpack.c.b16 %v1743, %v1728
    %v2014 = vpack.c.b16 %v1744, %v1729
    %v2015 = vpack.c.b16 %v1745, %v1730
    %v2016 = vpack.c.b16 %v1746, %v1731
    %v2017 = vpack.c.b16 %v1762, %v1747
    %v2018 = vpack.c.b16 %v1763, %v1748
    %v2019 = vpack.c.b16 %v1764, %v1749
    %v2020 = vpack.c.b16 %v1765, %v1750
    %v2021 = vpack.c.b16 %v1766, %v1751
    %v2022 = vpack.c.b16 %v1767, %v1752
    %v2023 = vpack.c.b16 %v1768, %v1753
    %v2024 = vpack.c.b16 %v1769, %v1754
    %v2025 = vpack.c.b16 %v1770, %v1755
    %v2026 = vpack.c.b16 %v1771, %v1756
    %v2027 = vpack.c.b16 %v1772, %v1757
    %v2028 = vpack.c.b16 %v1773, %v1758
    %v2029 = vpack.c.b16 %v1774, %v1759
    %v2030 = vpack.c.b16 %v1775, %v1760
    %v2031 = vpack.c.b16 %v1776, %v1761
    %v2032 = vpack.c.b16 %v1792, %v1777
    %v2033 = vpack.c.b16 %v1793, %v1778
    %v2034 = vpack.c.b16 %v1794, %v1779
    %v2035 = vpack.c.b16 %v1795, %v1780
    %v2036 = vpack.c.b16 %v1796, %v1781
    %v2037 = vpack.c.b16 %v1797, %v1782
    %v2038 = vpack.c.b16 %v1798, %v1783
    %v2039 = vpack.c.b16 %v1799, %v1784
    %v2040 = vpack.c.b16 %v1800, %v1785
    %v2041 = vpack.c.b16 %v1801, %v1786
    %v2042 = vpack.c.b16 %v1802, %v1787
    %v2043 = vpack.c.b16 %v1803, %v1788
    %v2044 = vpack.c.b16 %v1804, %v1789
    %v2045 = vpack.c.b16 %v1805, %v1790
    %v2046 = vpack.c.b16 %v1806, %v1791
    %v2047 = vpack.c.b16 %v1822, %v1807
    %v2048 = vpack.c.b16 %v1823, %v1808
    %v2049 = vpack.c.b16 %v1824, %v1809
    %v2050 = vpack.c.b16 %v1825, %v1810
    %v2051 = vpack.c.b16 %v1826, %v1811
    %v2052 = vpack.c.b16 %v1827, %v1812
    %v2053 = vpack.c.b16 %v1828, %v1813
    %v2054 = vpack.c.b16 %v1829, %v1814
    %v2055 = vpack.c.b16 %v1830, %v1815
    %v2056 = vpack.c.b16 %v1831, %v1816
    %v2057 = vpack.c.b16 %v1832, %v1817
    %v2058 = vpack.c.b16 %v1833, %v1818
    %v2059 = vpack.c.b16 %v1834, %v1819
    %v2060 = vpack.c.b16 %v1835, %v1820
    %v2061 = vpack.c.b16 %v1836, %v1821
    %v2062 = vpack.c.b16 %v1852, %v1837
    %v2063 = vpack.c.b16 %v1853, %v1838
    %v2064 = vpack.c.b16 %v1854, %v1839
    %v2065 = vpack.c.b16 %v1855, %v1840
    %v2066 = vpack.c.b16 %v1856, %v1841
    %v2067 = vpack.c.b16 %v1857, %v1842
    %v2068 = vpack.c.b16 %v1858, %v1843
    %v2069 = vpack.c.b16 %v1859, %v1844
    %v2070 = vpack.c.b16 %v1860, %v1845
    %v2071 = vpack.c.b16 %v1861, %v1846
    %v2072 = vpack.c.b16 %v1862, %v1847
    %v2073 = vpack.c.b16 %v1863, %v1848
    %v2074 = vpack.c.b16 %v1864, %v1849
    %v2075 = vpack.c.b16 %v1865, %v1850
    %v2076 = vpack.c.b16 %v1866, %v1851
    %v2077 = vpack.c.b16 %v1882, %v1867
    %v2078 = vpack.c.b16 %v1883, %v1868
    %v2079 = vpack.c.b16 %v1884, %v1869
    %v2080 = vpack.c.b16 %v1885, %v1870
    %v2081 = vpack.c.b16 %v1886, %v1871
    %v2082 = vpack.c.b16 %v1887, %v1872
    %v2083 = vpack.c.b16 %v1888, %v1873
    %v2084 = vpack.c.b16 %v1889, %v1874
    %v2085 = vpack.c.b16 %v1890, %v1875
    %v2086 = vpack.c.b16 %v1891, %v1876
    %v2087 = vpack.c.b16 %v1892, %v1877
    %v2088 = vpack.c.b16 %v1893, %v1878
    %v2089 = vpack.c.b16 %v1894, %v1879
    %v2090 = vpack.c.b16 %v1895, %v1880
    %v2091 = vpack.c.b16 %v1896, %v1881
    %v2092 = vpack.c.b16 %v1912, %v1897
    %v2093 = vpack.c.b16 %v1913, %v1898
    %v2094 = vpack.c.b16 %v1914, %v1899
    %v2095 = vpack.c.b16 %v1915, %v1900
    %v2096 = vpack.c.b16 %v1916, %v1901
    %v2097 = vpack.c.b16 %v1917, %v1902
    %v2098 = vpack.c.b16 %v1918, %v1903
    %v2099 = vpack.c.b16 %v1919, %v1904
    %v2100 = vpack.c.b16 %v1920, %v1905
    %v2101 = vpack.c.b16 %v1921, %v1906
    %v2102 = vpack.c.b16 %v1922, %v1907
    %v2103 = vpack.c.b16 %v1923, %v1908
    %v2104 = vpack.c.b16 %v1924, %v1909
    %v2105 = vpack.c.b16 %v1925, %v1910
    %v2106 = vpack.c.b16 %v1926, %v1911
    %vm2275 = vcmask 654336
    %v2277 = vsel %vm2275, %v1941, 0
    %v2280 = vsel %vm2275, %v1956, 0
    %v2283 = vsel %vm2275, %v1971, 0
    %v2286 = vsel %vm2275, %v1986, 0
    %v2289 = vsel %vm2275, %v2001, 0
    %v2292 = vsel %vm2275, %v2016, 0
    %v2295 = vsel %vm2275, %v2031, 0
    %v2298 = vsel %vm2275, %v2046, 0
    %v2301 = vsel %vm2275, %v2061, 0
    %v2304 = vsel %vm2275, %v2076, 0
    %v2307 = vsel %vm2275, %v2091, 0
    %v2310 = vsel %vm2275, %v2106, 0
    %2312 = vmatprep.subr.bf16.mxu0 %v964
    %2313 = vmatpush1.bf16.msra.mxu0 %v963
    %2314 = vmatprep.subr.bf16.mxu0 %v962
    %2315 = vmatpush1.bf16.msra.mxu0 %v961
    %2316 = vmatprep.subr.bf16.mxu0 %v960
    %2317 = vmatpush1.bf16.msra.mxu0 %v959
    %2318 = vmatprep.subr.bf16.mxu0 %v958
    %2319 = vmatpush1.bf16.msra.mxu0 %v957
    %2320 = vmatprep.subr.bf16.mxu0 %v956
    %2321 = vmatpush1.bf16.msra.mxu0 %v955
    %2322 = vmatprep.subr.bf16.mxu0 %v954
    %2323 = vmatpush1.bf16.msra.mxu0 %v953
    %2324 = vmatprep.subr.bf16.mxu0 %v952
    %2325 = vmatpush1.bf16.msra.mxu0 %v951
    %2326 = vmatprep.subr.bf16.mxu0 %v950
    %2327 = vmatpush1.bf16.msra.mxu0 %v949
    %2328 = vmatprep.subr.bf16.mxu0 %v980
    %2329 = vmatpush2.bf16.msra.mxu0 %v979
    %2330 = vmatprep.subr.bf16.mxu0 %v978
    %2331 = vmatpush2.bf16.msra.mxu0 %v977
    %2332 = vmatprep.subr.bf16.mxu0 %v976
    %2333 = vmatpush2.bf16.msra.mxu0 %v975
    %2334 = vmatprep.subr.bf16.mxu0 %v974
    %2335 = vmatpush2.bf16.msra.mxu0 %v973
    %2336 = vmatprep.subr.bf16.mxu0 %v972
    %2337 = vmatpush2.bf16.msra.mxu0 %v971
    %2338 = vmatprep.subr.bf16.mxu0 %v970
    %2339 = vmatpush2.bf16.msra.mxu0 %v969
    %2340 = vmatprep.subr.bf16.mxu0 %v968
    %2341 = vmatpush2.bf16.msra.mxu0 %v967
    %2342 = vmatprep.subr.bf16.mxu0 %v966
    %2343 = vmatpush2.bf16.msra.mxu0 %v965
    %2344 = vmatprep.mubr.bf16.mxu0 %v1928
    %2345 = vmatmul.mubr.bf16.gmra.mxu0 %v1927
    %v2346 = vpop.f32.mrf.mxu0
    %v2347 = vadd.f32 0.0, %v2346
    %v2348 = vpop.f32.mrf.mxu0
    %v2349 = vadd.f32 0.0, %v2348
    %v2350 = vpop.f32.mrf.mxu0
    %v2351 = vadd.f32 0.0, %v2350
    %v2352 = vpop.f32.mrf.mxu0
    %v2353 = vadd.f32 0.0, %v2352
    %2354 = vmatprep.mubr.bf16.mxu0 %v1943
    %2355 = vmatmul.mubr.bf16.gmra.mxu0 %v1942
    %v2356 = vpop.f32.mrf.mxu0
    %v2357 = vadd.f32 0.0, %v2356
    %v2358 = vpop.f32.mrf.mxu0
    %v2359 = vadd.f32 0.0, %v2358
    %v2360 = vpop.f32.mrf.mxu0
    %v2361 = vadd.f32 0.0, %v2360
    %v2362 = vpop.f32.mrf.mxu0
    %v2363 = vadd.f32 0.0, %v2362
    %2364 = vmatprep.mubr.bf16.mxu0 %v1958
    %2365 = vmatmul.mubr.bf16.gmra.mxu0 %v1957
    %v2366 = vpop.f32.mrf.mxu0
    %v2367 = vadd.f32 0.0, %v2366
    %v2368 = vpop.f32.mrf.mxu0
    %v2369 = vadd.f32 0.0, %v2368
    %v2370 = vpop.f32.mrf.mxu0
    %v2371 = vadd.f32 0.0, %v2370
    %v2372 = vpop.f32.mrf.mxu0
    %v2373 = vadd.f32 0.0, %v2372
    %2374 = vmatprep.mubr.bf16.mxu0 %v1973
    %2375 = vmatmul.mubr.bf16.gmra.mxu0 %v1972
    %v2376 = vpop.f32.mrf.mxu0
    %v2377 = vadd.f32 0.0, %v2376
    %v2378 = vpop.f32.mrf.mxu0
    %v2379 = vadd.f32 0.0, %v2378
    %v2380 = vpop.f32.mrf.mxu0
    %v2381 = vadd.f32 0.0, %v2380
    %v2382 = vpop.f32.mrf.mxu0
    %v2383 = vadd.f32 0.0, %v2382
    %2384 = vmatprep.mubr.bf16.mxu0 %v1988
    %2385 = vmatmul.mubr.bf16.gmra.mxu0 %v1987
    %v2386 = vpop.f32.mrf.mxu0
    %v2387 = vadd.f32 0.0, %v2386
    %v2388 = vpop.f32.mrf.mxu0
    %v2389 = vadd.f32 0.0, %v2388
    %v2390 = vpop.f32.mrf.mxu0
    %v2391 = vadd.f32 0.0, %v2390
    %v2392 = vpop.f32.mrf.mxu0
    %v2393 = vadd.f32 0.0, %v2392
    %2394 = vmatprep.mubr.bf16.mxu0 %v2003
    %2395 = vmatmul.mubr.bf16.gmra.mxu0 %v2002
    %v2396 = vpop.f32.mrf.mxu0
    %v2397 = vadd.f32 0.0, %v2396
    %v2398 = vpop.f32.mrf.mxu0
    %v2399 = vadd.f32 0.0, %v2398
    %v2400 = vpop.f32.mrf.mxu0
    %v2401 = vadd.f32 0.0, %v2400
    %v2402 = vpop.f32.mrf.mxu0
    %v2403 = vadd.f32 0.0, %v2402
    %2404 = vmatprep.mubr.bf16.mxu0 %v2018
    %2405 = vmatmul.mubr.bf16.gmra.mxu0 %v2017
    %v2406 = vpop.f32.mrf.mxu0
    %v2407 = vadd.f32 0.0, %v2406
    %v2408 = vpop.f32.mrf.mxu0
    %v2409 = vadd.f32 0.0, %v2408
    %v2410 = vpop.f32.mrf.mxu0
    %v2411 = vadd.f32 0.0, %v2410
    %v2412 = vpop.f32.mrf.mxu0
    %v2413 = vadd.f32 0.0, %v2412
    %2414 = vmatprep.mubr.bf16.mxu0 %v2033
    %2415 = vmatmul.mubr.bf16.gmra.mxu0 %v2032
    %v2416 = vpop.f32.mrf.mxu0
    %v2417 = vadd.f32 0.0, %v2416
    %v2418 = vpop.f32.mrf.mxu0
    %v2419 = vadd.f32 0.0, %v2418
    %v2420 = vpop.f32.mrf.mxu0
    %v2421 = vadd.f32 0.0, %v2420
    %v2422 = vpop.f32.mrf.mxu0
    %v2423 = vadd.f32 0.0, %v2422
    %2424 = vmatprep.mubr.bf16.mxu0 %v2048
    %2425 = vmatmul.mubr.bf16.gmra.mxu0 %v2047
    %v2426 = vpop.f32.mrf.mxu0
    %v2427 = vadd.f32 0.0, %v2426
    %v2428 = vpop.f32.mrf.mxu0
    %v2429 = vadd.f32 0.0, %v2428
    %v2430 = vpop.f32.mrf.mxu0
    %v2431 = vadd.f32 0.0, %v2430
    %v2432 = vpop.f32.mrf.mxu0
    %v2433 = vadd.f32 0.0, %v2432
    %2434 = vmatprep.mubr.bf16.mxu0 %v2063
    %2435 = vmatmul.mubr.bf16.gmra.mxu0 %v2062
    %v2436 = vpop.f32.mrf.mxu0
    %v2437 = vadd.f32 0.0, %v2436
    %v2438 = vpop.f32.mrf.mxu0
    %v2439 = vadd.f32 0.0, %v2438
    %v2440 = vpop.f32.mrf.mxu0
    %v2441 = vadd.f32 0.0, %v2440
    %v2442 = vpop.f32.mrf.mxu0
    %v2443 = vadd.f32 0.0, %v2442
    %2444 = vmatprep.mubr.bf16.mxu0 %v2078
    %2445 = vmatmul.mubr.bf16.gmra.mxu0 %v2077
    %v2446 = vpop.f32.mrf.mxu0
    %v2447 = vadd.f32 0.0, %v2446
    %v2448 = vpop.f32.mrf.mxu0
    %v2449 = vadd.f32 0.0, %v2448
    %v2450 = vpop.f32.mrf.mxu0
    %v2451 = vadd.f32 0.0, %v2450
    %v2452 = vpop.f32.mrf.mxu0
    %v2453 = vadd.f32 0.0, %v2452
    %2454 = vmatprep.mubr.bf16.mxu0 %v2093
    %2455 = vmatmul.mubr.bf16.gmra.mxu0 %v2092
    %v2456 = vpop.f32.mrf.mxu0
    %v2457 = vadd.f32 0.0, %v2456
    %v2458 = vpop.f32.mrf.mxu0
    %v2459 = vadd.f32 0.0, %v2458
    %v2460 = vpop.f32.mrf.mxu0
    %v2461 = vadd.f32 0.0, %v2460
    %v2462 = vpop.f32.mrf.mxu0
    %v2463 = vadd.f32 0.0, %v2462
    %2464 = vdwg.mxu0
    %2465 = vmatprep.subr.bf16.mxu0 %v996
    %2466 = vmatpush1.bf16.msra.mxu0 %v995
    %2467 = vmatprep.subr.bf16.mxu0 %v994
    %2468 = vmatpush1.bf16.msra.mxu0 %v993
    %2469 = vmatprep.subr.bf16.mxu0 %v992
    %2470 = vmatpush1.bf16.msra.mxu0 %v991
    %2471 = vmatprep.subr.bf16.mxu0 %v990
    %2472 = vmatpush1.bf16.msra.mxu0 %v989
    %2473 = vmatprep.subr.bf16.mxu0 %v988
    %2474 = vmatpush1.bf16.msra.mxu0 %v987
    %2475 = vmatprep.subr.bf16.mxu0 %v986
    %2476 = vmatpush1.bf16.msra.mxu0 %v985
    %2477 = vmatprep.subr.bf16.mxu0 %v984
    %2478 = vmatpush1.bf16.msra.mxu0 %v983
    %2479 = vmatprep.subr.bf16.mxu0 %v982
    %2480 = vmatpush1.bf16.msra.mxu0 %v981
    %2481 = vmatprep.subr.bf16.mxu0 %v1012
    %2482 = vmatpush2.bf16.msra.mxu0 %v1011
    %2483 = vmatprep.subr.bf16.mxu0 %v1010
    %2484 = vmatpush2.bf16.msra.mxu0 %v1009
    %2485 = vmatprep.subr.bf16.mxu0 %v1008
    %2486 = vmatpush2.bf16.msra.mxu0 %v1007
    %2487 = vmatprep.subr.bf16.mxu0 %v1006
    %2488 = vmatpush2.bf16.msra.mxu0 %v1005
    %2489 = vmatprep.subr.bf16.mxu0 %v1004
    %2490 = vmatpush2.bf16.msra.mxu0 %v1003
    %2491 = vmatprep.subr.bf16.mxu0 %v1002
    %2492 = vmatpush2.bf16.msra.mxu0 %v1001
    %2493 = vmatprep.subr.bf16.mxu0 %v1000
    %2494 = vmatpush2.bf16.msra.mxu0 %v999
    %2495 = vmatprep.subr.bf16.mxu0 %v998
    %2496 = vmatpush2.bf16.msra.mxu0 %v997
    %2497 = vmatprep.mubr.bf16.mxu0 %v1930
    %2498 = vmatmul.mubr.bf16.gmra.mxu0 %v1929
    %v2499 = vpop.f32.mrf.mxu0
    %v2500 = vadd.f32 %v2347, %v2499
    %v2501 = vpop.f32.mrf.mxu0
    %v2502 = vadd.f32 %v2349, %v2501
    %v2503 = vpop.f32.mrf.mxu0
    %v2504 = vadd.f32 %v2351, %v2503
    %v2505 = vpop.f32.mrf.mxu0
    %v2506 = vadd.f32 %v2353, %v2505
    %2507 = vmatprep.mubr.bf16.mxu0 %v1945
    %2508 = vmatmul.mubr.bf16.gmra.mxu0 %v1944
    %v2509 = vpop.f32.mrf.mxu0
    %v2510 = vadd.f32 %v2357, %v2509
    %v2511 = vpop.f32.mrf.mxu0
    %v2512 = vadd.f32 %v2359, %v2511
    %v2513 = vpop.f32.mrf.mxu0
    %v2514 = vadd.f32 %v2361, %v2513
    %v2515 = vpop.f32.mrf.mxu0
    %v2516 = vadd.f32 %v2363, %v2515
    %2517 = vmatprep.mubr.bf16.mxu0 %v1960
    %2518 = vmatmul.mubr.bf16.gmra.mxu0 %v1959
    %v2519 = vpop.f32.mrf.mxu0
    %v2520 = vadd.f32 %v2367, %v2519
    %v2521 = vpop.f32.mrf.mxu0
    %v2522 = vadd.f32 %v2369, %v2521
    %v2523 = vpop.f32.mrf.mxu0
    %v2524 = vadd.f32 %v2371, %v2523
    %v2525 = vpop.f32.mrf.mxu0
    %v2526 = vadd.f32 %v2373, %v2525
    %2527 = vmatprep.mubr.bf16.mxu0 %v1975
    %2528 = vmatmul.mubr.bf16.gmra.mxu0 %v1974
    %v2529 = vpop.f32.mrf.mxu0
    %v2530 = vadd.f32 %v2377, %v2529
    %v2531 = vpop.f32.mrf.mxu0
    %v2532 = vadd.f32 %v2379, %v2531
    %v2533 = vpop.f32.mrf.mxu0
    %v2534 = vadd.f32 %v2381, %v2533
    %v2535 = vpop.f32.mrf.mxu0
    %v2536 = vadd.f32 %v2383, %v2535
    %2537 = vmatprep.mubr.bf16.mxu0 %v1990
    %2538 = vmatmul.mubr.bf16.gmra.mxu0 %v1989
    %v2539 = vpop.f32.mrf.mxu0
    %v2540 = vadd.f32 %v2387, %v2539
    %v2541 = vpop.f32.mrf.mxu0
    %v2542 = vadd.f32 %v2389, %v2541
    %v2543 = vpop.f32.mrf.mxu0
    %v2544 = vadd.f32 %v2391, %v2543
    %v2545 = vpop.f32.mrf.mxu0
    %v2546 = vadd.f32 %v2393, %v2545
    %2547 = vmatprep.mubr.bf16.mxu0 %v2005
    %2548 = vmatmul.mubr.bf16.gmra.mxu0 %v2004
    %v2549 = vpop.f32.mrf.mxu0
    %v2550 = vadd.f32 %v2397, %v2549
    %v2551 = vpop.f32.mrf.mxu0
    %v2552 = vadd.f32 %v2399, %v2551
    %v2553 = vpop.f32.mrf.mxu0
    %v2554 = vadd.f32 %v2401, %v2553
    %v2555 = vpop.f32.mrf.mxu0
    %v2556 = vadd.f32 %v2403, %v2555
    %2557 = vmatprep.mubr.bf16.mxu0 %v2020
    %2558 = vmatmul.mubr.bf16.gmra.mxu0 %v2019
    %v2559 = vpop.f32.mrf.mxu0
    %v2560 = vadd.f32 %v2407, %v2559
    %v2561 = vpop.f32.mrf.mxu0
    %v2562 = vadd.f32 %v2409, %v2561
    %v2563 = vpop.f32.mrf.mxu0
    %v2564 = vadd.f32 %v2411, %v2563
    %v2565 = vpop.f32.mrf.mxu0
    %v2566 = vadd.f32 %v2413, %v2565
    %2567 = vmatprep.mubr.bf16.mxu0 %v2035
    %2568 = vmatmul.mubr.bf16.gmra.mxu0 %v2034
    %v2569 = vpop.f32.mrf.mxu0
    %v2570 = vadd.f32 %v2417, %v2569
    %v2571 = vpop.f32.mrf.mxu0
    %v2572 = vadd.f32 %v2419, %v2571
    %v2573 = vpop.f32.mrf.mxu0
    %v2574 = vadd.f32 %v2421, %v2573
    %v2575 = vpop.f32.mrf.mxu0
    %v2576 = vadd.f32 %v2423, %v2575
    %2577 = vmatprep.mubr.bf16.mxu0 %v2050
    %2578 = vmatmul.mubr.bf16.gmra.mxu0 %v2049
    %v2579 = vpop.f32.mrf.mxu0
    %v2580 = vadd.f32 %v2427, %v2579
    %v2581 = vpop.f32.mrf.mxu0
    %v2582 = vadd.f32 %v2429, %v2581
    %v2583 = vpop.f32.mrf.mxu0
    %v2584 = vadd.f32 %v2431, %v2583
    %v2585 = vpop.f32.mrf.mxu0
    %v2586 = vadd.f32 %v2433, %v2585
    %2587 = vmatprep.mubr.bf16.mxu0 %v2065
    %2588 = vmatmul.mubr.bf16.gmra.mxu0 %v2064
    %v2589 = vpop.f32.mrf.mxu0
    %v2590 = vadd.f32 %v2437, %v2589
    %v2591 = vpop.f32.mrf.mxu0
    %v2592 = vadd.f32 %v2439, %v2591
    %v2593 = vpop.f32.mrf.mxu0
    %v2594 = vadd.f32 %v2441, %v2593
    %v2595 = vpop.f32.mrf.mxu0
    %v2596 = vadd.f32 %v2443, %v2595
    %2597 = vmatprep.mubr.bf16.mxu0 %v2080
    %2598 = vmatmul.mubr.bf16.gmra.mxu0 %v2079
    %v2599 = vpop.f32.mrf.mxu0
    %v2600 = vadd.f32 %v2447, %v2599
    %v2601 = vpop.f32.mrf.mxu0
    %v2602 = vadd.f32 %v2449, %v2601
    %v2603 = vpop.f32.mrf.mxu0
    %v2604 = vadd.f32 %v2451, %v2603
    %v2605 = vpop.f32.mrf.mxu0
    %v2606 = vadd.f32 %v2453, %v2605
    %2607 = vmatprep.mubr.bf16.mxu0 %v2095
    %2608 = vmatmul.mubr.bf16.gmra.mxu0 %v2094
    %v2609 = vpop.f32.mrf.mxu0
    %v2610 = vadd.f32 %v2457, %v2609
    %v2611 = vpop.f32.mrf.mxu0
    %v2612 = vadd.f32 %v2459, %v2611
    %v2613 = vpop.f32.mrf.mxu0
    %v2614 = vadd.f32 %v2461, %v2613
    %v2615 = vpop.f32.mrf.mxu0
    %v2616 = vadd.f32 %v2463, %v2615
    %2617 = vdwg.mxu0
    %2618 = vmatprep.subr.bf16.mxu0 %v1028
    %2619 = vmatpush1.bf16.msra.mxu0 %v1027
    %2620 = vmatprep.subr.bf16.mxu0 %v1026
    %2621 = vmatpush1.bf16.msra.mxu0 %v1025
    %2622 = vmatprep.subr.bf16.mxu0 %v1024
    %2623 = vmatpush1.bf16.msra.mxu0 %v1023
    %2624 = vmatprep.subr.bf16.mxu0 %v1022
    %2625 = vmatpush1.bf16.msra.mxu0 %v1021
    %2626 = vmatprep.subr.bf16.mxu0 %v1020
    %2627 = vmatpush1.bf16.msra.mxu0 %v1019
    %2628 = vmatprep.subr.bf16.mxu0 %v1018
    %2629 = vmatpush1.bf16.msra.mxu0 %v1017
    %2630 = vmatprep.subr.bf16.mxu0 %v1016
    %2631 = vmatpush1.bf16.msra.mxu0 %v1015
    %2632 = vmatprep.subr.bf16.mxu0 %v1014
    %2633 = vmatpush1.bf16.msra.mxu0 %v1013
    %2634 = vmatprep.subr.bf16.mxu0 %v1044
    %2635 = vmatpush2.bf16.msra.mxu0 %v1043
    %2636 = vmatprep.subr.bf16.mxu0 %v1042
    %2637 = vmatpush2.bf16.msra.mxu0 %v1041
    %2638 = vmatprep.subr.bf16.mxu0 %v1040
    %2639 = vmatpush2.bf16.msra.mxu0 %v1039
    %2640 = vmatprep.subr.bf16.mxu0 %v1038
    %2641 = vmatpush2.bf16.msra.mxu0 %v1037
    %2642 = vmatprep.subr.bf16.mxu0 %v1036
    %2643 = vmatpush2.bf16.msra.mxu0 %v1035
    %2644 = vmatprep.subr.bf16.mxu0 %v1034
    %2645 = vmatpush2.bf16.msra.mxu0 %v1033
    %2646 = vmatprep.subr.bf16.mxu0 %v1032
    %2647 = vmatpush2.bf16.msra.mxu0 %v1031
    %2648 = vmatprep.subr.bf16.mxu0 %v1030
    %2649 = vmatpush2.bf16.msra.mxu0 %v1029
    %2650 = vmatprep.mubr.bf16.mxu0 %v1932
    %2651 = vmatmul.mubr.bf16.gmra.mxu0 %v1931
    %v2652 = vpop.f32.mrf.mxu0
    %v2653 = vadd.f32 %v2500, %v2652
    %v2654 = vpop.f32.mrf.mxu0
    %v2655 = vadd.f32 %v2502, %v2654
    %v2656 = vpop.f32.mrf.mxu0
    %v2657 = vadd.f32 %v2504, %v2656
    %v2658 = vpop.f32.mrf.mxu0
    %v2659 = vadd.f32 %v2506, %v2658
    %2660 = vmatprep.mubr.bf16.mxu0 %v1947
    %2661 = vmatmul.mubr.bf16.gmra.mxu0 %v1946
    %v2662 = vpop.f32.mrf.mxu0
    %v2663 = vadd.f32 %v2510, %v2662
    %v2664 = vpop.f32.mrf.mxu0
    %v2665 = vadd.f32 %v2512, %v2664
    %v2666 = vpop.f32.mrf.mxu0
    %v2667 = vadd.f32 %v2514, %v2666
    %v2668 = vpop.f32.mrf.mxu0
    %v2669 = vadd.f32 %v2516, %v2668
    %2670 = vmatprep.mubr.bf16.mxu0 %v1962
    %2671 = vmatmul.mubr.bf16.gmra.mxu0 %v1961
    %v2672 = vpop.f32.mrf.mxu0
    %v2673 = vadd.f32 %v2520, %v2672
    %v2674 = vpop.f32.mrf.mxu0
    %v2675 = vadd.f32 %v2522, %v2674
    %v2676 = vpop.f32.mrf.mxu0
    %v2677 = vadd.f32 %v2524, %v2676
    %v2678 = vpop.f32.mrf.mxu0
    %v2679 = vadd.f32 %v2526, %v2678
    %2680 = vmatprep.mubr.bf16.mxu0 %v1977
    %2681 = vmatmul.mubr.bf16.gmra.mxu0 %v1976
    %v2682 = vpop.f32.mrf.mxu0
    %v2683 = vadd.f32 %v2530, %v2682
    %v2684 = vpop.f32.mrf.mxu0
    %v2685 = vadd.f32 %v2532, %v2684
    %v2686 = vpop.f32.mrf.mxu0
    %v2687 = vadd.f32 %v2534, %v2686
    %v2688 = vpop.f32.mrf.mxu0
    %v2689 = vadd.f32 %v2536, %v2688
    %2690 = vmatprep.mubr.bf16.mxu0 %v1992
    %2691 = vmatmul.mubr.bf16.gmra.mxu0 %v1991
    %v2692 = vpop.f32.mrf.mxu0
    %v2693 = vadd.f32 %v2540, %v2692
    %v2694 = vpop.f32.mrf.mxu0
    %v2695 = vadd.f32 %v2542, %v2694
    %v2696 = vpop.f32.mrf.mxu0
    %v2697 = vadd.f32 %v2544, %v2696
    %v2698 = vpop.f32.mrf.mxu0
    %v2699 = vadd.f32 %v2546, %v2698
    %2700 = vmatprep.mubr.bf16.mxu0 %v2007
    %2701 = vmatmul.mubr.bf16.gmra.mxu0 %v2006
    %v2702 = vpop.f32.mrf.mxu0
    %v2703 = vadd.f32 %v2550, %v2702
    %v2704 = vpop.f32.mrf.mxu0
    %v2705 = vadd.f32 %v2552, %v2704
    %v2706 = vpop.f32.mrf.mxu0
    %v2707 = vadd.f32 %v2554, %v2706
    %v2708 = vpop.f32.mrf.mxu0
    %v2709 = vadd.f32 %v2556, %v2708
    %2710 = vmatprep.mubr.bf16.mxu0 %v2022
    %2711 = vmatmul.mubr.bf16.gmra.mxu0 %v2021
    %v2712 = vpop.f32.mrf.mxu0
    %v2713 = vadd.f32 %v2560, %v2712
    %v2714 = vpop.f32.mrf.mxu0
    %v2715 = vadd.f32 %v2562, %v2714
    %v2716 = vpop.f32.mrf.mxu0
    %v2717 = vadd.f32 %v2564, %v2716
    %v2718 = vpop.f32.mrf.mxu0
    %v2719 = vadd.f32 %v2566, %v2718
    %2720 = vmatprep.mubr.bf16.mxu0 %v2037
    %2721 = vmatmul.mubr.bf16.gmra.mxu0 %v2036
    %v2722 = vpop.f32.mrf.mxu0
    %v2723 = vadd.f32 %v2570, %v2722
    %v2724 = vpop.f32.mrf.mxu0
    %v2725 = vadd.f32 %v2572, %v2724
    %v2726 = vpop.f32.mrf.mxu0
    %v2727 = vadd.f32 %v2574, %v2726
    %v2728 = vpop.f32.mrf.mxu0
    %v2729 = vadd.f32 %v2576, %v2728
    %2730 = vmatprep.mubr.bf16.mxu0 %v2052
    %2731 = vmatmul.mubr.bf16.gmra.mxu0 %v2051
    %v2732 = vpop.f32.mrf.mxu0
    %v2733 = vadd.f32 %v2580, %v2732
    %v2734 = vpop.f32.mrf.mxu0
    %v2735 = vadd.f32 %v2582, %v2734
    %v2736 = vpop.f32.mrf.mxu0
    %v2737 = vadd.f32 %v2584, %v2736
    %v2738 = vpop.f32.mrf.mxu0
    %v2739 = vadd.f32 %v2586, %v2738
    %2740 = vmatprep.mubr.bf16.mxu0 %v2067
    %2741 = vmatmul.mubr.bf16.gmra.mxu0 %v2066
    %v2742 = vpop.f32.mrf.mxu0
    %v2743 = vadd.f32 %v2590, %v2742
    %v2744 = vpop.f32.mrf.mxu0
    %v2745 = vadd.f32 %v2592, %v2744
    %v2746 = vpop.f32.mrf.mxu0
    %v2747 = vadd.f32 %v2594, %v2746
    %v2748 = vpop.f32.mrf.mxu0
    %v2749 = vadd.f32 %v2596, %v2748
    %2750 = vmatprep.mubr.bf16.mxu0 %v2082
    %2751 = vmatmul.mubr.bf16.gmra.mxu0 %v2081
    %v2752 = vpop.f32.mrf.mxu0
    %v2753 = vadd.f32 %v2600, %v2752
    %v2754 = vpop.f32.mrf.mxu0
    %v2755 = vadd.f32 %v2602, %v2754
    %v2756 = vpop.f32.mrf.mxu0
    %v2757 = vadd.f32 %v2604, %v2756
    %v2758 = vpop.f32.mrf.mxu0
    %v2759 = vadd.f32 %v2606, %v2758
    %2760 = vmatprep.mubr.bf16.mxu0 %v2097
    %2761 = vmatmul.mubr.bf16.gmra.mxu0 %v2096
    %v2762 = vpop.f32.mrf.mxu0
    %v2763 = vadd.f32 %v2610, %v2762
    %v2764 = vpop.f32.mrf.mxu0
    %v2765 = vadd.f32 %v2612, %v2764
    %v2766 = vpop.f32.mrf.mxu0
    %v2767 = vadd.f32 %v2614, %v2766
    %v2768 = vpop.f32.mrf.mxu0
    %v2769 = vadd.f32 %v2616, %v2768
    %2770 = vdwg.mxu0
    %2771 = vmatprep.subr.bf16.mxu0 %v1060
    %2772 = vmatpush1.bf16.msra.mxu0 %v1059
    %2773 = vmatprep.subr.bf16.mxu0 %v1058
    %2774 = vmatpush1.bf16.msra.mxu0 %v1057
    %2775 = vmatprep.subr.bf16.mxu0 %v1056
    %2776 = vmatpush1.bf16.msra.mxu0 %v1055
    %2777 = vmatprep.subr.bf16.mxu0 %v1054
    %2778 = vmatpush1.bf16.msra.mxu0 %v1053
    %2779 = vmatprep.subr.bf16.mxu0 %v1052
    %2780 = vmatpush1.bf16.msra.mxu0 %v1051
    %2781 = vmatprep.subr.bf16.mxu0 %v1050
    %2782 = vmatpush1.bf16.msra.mxu0 %v1049
    %2783 = vmatprep.subr.bf16.mxu0 %v1048
    %2784 = vmatpush1.bf16.msra.mxu0 %v1047
    %2785 = vmatprep.subr.bf16.mxu0 %v1046
    %2786 = vmatpush1.bf16.msra.mxu0 %v1045
    %2787 = vmatprep.subr.bf16.mxu0 %v1076
    %2788 = vmatpush2.bf16.msra.mxu0 %v1075
    %2789 = vmatprep.subr.bf16.mxu0 %v1074
    %2790 = vmatpush2.bf16.msra.mxu0 %v1073
    %2791 = vmatprep.subr.bf16.mxu0 %v1072
    %2792 = vmatpush2.bf16.msra.mxu0 %v1071
    %2793 = vmatprep.subr.bf16.mxu0 %v1070
    %2794 = vmatpush2.bf16.msra.mxu0 %v1069
    %2795 = vmatprep.subr.bf16.mxu0 %v1068
    %2796 = vmatpush2.bf16.msra.mxu0 %v1067
    %2797 = vmatprep.subr.bf16.mxu0 %v1066
    %2798 = vmatpush2.bf16.msra.mxu0 %v1065
    %2799 = vmatprep.subr.bf16.mxu0 %v1064
    %2800 = vmatpush2.bf16.msra.mxu0 %v1063
    %2801 = vmatprep.subr.bf16.mxu0 %v1062
    %2802 = vmatpush2.bf16.msra.mxu0 %v1061
    %2803 = vmatprep.mubr.bf16.mxu0 %v1934
    %2804 = vmatmul.mubr.bf16.gmra.mxu0 %v1933
    %v2805 = vpop.f32.mrf.mxu0
    %v2806 = vadd.f32 %v2653, %v2805
    %v2807 = vpop.f32.mrf.mxu0
    %v2808 = vadd.f32 %v2655, %v2807
    %v2809 = vpop.f32.mrf.mxu0
    %v2810 = vadd.f32 %v2657, %v2809
    %v2811 = vpop.f32.mrf.mxu0
    %v2812 = vadd.f32 %v2659, %v2811
    %2813 = vmatprep.mubr.bf16.mxu0 %v1949
    %2814 = vmatmul.mubr.bf16.gmra.mxu0 %v1948
    %v2815 = vpop.f32.mrf.mxu0
    %v2816 = vadd.f32 %v2663, %v2815
    %v2817 = vpop.f32.mrf.mxu0
    %v2818 = vadd.f32 %v2665, %v2817
    %v2819 = vpop.f32.mrf.mxu0
    %v2820 = vadd.f32 %v2667, %v2819
    %v2821 = vpop.f32.mrf.mxu0
    %v2822 = vadd.f32 %v2669, %v2821
    %2823 = vmatprep.mubr.bf16.mxu0 %v1964
    %2824 = vmatmul.mubr.bf16.gmra.mxu0 %v1963
    %v2825 = vpop.f32.mrf.mxu0
    %v2826 = vadd.f32 %v2673, %v2825
    %v2827 = vpop.f32.mrf.mxu0
    %v2828 = vadd.f32 %v2675, %v2827
    %v2829 = vpop.f32.mrf.mxu0
    %v2830 = vadd.f32 %v2677, %v2829
    %v2831 = vpop.f32.mrf.mxu0
    %v2832 = vadd.f32 %v2679, %v2831
    %2833 = vmatprep.mubr.bf16.mxu0 %v1979
    %2834 = vmatmul.mubr.bf16.gmra.mxu0 %v1978
    %v2835 = vpop.f32.mrf.mxu0
    %v2836 = vadd.f32 %v2683, %v2835
    %v2837 = vpop.f32.mrf.mxu0
    %v2838 = vadd.f32 %v2685, %v2837
    %v2839 = vpop.f32.mrf.mxu0
    %v2840 = vadd.f32 %v2687, %v2839
    %v2841 = vpop.f32.mrf.mxu0
    %v2842 = vadd.f32 %v2689, %v2841
    %2843 = vmatprep.mubr.bf16.mxu0 %v1994
    %2844 = vmatmul.mubr.bf16.gmra.mxu0 %v1993
    %v2845 = vpop.f32.mrf.mxu0
    %v2846 = vadd.f32 %v2693, %v2845
    %v2847 = vpop.f32.mrf.mxu0
    %v2848 = vadd.f32 %v2695, %v2847
    %v2849 = vpop.f32.mrf.mxu0
    %v2850 = vadd.f32 %v2697, %v2849
    %v2851 = vpop.f32.mrf.mxu0
    %v2852 = vadd.f32 %v2699, %v2851
    %2853 = vmatprep.mubr.bf16.mxu0 %v2009
    %2854 = vmatmul.mubr.bf16.gmra.mxu0 %v2008
    %v2855 = vpop.f32.mrf.mxu0
    %v2856 = vadd.f32 %v2703, %v2855
    %v2857 = vpop.f32.mrf.mxu0
    %v2858 = vadd.f32 %v2705, %v2857
    %v2859 = vpop.f32.mrf.mxu0
    %v2860 = vadd.f32 %v2707, %v2859
    %v2861 = vpop.f32.mrf.mxu0
    %v2862 = vadd.f32 %v2709, %v2861
    %2863 = vmatprep.mubr.bf16.mxu0 %v2024
    %2864 = vmatmul.mubr.bf16.gmra.mxu0 %v2023
    %v2865 = vpop.f32.mrf.mxu0
    %v2866 = vadd.f32 %v2713, %v2865
    %v2867 = vpop.f32.mrf.mxu0
    %v2868 = vadd.f32 %v2715, %v2867
    %v2869 = vpop.f32.mrf.mxu0
    %v2870 = vadd.f32 %v2717, %v2869
    %v2871 = vpop.f32.mrf.mxu0
    %v2872 = vadd.f32 %v2719, %v2871
    %2873 = vmatprep.mubr.bf16.mxu0 %v2039
    %2874 = vmatmul.mubr.bf16.gmra.mxu0 %v2038
    %v2875 = vpop.f32.mrf.mxu0
    %v2876 = vadd.f32 %v2723, %v2875
    %v2877 = vpop.f32.mrf.mxu0
    %v2878 = vadd.f32 %v2725, %v2877
    %v2879 = vpop.f32.mrf.mxu0
    %v2880 = vadd.f32 %v2727, %v2879
    %v2881 = vpop.f32.mrf.mxu0
    %v2882 = vadd.f32 %v2729, %v2881
    %2883 = vmatprep.mubr.bf16.mxu0 %v2054
    %2884 = vmatmul.mubr.bf16.gmra.mxu0 %v2053
    %v2885 = vpop.f32.mrf.mxu0
    %v2886 = vadd.f32 %v2733, %v2885
    %v2887 = vpop.f32.mrf.mxu0
    %v2888 = vadd.f32 %v2735, %v2887
    %v2889 = vpop.f32.mrf.mxu0
    %v2890 = vadd.f32 %v2737, %v2889
    %v2891 = vpop.f32.mrf.mxu0
    %v2892 = vadd.f32 %v2739, %v2891
    %2893 = vmatprep.mubr.bf16.mxu0 %v2069
    %2894 = vmatmul.mubr.bf16.gmra.mxu0 %v2068
    %v2895 = vpop.f32.mrf.mxu0
    %v2896 = vadd.f32 %v2743, %v2895
    %v2897 = vpop.f32.mrf.mxu0
    %v2898 = vadd.f32 %v2745, %v2897
    %v2899 = vpop.f32.mrf.mxu0
    %v2900 = vadd.f32 %v2747, %v2899
    %v2901 = vpop.f32.mrf.mxu0
    %v2902 = vadd.f32 %v2749, %v2901
    %2903 = vmatprep.mubr.bf16.mxu0 %v2084
    %2904 = vmatmul.mubr.bf16.gmra.mxu0 %v2083
    %v2905 = vpop.f32.mrf.mxu0
    %v2906 = vadd.f32 %v2753, %v2905
    %v2907 = vpop.f32.mrf.mxu0
    %v2908 = vadd.f32 %v2755, %v2907
    %v2909 = vpop.f32.mrf.mxu0
    %v2910 = vadd.f32 %v2757, %v2909
    %v2911 = vpop.f32.mrf.mxu0
    %v2912 = vadd.f32 %v2759, %v2911
    %2913 = vmatprep.mubr.bf16.mxu0 %v2099
    %2914 = vmatmul.mubr.bf16.gmra.mxu0 %v2098
    %v2915 = vpop.f32.mrf.mxu0
    %v2916 = vadd.f32 %v2763, %v2915
    %v2917 = vpop.f32.mrf.mxu0
    %v2918 = vadd.f32 %v2765, %v2917
    %v2919 = vpop.f32.mrf.mxu0
    %v2920 = vadd.f32 %v2767, %v2919
    %v2921 = vpop.f32.mrf.mxu0
    %v2922 = vadd.f32 %v2769, %v2921
    %2923 = vdwg.mxu0
    %2924 = vmatprep.subr.bf16.mxu0 %v1092
    %2925 = vmatpush1.bf16.msra.mxu0 %v1091
    %2926 = vmatprep.subr.bf16.mxu0 %v1090
    %2927 = vmatpush1.bf16.msra.mxu0 %v1089
    %2928 = vmatprep.subr.bf16.mxu0 %v1088
    %2929 = vmatpush1.bf16.msra.mxu0 %v1087
    %2930 = vmatprep.subr.bf16.mxu0 %v1086
    %2931 = vmatpush1.bf16.msra.mxu0 %v1085
    %2932 = vmatprep.subr.bf16.mxu0 %v1084
    %2933 = vmatpush1.bf16.msra.mxu0 %v1083
    %2934 = vmatprep.subr.bf16.mxu0 %v1082
    %2935 = vmatpush1.bf16.msra.mxu0 %v1081
    %2936 = vmatprep.subr.bf16.mxu0 %v1080
    %2937 = vmatpush1.bf16.msra.mxu0 %v1079
    %2938 = vmatprep.subr.bf16.mxu0 %v1078
    %2939 = vmatpush1.bf16.msra.mxu0 %v1077
    %2940 = vmatprep.subr.bf16.mxu0 %v1108
    %2941 = vmatpush2.bf16.msra.mxu0 %v1107
    %2942 = vmatprep.subr.bf16.mxu0 %v1106
    %2943 = vmatpush2.bf16.msra.mxu0 %v1105
    %2944 = vmatprep.subr.bf16.mxu0 %v1104
    %2945 = vmatpush2.bf16.msra.mxu0 %v1103
    %2946 = vmatprep.subr.bf16.mxu0 %v1102
    %2947 = vmatpush2.bf16.msra.mxu0 %v1101
    %2948 = vmatprep.subr.bf16.mxu0 %v1100
    %2949 = vmatpush2.bf16.msra.mxu0 %v1099
    %2950 = vmatprep.subr.bf16.mxu0 %v1098
    %2951 = vmatpush2.bf16.msra.mxu0 %v1097
    %2952 = vmatprep.subr.bf16.mxu0 %v1096
    %2953 = vmatpush2.bf16.msra.mxu0 %v1095
    %2954 = vmatprep.subr.bf16.mxu0 %v1094
    %2955 = vmatpush2.bf16.msra.mxu0 %v1093
    %2956 = vmatprep.mubr.bf16.mxu0 %v1936
    %2957 = vmatmul.mubr.bf16.gmra.mxu0 %v1935
    %v2958 = vpop.f32.mrf.mxu0
    %v2959 = vadd.f32 %v2806, %v2958
    %v2960 = vpop.f32.mrf.mxu0
    %v2961 = vadd.f32 %v2808, %v2960
    %v2962 = vpop.f32.mrf.mxu0
    %v2963 = vadd.f32 %v2810, %v2962
    %v2964 = vpop.f32.mrf.mxu0
    %v2965 = vadd.f32 %v2812, %v2964
    %2966 = vmatprep.mubr.bf16.mxu0 %v1951
    %2967 = vmatmul.mubr.bf16.gmra.mxu0 %v1950
    %v2968 = vpop.f32.mrf.mxu0
    %v2969 = vadd.f32 %v2816, %v2968
    %v2970 = vpop.f32.mrf.mxu0
    %v2971 = vadd.f32 %v2818, %v2970
    %v2972 = vpop.f32.mrf.mxu0
    %v2973 = vadd.f32 %v2820, %v2972
    %v2974 = vpop.f32.mrf.mxu0
    %v2975 = vadd.f32 %v2822, %v2974
    %2976 = vmatprep.mubr.bf16.mxu0 %v1966
    %2977 = vmatmul.mubr.bf16.gmra.mxu0 %v1965
    %v2978 = vpop.f32.mrf.mxu0
    %v2979 = vadd.f32 %v2826, %v2978
    %v2980 = vpop.f32.mrf.mxu0
    %v2981 = vadd.f32 %v2828, %v2980
    %v2982 = vpop.f32.mrf.mxu0
    %v2983 = vadd.f32 %v2830, %v2982
    %v2984 = vpop.f32.mrf.mxu0
    %v2985 = vadd.f32 %v2832, %v2984
    %2986 = vmatprep.mubr.bf16.mxu0 %v1981
    %2987 = vmatmul.mubr.bf16.gmra.mxu0 %v1980
    %v2988 = vpop.f32.mrf.mxu0
    %v2989 = vadd.f32 %v2836, %v2988
    %v2990 = vpop.f32.mrf.mxu0
    %v2991 = vadd.f32 %v2838, %v2990
    %v2992 = vpop.f32.mrf.mxu0
    %v2993 = vadd.f32 %v2840, %v2992
    %v2994 = vpop.f32.mrf.mxu0
    %v2995 = vadd.f32 %v2842, %v2994
    %2996 = vmatprep.mubr.bf16.mxu0 %v1996
    %2997 = vmatmul.mubr.bf16.gmra.mxu0 %v1995
    %v2998 = vpop.f32.mrf.mxu0
    %v2999 = vadd.f32 %v2846, %v2998
    %v3000 = vpop.f32.mrf.mxu0
    %v3001 = vadd.f32 %v2848, %v3000
    %v3002 = vpop.f32.mrf.mxu0
    %v3003 = vadd.f32 %v2850, %v3002
    %v3004 = vpop.f32.mrf.mxu0
    %v3005 = vadd.f32 %v2852, %v3004
    %3006 = vmatprep.mubr.bf16.mxu0 %v2011
    %3007 = vmatmul.mubr.bf16.gmra.mxu0 %v2010
    %v3008 = vpop.f32.mrf.mxu0
    %v3009 = vadd.f32 %v2856, %v3008
    %v3010 = vpop.f32.mrf.mxu0
    %v3011 = vadd.f32 %v2858, %v3010
    %v3012 = vpop.f32.mrf.mxu0
    %v3013 = vadd.f32 %v2860, %v3012
    %v3014 = vpop.f32.mrf.mxu0
    %v3015 = vadd.f32 %v2862, %v3014
    %3016 = vmatprep.mubr.bf16.mxu0 %v2026
    %3017 = vmatmul.mubr.bf16.gmra.mxu0 %v2025
    %v3018 = vpop.f32.mrf.mxu0
    %v3019 = vadd.f32 %v2866, %v3018
    %v3020 = vpop.f32.mrf.mxu0
    %v3021 = vadd.f32 %v2868, %v3020
    %v3022 = vpop.f32.mrf.mxu0
    %v3023 = vadd.f32 %v2870, %v3022
    %v3024 = vpop.f32.mrf.mxu0
    %v3025 = vadd.f32 %v2872, %v3024
    %3026 = vmatprep.mubr.bf16.mxu0 %v2041
    %3027 = vmatmul.mubr.bf16.gmra.mxu0 %v2040
    %v3028 = vpop.f32.mrf.mxu0
    %v3029 = vadd.f32 %v2876, %v3028
    %v3030 = vpop.f32.mrf.mxu0
    %v3031 = vadd.f32 %v2878, %v3030
    %v3032 = vpop.f32.mrf.mxu0
    %v3033 = vadd.f32 %v2880, %v3032
    %v3034 = vpop.f32.mrf.mxu0
    %v3035 = vadd.f32 %v2882, %v3034
    %3036 = vmatprep.mubr.bf16.mxu0 %v2056
    %3037 = vmatmul.mubr.bf16.gmra.mxu0 %v2055
    %v3038 = vpop.f32.mrf.mxu0
    %v3039 = vadd.f32 %v2886, %v3038
    %v3040 = vpop.f32.mrf.mxu0
    %v3041 = vadd.f32 %v2888, %v3040
    %v3042 = vpop.f32.mrf.mxu0
    %v3043 = vadd.f32 %v2890, %v3042
    %v3044 = vpop.f32.mrf.mxu0
    %v3045 = vadd.f32 %v2892, %v3044
    %3046 = vmatprep.mubr.bf16.mxu0 %v2071
    %3047 = vmatmul.mubr.bf16.gmra.mxu0 %v2070
    %v3048 = vpop.f32.mrf.mxu0
    %v3049 = vadd.f32 %v2896, %v3048
    %v3050 = vpop.f32.mrf.mxu0
    %v3051 = vadd.f32 %v2898, %v3050
    %v3052 = vpop.f32.mrf.mxu0
    %v3053 = vadd.f32 %v2900, %v3052
    %v3054 = vpop.f32.mrf.mxu0
    %v3055 = vadd.f32 %v2902, %v3054
    %3056 = vmatprep.mubr.bf16.mxu0 %v2086
    %3057 = vmatmul.mubr.bf16.gmra.mxu0 %v2085
    %v3058 = vpop.f32.mrf.mxu0
    %v3059 = vadd.f32 %v2906, %v3058
    %v3060 = vpop.f32.mrf.mxu0
    %v3061 = vadd.f32 %v2908, %v3060
    %v3062 = vpop.f32.mrf.mxu0
    %v3063 = vadd.f32 %v2910, %v3062
    %v3064 = vpop.f32.mrf.mxu0
    %v3065 = vadd.f32 %v2912, %v3064
    %3066 = vmatprep.mubr.bf16.mxu0 %v2101
    %3067 = vmatmul.mubr.bf16.gmra.mxu0 %v2100
    %v3068 = vpop.f32.mrf.mxu0
    %v3069 = vadd.f32 %v2916, %v3068
    %v3070 = vpop.f32.mrf.mxu0
    %v3071 = vadd.f32 %v2918, %v3070
    %v3072 = vpop.f32.mrf.mxu0
    %v3073 = vadd.f32 %v2920, %v3072
    %v3074 = vpop.f32.mrf.mxu0
    %v3075 = vadd.f32 %v2922, %v3074
    %3076 = vdwg.mxu0
    %3077 = vmatprep.subr.bf16.mxu0 %v1124
    %3078 = vmatpush1.bf16.msra.mxu0 %v1123
    %3079 = vmatprep.subr.bf16.mxu0 %v1122
    %3080 = vmatpush1.bf16.msra.mxu0 %v1121
    %3081 = vmatprep.subr.bf16.mxu0 %v1120
    %3082 = vmatpush1.bf16.msra.mxu0 %v1119
    %3083 = vmatprep.subr.bf16.mxu0 %v1118
    %3084 = vmatpush1.bf16.msra.mxu0 %v1117
    %3085 = vmatprep.subr.bf16.mxu0 %v1116
    %3086 = vmatpush1.bf16.msra.mxu0 %v1115
    %3087 = vmatprep.subr.bf16.mxu0 %v1114
    %3088 = vmatpush1.bf16.msra.mxu0 %v1113
    %3089 = vmatprep.subr.bf16.mxu0 %v1112
    %3090 = vmatpush1.bf16.msra.mxu0 %v1111
    %3091 = vmatprep.subr.bf16.mxu0 %v1110
    %3092 = vmatpush1.bf16.msra.mxu0 %v1109
    %3093 = vmatprep.subr.bf16.mxu0 %v1140
    %3094 = vmatpush2.bf16.msra.mxu0 %v1139
    %3095 = vmatprep.subr.bf16.mxu0 %v1138
    %3096 = vmatpush2.bf16.msra.mxu0 %v1137
    %3097 = vmatprep.subr.bf16.mxu0 %v1136
    %3098 = vmatpush2.bf16.msra.mxu0 %v1135
    %3099 = vmatprep.subr.bf16.mxu0 %v1134
    %3100 = vmatpush2.bf16.msra.mxu0 %v1133
    %3101 = vmatprep.subr.bf16.mxu0 %v1132
    %3102 = vmatpush2.bf16.msra.mxu0 %v1131
    %3103 = vmatprep.subr.bf16.mxu0 %v1130
    %3104 = vmatpush2.bf16.msra.mxu0 %v1129
    %3105 = vmatprep.subr.bf16.mxu0 %v1128
    %3106 = vmatpush2.bf16.msra.mxu0 %v1127
    %3107 = vmatprep.subr.bf16.mxu0 %v1126
    %3108 = vmatpush2.bf16.msra.mxu0 %v1125
    %3109 = vmatprep.mubr.bf16.mxu0 %v1938
    %3110 = vmatmul.mubr.bf16.gmra.mxu0 %v1937
    %v3111 = vpop.f32.mrf.mxu0
    %v3112 = vadd.f32 %v2959, %v3111
    %v3113 = vpop.f32.mrf.mxu0
    %v3114 = vadd.f32 %v2961, %v3113
    %v3115 = vpop.f32.mrf.mxu0
    %v3116 = vadd.f32 %v2963, %v3115
    %v3117 = vpop.f32.mrf.mxu0
    %v3118 = vadd.f32 %v2965, %v3117
    %3119 = vmatprep.mubr.bf16.mxu0 %v1953
    %3120 = vmatmul.mubr.bf16.gmra.mxu0 %v1952
    %v3121 = vpop.f32.mrf.mxu0
    %v3122 = vadd.f32 %v2969, %v3121
    %v3123 = vpop.f32.mrf.mxu0
    %v3124 = vadd.f32 %v2971, %v3123
    %v3125 = vpop.f32.mrf.mxu0
    %v3126 = vadd.f32 %v2973, %v3125
    %v3127 = vpop.f32.mrf.mxu0
    %v3128 = vadd.f32 %v2975, %v3127
    %3129 = vmatprep.mubr.bf16.mxu0 %v1968
    %3130 = vmatmul.mubr.bf16.gmra.mxu0 %v1967
    %v3131 = vpop.f32.mrf.mxu0
    %v3132 = vadd.f32 %v2979, %v3131
    %v3133 = vpop.f32.mrf.mxu0
    %v3134 = vadd.f32 %v2981, %v3133
    %v3135 = vpop.f32.mrf.mxu0
    %v3136 = vadd.f32 %v2983, %v3135
    %v3137 = vpop.f32.mrf.mxu0
    %v3138 = vadd.f32 %v2985, %v3137
    %3139 = vmatprep.mubr.bf16.mxu0 %v1983
    %3140 = vmatmul.mubr.bf16.gmra.mxu0 %v1982
    %v3141 = vpop.f32.mrf.mxu0
    %v3142 = vadd.f32 %v2989, %v3141
    %v3143 = vpop.f32.mrf.mxu0
    %v3144 = vadd.f32 %v2991, %v3143
    %v3145 = vpop.f32.mrf.mxu0
    %v3146 = vadd.f32 %v2993, %v3145
    %v3147 = vpop.f32.mrf.mxu0
    %v3148 = vadd.f32 %v2995, %v3147
    %3149 = vmatprep.mubr.bf16.mxu0 %v1998
    %3150 = vmatmul.mubr.bf16.gmra.mxu0 %v1997
    %v3151 = vpop.f32.mrf.mxu0
    %v3152 = vadd.f32 %v2999, %v3151
    %v3153 = vpop.f32.mrf.mxu0
    %v3154 = vadd.f32 %v3001, %v3153
    %v3155 = vpop.f32.mrf.mxu0
    %v3156 = vadd.f32 %v3003, %v3155
    %v3157 = vpop.f32.mrf.mxu0
    %v3158 = vadd.f32 %v3005, %v3157
    %3159 = vmatprep.mubr.bf16.mxu0 %v2013
    %3160 = vmatmul.mubr.bf16.gmra.mxu0 %v2012
    %v3161 = vpop.f32.mrf.mxu0
    %v3162 = vadd.f32 %v3009, %v3161
    %v3163 = vpop.f32.mrf.mxu0
    %v3164 = vadd.f32 %v3011, %v3163
    %v3165 = vpop.f32.mrf.mxu0
    %v3166 = vadd.f32 %v3013, %v3165
    %v3167 = vpop.f32.mrf.mxu0
    %v3168 = vadd.f32 %v3015, %v3167
    %3169 = vmatprep.mubr.bf16.mxu0 %v2028
    %3170 = vmatmul.mubr.bf16.gmra.mxu0 %v2027
    %v3171 = vpop.f32.mrf.mxu0
    %v3172 = vadd.f32 %v3019, %v3171
    %v3173 = vpop.f32.mrf.mxu0
    %v3174 = vadd.f32 %v3021, %v3173
    %v3175 = vpop.f32.mrf.mxu0
    %v3176 = vadd.f32 %v3023, %v3175
    %v3177 = vpop.f32.mrf.mxu0
    %v3178 = vadd.f32 %v3025, %v3177
    %3179 = vmatprep.mubr.bf16.mxu0 %v2043
    %3180 = vmatmul.mubr.bf16.gmra.mxu0 %v2042
    %v3181 = vpop.f32.mrf.mxu0
    %v3182 = vadd.f32 %v3029, %v3181
    %v3183 = vpop.f32.mrf.mxu0
    %v3184 = vadd.f32 %v3031, %v3183
    %v3185 = vpop.f32.mrf.mxu0
    %v3186 = vadd.f32 %v3033, %v3185
    %v3187 = vpop.f32.mrf.mxu0
    %v3188 = vadd.f32 %v3035, %v3187
    %3189 = vmatprep.mubr.bf16.mxu0 %v2058
    %3190 = vmatmul.mubr.bf16.gmra.mxu0 %v2057
    %v3191 = vpop.f32.mrf.mxu0
    %v3192 = vadd.f32 %v3039, %v3191
    %v3193 = vpop.f32.mrf.mxu0
    %v3194 = vadd.f32 %v3041, %v3193
    %v3195 = vpop.f32.mrf.mxu0
    %v3196 = vadd.f32 %v3043, %v3195
    %v3197 = vpop.f32.mrf.mxu0
    %v3198 = vadd.f32 %v3045, %v3197
    %3199 = vmatprep.mubr.bf16.mxu0 %v2073
    %3200 = vmatmul.mubr.bf16.gmra.mxu0 %v2072
    %v3201 = vpop.f32.mrf.mxu0
    %v3202 = vadd.f32 %v3049, %v3201
    %v3203 = vpop.f32.mrf.mxu0
    %v3204 = vadd.f32 %v3051, %v3203
    %v3205 = vpop.f32.mrf.mxu0
    %v3206 = vadd.f32 %v3053, %v3205
    %v3207 = vpop.f32.mrf.mxu0
    %v3208 = vadd.f32 %v3055, %v3207
    %3209 = vmatprep.mubr.bf16.mxu0 %v2088
    %3210 = vmatmul.mubr.bf16.gmra.mxu0 %v2087
    %v3211 = vpop.f32.mrf.mxu0
    %v3212 = vadd.f32 %v3059, %v3211
    %v3213 = vpop.f32.mrf.mxu0
    %v3214 = vadd.f32 %v3061, %v3213
    %v3215 = vpop.f32.mrf.mxu0
    %v3216 = vadd.f32 %v3063, %v3215
    %v3217 = vpop.f32.mrf.mxu0
    %v3218 = vadd.f32 %v3065, %v3217
    %3219 = vmatprep.mubr.bf16.mxu0 %v2103
    %3220 = vmatmul.mubr.bf16.gmra.mxu0 %v2102
    %v3221 = vpop.f32.mrf.mxu0
    %v3222 = vadd.f32 %v3069, %v3221
    %v3223 = vpop.f32.mrf.mxu0
    %v3224 = vadd.f32 %v3071, %v3223
    %v3225 = vpop.f32.mrf.mxu0
    %v3226 = vadd.f32 %v3073, %v3225
    %v3227 = vpop.f32.mrf.mxu0
    %v3228 = vadd.f32 %v3075, %v3227
    %3229 = vdwg.mxu0
    %3230 = vmatprep.subr.bf16.mxu0 %v1156
    %3231 = vmatpush1.bf16.msra.mxu0 %v1155
    %3232 = vmatprep.subr.bf16.mxu0 %v1154
    %3233 = vmatpush1.bf16.msra.mxu0 %v1153
    %3234 = vmatprep.subr.bf16.mxu0 %v1152
    %3235 = vmatpush1.bf16.msra.mxu0 %v1151
    %3236 = vmatprep.subr.bf16.mxu0 %v1150
    %3237 = vmatpush1.bf16.msra.mxu0 %v1149
    %3238 = vmatprep.subr.bf16.mxu0 %v1148
    %3239 = vmatpush1.bf16.msra.mxu0 %v1147
    %3240 = vmatprep.subr.bf16.mxu0 %v1146
    %3241 = vmatpush1.bf16.msra.mxu0 %v1145
    %3242 = vmatprep.subr.bf16.mxu0 %v1144
    %3243 = vmatpush1.bf16.msra.mxu0 %v1143
    %3244 = vmatprep.subr.bf16.mxu0 %v1142
    %3245 = vmatpush1.bf16.msra.mxu0 %v1141
    %3246 = vmatprep.subr.bf16.mxu0 %v1172
    %3247 = vmatpush2.bf16.msra.mxu0 %v1171
    %3248 = vmatprep.subr.bf16.mxu0 %v1170
    %3249 = vmatpush2.bf16.msra.mxu0 %v1169
    %3250 = vmatprep.subr.bf16.mxu0 %v1168
    %3251 = vmatpush2.bf16.msra.mxu0 %v1167
    %3252 = vmatprep.subr.bf16.mxu0 %v1166
    %3253 = vmatpush2.bf16.msra.mxu0 %v1165
    %3254 = vmatprep.subr.bf16.mxu0 %v1164
    %3255 = vmatpush2.bf16.msra.mxu0 %v1163
    %3256 = vmatprep.subr.bf16.mxu0 %v1162
    %3257 = vmatpush2.bf16.msra.mxu0 %v1161
    %3258 = vmatprep.subr.bf16.mxu0 %v1160
    %3259 = vmatpush2.bf16.msra.mxu0 %v1159
    %3260 = vmatprep.subr.bf16.mxu0 %v1158
    %3261 = vmatpush2.bf16.msra.mxu0 %v1157
    %3262 = vmatprep.mubr.bf16.mxu0 %v1940
    %3263 = vmatmul.mubr.bf16.gmra.mxu0 %v1939
    %v3264 = vpop.f32.mrf.mxu0
    %v3265 = vadd.f32 %v3112, %v3264
    %v3266 = vpop.f32.mrf.mxu0
    %v3267 = vadd.f32 %v3114, %v3266
    %v3268 = vpop.f32.mrf.mxu0
    %v3269 = vadd.f32 %v3116, %v3268
    %v3270 = vpop.f32.mrf.mxu0
    %v3271 = vadd.f32 %v3118, %v3270
    %3272 = vmatprep.mubr.bf16.mxu0 %v1955
    %3273 = vmatmul.mubr.bf16.gmra.mxu0 %v1954
    %v3274 = vpop.f32.mrf.mxu0
    %v3275 = vadd.f32 %v3122, %v3274
    %v3276 = vpop.f32.mrf.mxu0
    %v3277 = vadd.f32 %v3124, %v3276
    %v3278 = vpop.f32.mrf.mxu0
    %v3279 = vadd.f32 %v3126, %v3278
    %v3280 = vpop.f32.mrf.mxu0
    %v3281 = vadd.f32 %v3128, %v3280
    %3282 = vmatprep.mubr.bf16.mxu0 %v1970
    %3283 = vmatmul.mubr.bf16.gmra.mxu0 %v1969
    %v3284 = vpop.f32.mrf.mxu0
    %v3285 = vadd.f32 %v3132, %v3284
    %v3286 = vpop.f32.mrf.mxu0
    %v3287 = vadd.f32 %v3134, %v3286
    %v3288 = vpop.f32.mrf.mxu0
    %v3289 = vadd.f32 %v3136, %v3288
    %v3290 = vpop.f32.mrf.mxu0
    %v3291 = vadd.f32 %v3138, %v3290
    %3292 = vmatprep.mubr.bf16.mxu0 %v1985
    %3293 = vmatmul.mubr.bf16.gmra.mxu0 %v1984
    %v3294 = vpop.f32.mrf.mxu0
    %v3295 = vadd.f32 %v3142, %v3294
    %v3296 = vpop.f32.mrf.mxu0
    %v3297 = vadd.f32 %v3144, %v3296
    %v3298 = vpop.f32.mrf.mxu0
    %v3299 = vadd.f32 %v3146, %v3298
    %v3300 = vpop.f32.mrf.mxu0
    %v3301 = vadd.f32 %v3148, %v3300
    %3302 = vmatprep.mubr.bf16.mxu0 %v2000
    %3303 = vmatmul.mubr.bf16.gmra.mxu0 %v1999
    %v3304 = vpop.f32.mrf.mxu0
    %v3305 = vadd.f32 %v3152, %v3304
    %v3306 = vpop.f32.mrf.mxu0
    %v3307 = vadd.f32 %v3154, %v3306
    %v3308 = vpop.f32.mrf.mxu0
    %v3309 = vadd.f32 %v3156, %v3308
    %v3310 = vpop.f32.mrf.mxu0
    %v3311 = vadd.f32 %v3158, %v3310
    %3312 = vmatprep.mubr.bf16.mxu0 %v2015
    %3313 = vmatmul.mubr.bf16.gmra.mxu0 %v2014
    %v3314 = vpop.f32.mrf.mxu0
    %v3315 = vadd.f32 %v3162, %v3314
    %v3316 = vpop.f32.mrf.mxu0
    %v3317 = vadd.f32 %v3164, %v3316
    %v3318 = vpop.f32.mrf.mxu0
    %v3319 = vadd.f32 %v3166, %v3318
    %v3320 = vpop.f32.mrf.mxu0
    %v3321 = vadd.f32 %v3168, %v3320
    %3322 = vmatprep.mubr.bf16.mxu0 %v2030
    %3323 = vmatmul.mubr.bf16.gmra.mxu0 %v2029
    %v3324 = vpop.f32.mrf.mxu0
    %v3325 = vadd.f32 %v3172, %v3324
    %v3326 = vpop.f32.mrf.mxu0
    %v3327 = vadd.f32 %v3174, %v3326
    %v3328 = vpop.f32.mrf.mxu0
    %v3329 = vadd.f32 %v3176, %v3328
    %v3330 = vpop.f32.mrf.mxu0
    %v3331 = vadd.f32 %v3178, %v3330
    %3332 = vmatprep.mubr.bf16.mxu0 %v2045
    %3333 = vmatmul.mubr.bf16.gmra.mxu0 %v2044
    %v3334 = vpop.f32.mrf.mxu0
    %v3335 = vadd.f32 %v3182, %v3334
    %v3336 = vpop.f32.mrf.mxu0
    %v3337 = vadd.f32 %v3184, %v3336
    %v3338 = vpop.f32.mrf.mxu0
    %v3339 = vadd.f32 %v3186, %v3338
    %v3340 = vpop.f32.mrf.mxu0
    %v3341 = vadd.f32 %v3188, %v3340
    %3342 = vmatprep.mubr.bf16.mxu0 %v2060
    %3343 = vmatmul.mubr.bf16.gmra.mxu0 %v2059
    %v3344 = vpop.f32.mrf.mxu0
    %v3345 = vadd.f32 %v3192, %v3344
    %v3346 = vpop.f32.mrf.mxu0
    %v3347 = vadd.f32 %v3194, %v3346
    %v3348 = vpop.f32.mrf.mxu0
    %v3349 = vadd.f32 %v3196, %v3348
    %v3350 = vpop.f32.mrf.mxu0
    %v3351 = vadd.f32 %v3198, %v3350
    %3352 = vmatprep.mubr.bf16.mxu0 %v2075
    %3353 = vmatmul.mubr.bf16.gmra.mxu0 %v2074
    %v3354 = vpop.f32.mrf.mxu0
    %v3355 = vadd.f32 %v3202, %v3354
    %v3356 = vpop.f32.mrf.mxu0
    %v3357 = vadd.f32 %v3204, %v3356
    %v3358 = vpop.f32.mrf.mxu0
    %v3359 = vadd.f32 %v3206, %v3358
    %v3360 = vpop.f32.mrf.mxu0
    %v3361 = vadd.f32 %v3208, %v3360
    %3362 = vmatprep.mubr.bf16.mxu0 %v2090
    %3363 = vmatmul.mubr.bf16.gmra.mxu0 %v2089
    %v3364 = vpop.f32.mrf.mxu0
    %v3365 = vadd.f32 %v3212, %v3364
    %v3366 = vpop.f32.mrf.mxu0
    %v3367 = vadd.f32 %v3214, %v3366
    %v3368 = vpop.f32.mrf.mxu0
    %v3369 = vadd.f32 %v3216, %v3368
    %v3370 = vpop.f32.mrf.mxu0
    %v3371 = vadd.f32 %v3218, %v3370
    %3372 = vmatprep.mubr.bf16.mxu0 %v2105
    %3373 = vmatmul.mubr.bf16.gmra.mxu0 %v2104
    %v3374 = vpop.f32.mrf.mxu0
    %v3375 = vadd.f32 %v3222, %v3374
    %v3376 = vpop.f32.mrf.mxu0
    %v3377 = vadd.f32 %v3224, %v3376
    %v3378 = vpop.f32.mrf.mxu0
    %v3379 = vadd.f32 %v3226, %v3378
    %v3380 = vpop.f32.mrf.mxu0
    %v3381 = vadd.f32 %v3228, %v3380
    %3382 = vdwg.mxu0
    %3383 = vmatprep.subr.bf16.mxu0 0
    %3384 = vmatpush1.bf16.msra.mxu0 0
    %3385 = vmatprep.subr.bf16.mxu0 0
    %3386 = vmatpush1.bf16.msra.mxu0 0
    %3387 = vmatprep.subr.bf16.mxu0 0
    %3388 = vmatpush1.bf16.msra.mxu0 0
    %3389 = vmatprep.subr.bf16.mxu0 %v1182
    %3390 = vmatpush1.bf16.msra.mxu0 %v1181
    %3391 = vmatprep.subr.bf16.mxu0 %v1180
    %3392 = vmatpush1.bf16.msra.mxu0 %v1179
    %3393 = vmatprep.subr.bf16.mxu0 %v1178
    %3394 = vmatpush1.bf16.msra.mxu0 %v1177
    %3395 = vmatprep.subr.bf16.mxu0 %v1176
    %3396 = vmatpush1.bf16.msra.mxu0 %v1175
    %3397 = vmatprep.subr.bf16.mxu0 %v1174
    %3398 = vmatpush1.bf16.msra.mxu0 %v1173
    %3399 = vmatprep.subr.bf16.mxu0 0
    %3400 = vmatpush2.bf16.msra.mxu0 0
    %3401 = vmatprep.subr.bf16.mxu0 0
    %3402 = vmatpush2.bf16.msra.mxu0 0
    %3403 = vmatprep.subr.bf16.mxu0 0
    %3404 = vmatpush2.bf16.msra.mxu0 0
    %3405 = vmatprep.subr.bf16.mxu0 0
    %3406 = vmatpush2.bf16.msra.mxu0 0
    %3407 = vmatprep.subr.bf16.mxu0 0
    %3408 = vmatpush2.bf16.msra.mxu0 0
    %3409 = vmatprep.subr.bf16.mxu0 0
    %3410 = vmatpush2.bf16.msra.mxu0 0
    %3411 = vmatprep.subr.bf16.mxu0 0
    %3412 = vmatpush2.bf16.msra.mxu0 0
    %3413 = vmatprep.subr.bf16.mxu0 0
    %3414 = vmatpush2.bf16.msra.mxu0 0
    %3415 = vmatprep.mubr.bf16.mxu0 0
    %3416 = vmatmul.mubr.bf16.gmra.mxu0 %v2277
    %v3417 = vpop.f32.mrf.mxu0
    %v3418 = vadd.f32 %v3265, %v3417
    %v3419 = vpop.f32.mrf.mxu0
    %v3420 = vadd.f32 %v3267, %v3419
    %v3421 = vpop.f32.mrf.mxu0
    %v3422 = vadd.f32 %v3269, %v3421
    %v3423 = vpop.f32.mrf.mxu0
    %v3424 = vadd.f32 %v3271, %v3423
    %3425 = vmatprep.mubr.bf16.mxu0 0
    %3426 = vmatmul.mubr.bf16.gmra.mxu0 %v2280
    %v3427 = vpop.f32.mrf.mxu0
    %v3428 = vadd.f32 %v3275, %v3427
    %v3429 = vpop.f32.mrf.mxu0
    %v3430 = vadd.f32 %v3277, %v3429
    %v3431 = vpop.f32.mrf.mxu0
    %v3432 = vadd.f32 %v3279, %v3431
    %v3433 = vpop.f32.mrf.mxu0
    %v3434 = vadd.f32 %v3281, %v3433
    %3435 = vmatprep.mubr.bf16.mxu0 0
    %3436 = vmatmul.mubr.bf16.gmra.mxu0 %v2283
    %v3437 = vpop.f32.mrf.mxu0
    %v3438 = vadd.f32 %v3285, %v3437
    %v3439 = vpop.f32.mrf.mxu0
    %v3440 = vadd.f32 %v3287, %v3439
    %v3441 = vpop.f32.mrf.mxu0
    %v3442 = vadd.f32 %v3289, %v3441
    %v3443 = vpop.f32.mrf.mxu0
    %v3444 = vadd.f32 %v3291, %v3443
    %3445 = vmatprep.mubr.bf16.mxu0 0
    %3446 = vmatmul.mubr.bf16.gmra.mxu0 %v2286
    %v3447 = vpop.f32.mrf.mxu0
    %v3448 = vadd.f32 %v3295, %v3447
    %v3449 = vpop.f32.mrf.mxu0
    %v3450 = vadd.f32 %v3297, %v3449
    %v3451 = vpop.f32.mrf.mxu0
    %v3452 = vadd.f32 %v3299, %v3451
    %v3453 = vpop.f32.mrf.mxu0
    %v3454 = vadd.f32 %v3301, %v3453
    %3455 = vmatprep.mubr.bf16.mxu0 0
    %3456 = vmatmul.mubr.bf16.gmra.mxu0 %v2289
    %v3457 = vpop.f32.mrf.mxu0
    %v3458 = vadd.f32 %v3305, %v3457
    %v3459 = vpop.f32.mrf.mxu0
    %v3460 = vadd.f32 %v3307, %v3459
    %v3461 = vpop.f32.mrf.mxu0
    %v3462 = vadd.f32 %v3309, %v3461
    %v3463 = vpop.f32.mrf.mxu0
    %v3464 = vadd.f32 %v3311, %v3463
    %3465 = vmatprep.mubr.bf16.mxu0 0
    %3466 = vmatmul.mubr.bf16.gmra.mxu0 %v2292
    %v3467 = vpop.f32.mrf.mxu0
    %v3468 = vadd.f32 %v3315, %v3467
    %v3469 = vpop.f32.mrf.mxu0
    %v3470 = vadd.f32 %v3317, %v3469
    %v3471 = vpop.f32.mrf.mxu0
    %v3472 = vadd.f32 %v3319, %v3471
    %v3473 = vpop.f32.mrf.mxu0
    %v3474 = vadd.f32 %v3321, %v3473
    %3475 = vmatprep.mubr.bf16.mxu0 0
    %3476 = vmatmul.mubr.bf16.gmra.mxu0 %v2295
    %v3477 = vpop.f32.mrf.mxu0
    %v3478 = vadd.f32 %v3325, %v3477
    %v3479 = vpop.f32.mrf.mxu0
    %v3480 = vadd.f32 %v3327, %v3479
    %v3481 = vpop.f32.mrf.mxu0
    %v3482 = vadd.f32 %v3329, %v3481
    %v3483 = vpop.f32.mrf.mxu0
    %v3484 = vadd.f32 %v3331, %v3483
    %3485 = vmatprep.mubr.bf16.mxu0 0
    %3486 = vmatmul.mubr.bf16.gmra.mxu0 %v2298
    %v3487 = vpop.f32.mrf.mxu0
    %v3488 = vadd.f32 %v3335, %v3487
    %v3489 = vpop.f32.mrf.mxu0
    %v3490 = vadd.f32 %v3337, %v3489
    %v3491 = vpop.f32.mrf.mxu0
    %v3492 = vadd.f32 %v3339, %v3491
    %v3493 = vpop.f32.mrf.mxu0
    %v3494 = vadd.f32 %v3341, %v3493
    %3495 = vmatprep.mubr.bf16.mxu0 0
    %3496 = vmatmul.mubr.bf16.gmra.mxu0 %v2301
    %v3497 = vpop.f32.mrf.mxu0
    %v3498 = vadd.f32 %v3345, %v3497
    %v3499 = vpop.f32.mrf.mxu0
    %v3500 = vadd.f32 %v3347, %v3499
    %v3501 = vpop.f32.mrf.mxu0
    %v3502 = vadd.f32 %v3349, %v3501
    %v3503 = vpop.f32.mrf.mxu0
    %v3504 = vadd.f32 %v3351, %v3503
    %3505 = vmatprep.mubr.bf16.mxu0 0
    %3506 = vmatmul.mubr.bf16.gmra.mxu0 %v2304
    %v3507 = vpop.f32.mrf.mxu0
    %v3508 = vadd.f32 %v3355, %v3507
    %v3509 = vpop.f32.mrf.mxu0
    %v3510 = vadd.f32 %v3357, %v3509
    %v3511 = vpop.f32.mrf.mxu0
    %v3512 = vadd.f32 %v3359, %v3511
    %v3513 = vpop.f32.mrf.mxu0
    %v3514 = vadd.f32 %v3361, %v3513
    %3515 = vmatprep.mubr.bf16.mxu0 0
    %3516 = vmatmul.mubr.bf16.gmra.mxu0 %v2307
    %v3517 = vpop.f32.mrf.mxu0
    %v3518 = vadd.f32 %v3365, %v3517
    %v3519 = vpop.f32.mrf.mxu0
    %v3520 = vadd.f32 %v3367, %v3519
    %v3521 = vpop.f32.mrf.mxu0
    %v3522 = vadd.f32 %v3369, %v3521
    %v3523 = vpop.f32.mrf.mxu0
    %v3524 = vadd.f32 %v3371, %v3523
    %3525 = vmatprep.mubr.bf16.mxu0 0
    %3526 = vmatmul.mubr.bf16.gmra.mxu0 %v2310
    %v3527 = vpop.f32.mrf.mxu0
    %v3528 = vadd.f32 %v3375, %v3527
    %v3529 = vpop.f32.mrf.mxu0
    %v3530 = vadd.f32 %v3377, %v3529
    %v3531 = vpop.f32.mrf.mxu0
    %v3532 = vadd.f32 %v3379, %v3531
    %v3533 = vpop.f32.mrf.mxu0
    %v3534 = vadd.f32 %v3381, %v3533
    %3535 = vdwg.mxu0
    %3536 = vst [vmem:[#allocation2] sm:$0xff] %v3418
    %vm3537 = vcmask 556032
    %3538 = vst.msk [vmem:[#allocation2 + $0x8] sm:$0xff] %vm3537, %v3420
    %3539 = vst [vmem:[#allocation2 + $0x10] sm:$0xff] %v3422
    %3540 = vst.msk [vmem:[#allocation2 + $0x18] sm:$0xff] %vm3537, %v3424
    %3541 = vst [vmem:[#allocation2 + $0x20] sm:$0xff] %v3428
    %3542 = vst.msk [vmem:[#allocation2 + $0x28] sm:$0xff] %vm3537, %v3430
    %3543 = vst [vmem:[#allocation2 + $0x30] sm:$0xff] %v3432
    %3544 = vst.msk [vmem:[#allocation2 + $0x38] sm:$0xff] %vm3537, %v3434
    %3545 = vst [vmem:[#allocation2 + $0x40] sm:$0xff] %v3438
    %3546 = vst.msk [vmem:[#allocation2 + $0x48] sm:$0xff] %vm3537, %v3440
    %3547 = vst [vmem:[#allocation2 + $0x50] sm:$0xff] %v3442
    %3548 = vst.msk [vmem:[#allocation2 + $0x58] sm:$0xff] %vm3537, %v3444
    %3549 = vst [vmem:[#allocation2 + $0x60] sm:$0xff] %v3448
    %3550 = vst.msk [vmem:[#allocation2 + $0x68] sm:$0xff] %vm3537, %v3450
    %3551 = vst [vmem:[#allocation2 + $0x70] sm:$0xff] %v3452
    %3552 = vst.msk [vmem:[#allocation2 + $0x78] sm:$0xff] %vm3537, %v3454
    %3553 = vst [vmem:[#allocation2 + $0x80] sm:$0xff] %v3458
    %3554 = vst.msk [vmem:[#allocation2 + $0x88] sm:$0xff] %vm3537, %v3460
    %3555 = vst [vmem:[#allocation2 + $0x90] sm:$0xff] %v3462
    %3556 = vst.msk [vmem:[#allocation2 + $0x98] sm:$0xff] %vm3537, %v3464
    %3557 = vst [vmem:[#allocation2 + $0xa0] sm:$0xff] %v3468
    %3558 = vst.msk [vmem:[#allocation2 + $0xa8] sm:$0xff] %vm3537, %v3470
    %3559 = vst [vmem:[#allocation2 + $0xb0] sm:$0xff] %v3472
    %3560 = vst.msk [vmem:[#allocation2 + $0xb8] sm:$0xff] %vm3537, %v3474
    %3561 = vst [vmem:[#allocation2 + $0xc0] sm:$0xff] %v3478
    %3562 = vst.msk [vmem:[#allocation2 + $0xc8] sm:$0xff] %vm3537, %v3480
    %3563 = vst [vmem:[#allocation2 + $0xd0] sm:$0xff] %v3482
    %3564 = vst.msk [vmem:[#allocation2 + $0xd8] sm:$0xff] %vm3537, %v3484
    %3565 = vst [vmem:[#allocation2 + $0xe0] sm:$0xff] %v3488
    %3566 = vst.msk [vmem:[#allocation2 + $0xe8] sm:$0xff] %vm3537, %v3490
    %3567 = vst [vmem:[#allocation2 + $0xf0] sm:$0xff] %v3492
    %3568 = vst.msk [vmem:[#allocation2 + $0xf8] sm:$0xff] %vm3537, %v3494
    %3569 = vst [vmem:[#allocation2 + $0x100] sm:$0xff] %v3498
    %3570 = vst.msk [vmem:[#allocation2 + $0x108] sm:$0xff] %vm3537, %v3500
    %3571 = vst [vmem:[#allocation2 + $0x110] sm:$0xff] %v3502
    %3572 = vst.msk [vmem:[#allocation2 + $0x118] sm:$0xff] %vm3537, %v3504
    %3573 = vst [vmem:[#allocation2 + $0x120] sm:$0xff] %v3508
    %3574 = vst.msk [vmem:[#allocation2 + $0x128] sm:$0xff] %vm3537, %v3510
    %3575 = vst [vmem:[#allocation2 + $0x130] sm:$0xff] %v3512
    %3576 = vst.msk [vmem:[#allocation2 + $0x138] sm:$0xff] %vm3537, %v3514
    %3577 = vst [vmem:[#allocation2 + $0x140] sm:$0xff] %v3518
    %3578 = vst.msk [vmem:[#allocation2 + $0x148] sm:$0xff] %vm3537, %v3520
    %3579 = vst [vmem:[#allocation2 + $0x150] sm:$0xff] %v3522
    %3580 = vst.msk [vmem:[#allocation2 + $0x158] sm:$0xff] %vm3537, %v3524
    %3581 = vst [vmem:[#allocation2 + $0x160] sm:$0xff] %v3528
    %3582 = vst.msk [vmem:[#allocation2 + $0x168] sm:$0xff] %vm3537, %v3530
    %3583 = vst [vmem:[#allocation2 + $0x170] sm:$0xff] %v3532
    %3584 = vst.msk [vmem:[#allocation2 + $0x178] sm:$0xff] %vm3537, %v3534
    // Predicated region
    $region10: #{tpu_custom_call.1} parent=1 // pred_check
      _
    $region11: #{tpu_custom_call.1} parent=1 // pred_check_branch
      %3586 = sbr.rel (0) target = $region13
    $region12: #{tpu_custom_call.1} parent=1 // pred_region
      %s3588 = ssub.s32 6144, 6144
      %3589 = vsyncadd [#allocation3], %s3588
      %s3590 = sshll.u32 [#allocation2], 4
      %s3591 = int_to_ptr.vmem [resolvable:$true] %s3590
      %3596 = dma.vmem_to_hbm [thread:$0]  %s3591, 6144, %s2, [#allocation3], 256, 256, 16
    $region13: #{tpu_custom_call.1} parent=1 // pred_fallthru
      _
    // Predicated region
    $region14: #{tpu_custom_call.1} parent=1 // pred_check
      _
    $region15: #{tpu_custom_call.1} parent=1 // pred_check_branch
      %3598 = sbr.rel (0) target = $region17
    $region16: #{tpu_custom_call.1} parent=1 // pred_region
      %3599 = dma.done [#allocation3], 6144
    $region17: #{tpu_custom_call.1} parent=1 // pred_fallthru
      _
    %3600 = vsyncpa [#allocation3], 1

</llo_original>
